<compile_context>
chip_gen: v6e
topology: v6e:2x2x1
jax: 0.10.0
libtpu: 0.0.40
codegen_flags: <defaults>
</compile_context>

<pallas_src>
import functools

import jax
import jax.numpy as jnp
from jax import lax
from jax.experimental import pallas as pl
from jax.experimental.pallas import tpu as pltpu

EPS = 1e-5
LANE = 128
SUBL = 16                         # bf16 packs 2 rows/sublane -> 16-row quantum
VMEM_LIMIT = 48 * 1024 * 1024     # <= v7x 64 MiB/TC with headroom


# ------------------------------ small helpers ------------------------------ #

def _round_up(x, m):
    return (x + m - 1) // m * m


def _pick_tile(dim, target, quantum):
    """Returns (tile, padded_dim) with padded_dim % tile == 0."""
    if dim <= target:
        t = _round_up(dim, quantum)
        return t, t
    return target, _round_up(dim, target)


def _pad2(a, rows, cols):
    pr, pc = rows - a.shape[0], cols - a.shape[1]
    if pr or pc:
        a = jnp.pad(a, ((0, pr), (0, pc)))
    return a


def _pad1(v, n):
    if v.shape[0] != n:
        v = jnp.pad(v, (0, n - v.shape[0]))
    return v


def fold_bn(gamma, beta, mean, var):
    scale = gamma / jnp.sqrt(var + EPS)
    bias = beta - mean * scale
    return scale.astype(jnp.float32), bias.astype(jnp.float32)


def _params(semantics):
    return pltpu.CompilerParams(dimension_semantics=semantics,
                                vmem_limit_bytes=VMEM_LIMIT)


# ----------------------------- Pallas kernels ------------------------------ #

def _mm_bn_kernel(x_ref, w_ref, s_ref, b_ref, o_ref, *, relu):
    # Single full-K dot (weight resident in VMEM) + BN(+ReLU) epilogue.
    out = jnp.dot(x_ref[...], w_ref[...], preferred_element_type=jnp.float32)
    out = out * s_ref[...] + b_ref[...]
    if relu:
        out = jnp.maximum(out, 0.0)
    o_ref[...] = out.astype(o_ref.dtype)


def _mm_bn_proj_relu_kernel(x_ref, w_ref, s_ref, b_ref,
                            xs_ref, ws_ref, ss_ref, bs_ref, o_ref):
    # conv3 (1x1) + bn3 fused with the projection shortcut (1x1 conv + bn) and
    # the final ReLU.  Both weights are VMEM-resident; both dots run each step.
    main = jnp.dot(x_ref[...], w_ref[...], preferred_element_type=jnp.float32)
    main = main * s_ref[...] + b_ref[...]
    sc = jnp.dot(xs_ref[...], ws_ref[...], preferred_element_type=jnp.float32)
    sc = sc * ss_ref[...] + bs_ref[...]
    o_ref[...] = jnp.maximum(main + sc, 0.0).astype(o_ref.dtype)


def _mm_bn_res_relu_kernel(x_ref, w_ref, s_ref, b_ref, r_ref, o_ref):
    # conv3 (1x1) + bn3 + identity residual (bf16 stream, fp32 add) + ReLU.
    out = jnp.dot(x_ref[...], w_ref[...], preferred_element_type=jnp.float32)
    out = out * s_ref[...] + b_ref[...] + r_ref[...].astype(jnp.float32)
    o_ref[...] = jnp.maximum(out, 0.0).astype(o_ref.dtype)


def _conv3x3_bn_relu_kernel(x_ref, w_ref, s_ref, b_ref, o_ref, acc_ref,
                            *, stride, hph, rows, wo_p):
    # x_ref : (planes_rows * wo_p, C)  pre-shifted polyphase planes of one image
    # w_ref : (9, C, Co)               full 3x3 weight, resident in VMEM
    # o_ref : (rows, Wo, Co)           block of `rows` output rows
    # acc_ref: (rows * wo_p, Co) fp32 accumulator scratch
    s = stride
    ho0 = pl.program_id(1) * rows
    first = True
    for dh in range(3):
        for dw in range(3):
            p = (dh % s) * s + (dw % s)            # polyphase plane index
            r0 = dh // s                           # row offset in the plane
            c0 = dw // s                           # pre-shifted column variant
            base = (c0 * s * s + p) * hph + r0
            start = pl.multiple_of((base + ho0) * wo_p, wo_p)
            lhs = x_ref[pl.ds(start, rows * wo_p), :]          # aligned window
            contrib = jnp.dot(lhs, w_ref[dh * 3 + dw],
                              preferred_element_type=jnp.float32)
            if first:
                acc_ref[...] = contrib
                first = False
            else:
                acc_ref[...] += contrib
    out = jnp.maximum(acc_ref[...] * s_ref[...] + b_ref[...], 0.0)
    wo = o_ref.shape[1]
    co = o_ref.shape[2]
    out = out.reshape(rows, wo_p, co)[:, :wo, :]
    o_ref[...] = out.astype(o_ref.dtype)


# ------------------------------ kernel wrappers ----------------------------- #

def matmul_bn(x, w, scale, bias, *, relu, out_dtype=jnp.bfloat16, tm=512):
    M, K = x.shape
    Nc = w.shape[1]
    Kp = _round_up(K, LANE)
    Np = _round_up(Nc, LANE)
    tm, Mp = _pick_tile(M, tm, SUBL)
    x = _pad2(x, Mp, Kp)
    w = _pad2(w, Kp, Np)
    scale = _pad2(scale.reshape(1, -1), 1, Np)
    bias = _pad2(bias.reshape(1, -1), 1, Np)
    out = pl.pallas_call(
        functools.partial(_mm_bn_kernel, relu=relu),
        out_shape=jax.ShapeDtypeStruct((Mp, Np), out_dtype),
        grid_spec=pltpu.PrefetchScalarGridSpec(
            num_scalar_prefetch=0,
            grid=(Mp // tm,),
            in_specs=[
                pl.BlockSpec((tm, Kp), lambda i: (i, 0)),
                pl.BlockSpec((Kp, Np), lambda i: (0, 0)),   # resident weight
                pl.BlockSpec((1, Np), lambda i: (0, 0)),
                pl.BlockSpec((1, Np), lambda i: (0, 0)),
            ],
            out_specs=pl.BlockSpec((tm, Np), lambda i: (i, 0))),
        compiler_params=_params(("parallel",)),
    )(x, w, scale, bias)
    return out[:M, :Nc]


def matmul_bn_proj_relu(x, w, scale, bias, xs, ws, sscale, sbias,
                        *, out_dtype=jnp.bfloat16, tm=512):
    M, K = x.shape
    Nc = w.shape[1]
    Ks = xs.shape[1]
    Kp = _round_up(K, LANE)
    Np = _round_up(Nc, LANE)
    Ksp = _round_up(Ks, LANE)
    tm, Mp = _pick_tile(M, tm, SUBL)
    x = _pad2(x, Mp, Kp)
    w = _pad2(w, Kp, Np)
    xs = _pad2(xs, Mp, Ksp)
    ws = _pad2(ws, Ksp, Np)
    scale = _pad2(scale.reshape(1, -1), 1, Np)
    bias = _pad2(bias.reshape(1, -1), 1, Np)
    sscale = _pad2(sscale.reshape(1, -1), 1, Np)
    sbias = _pad2(sbias.reshape(1, -1), 1, Np)
    out = pl.pallas_call(
        _mm_bn_proj_relu_kernel,
        out_shape=jax.ShapeDtypeStruct((Mp, Np), out_dtype),
        grid_spec=pltpu.PrefetchScalarGridSpec(
            num_scalar_prefetch=0,
            grid=(Mp // tm,),
            in_specs=[
                pl.BlockSpec((tm, Kp), lambda i: (i, 0)),
                pl.BlockSpec((Kp, Np), lambda i: (0, 0)),    # resident weight
                pl.BlockSpec((1, Np), lambda i: (0, 0)),
                pl.BlockSpec((1, Np), lambda i: (0, 0)),
                pl.BlockSpec((tm, Ksp), lambda i: (i, 0)),
                pl.BlockSpec((Ksp, Np), lambda i: (0, 0)),   # resident shortcut weight
                pl.BlockSpec((1, Np), lambda i: (0, 0)),
                pl.BlockSpec((1, Np), lambda i: (0, 0)),
            ],
            out_specs=pl.BlockSpec((tm, Np), lambda i: (i, 0))),
        compiler_params=_params(("parallel",)),
    )(x, w, scale, bias, xs, ws, sscale, sbias)
    return out[:M, :Nc]


def matmul_bn_res_relu(x, w, scale, bias, res, *, out_dtype=jnp.bfloat16, tm=512):
    M, K = x.shape
    Nc = w.shape[1]
    Kp = _round_up(K, LANE)
    Np = _round_up(Nc, LANE)
    tm, Mp = _pick_tile(M, tm, SUBL)
    x = _pad2(x, Mp, Kp)
    w = _pad2(w, Kp, Np)
    res = _pad2(res, Mp, Np)                      # stays bf16; fp32 add in kernel
    scale = _pad2(scale.reshape(1, -1), 1, Np)
    bias = _pad2(bias.reshape(1, -1), 1, Np)
    out = pl.pallas_call(
        _mm_bn_res_relu_kernel,
        out_shape=jax.ShapeDtypeStruct((Mp, Np), out_dtype),
        grid_spec=pltpu.PrefetchScalarGridSpec(
            num_scalar_prefetch=0,
            grid=(Mp // tm,),
            in_specs=[
                pl.BlockSpec((tm, Kp), lambda i: (i, 0)),
                pl.BlockSpec((Kp, Np), lambda i: (0, 0)),    # resident weight
                pl.BlockSpec((1, Np), lambda i: (0, 0)),
                pl.BlockSpec((1, Np), lambda i: (0, 0)),
                pl.BlockSpec((tm, Np), lambda i: (i, 0)),
            ],
            out_specs=pl.BlockSpec((tm, Np), lambda i: (i, 0))),
        compiler_params=_params(("parallel",)),
    )(x, w, scale, bias, res)
    return out[:M, :Nc]


def conv3x3_bn_relu(x_nhwc, w9, scale, bias, *, stride,
                    out_dtype=jnp.bfloat16, rows_target=8):
    """3x3 conv (pad=1, stride s) + folded BN + ReLU.  No HBM im2col."""
    N, H, W, C = x_nhwc.shape          # C already padded to multiple of 128, bf16
    s = int(stride)
    Co = w9.shape[2]
    Ho = (H - 1) // s + 1
    Wo = (W - 1) // s + 1

    rows = min(rows_target, Ho)        # output rows per grid step
    Ho_p = _round_up(Ho, rows)
    Wo_p = _round_up(Wo, SUBL)         # sublane-aligned LHS row count (bf16)

    r0_max = 2 // s
    c0_max = 2 // s
    n_c0 = c0_max + 1

    # Conv padding (=1) plus whatever the padded output rows / shifted column
    # windows need; all extra pixels are zeros and get sliced away afterwards.
    Hp = max(_round_up(H + 2, s), (Ho_p + r0_max) * s)
    Wp = max(_round_up(W + 2, s), (Wo_p + c0_max) * s)
    xp = jnp.pad(x_nhwc, ((0, 0), (1, Hp - H - 1), (1, Wp - W - 1), (0, 0)))
    Hph, Wph = Hp // s, Wp // s

    # Polyphase split + per-c0 column pre-shift (single XLA pass): every 3x3
    # tap becomes a sublane-aligned unit-stride (rows*Wo_p, C) window.
    planes = xp.reshape(N, Hph, s, Wph, s, C).transpose(0, 2, 4, 1, 3, 5)
    shifted = jnp.stack([planes[:, :, :, :, c0:c0 + Wo_p, :]
                         for c0 in range(n_c0)], axis=1)
    planes_rows = n_c0 * s * s * Hph
    xin = shifted.reshape(N * planes_rows * Wo_p, C)

    nh = Ho_p // rows
    kernel = functools.partial(_conv3x3_bn_relu_kernel, stride=s, hph=Hph,
                               rows=rows, wo_p=Wo_p)
    out = pl.pallas_call(
        kernel,
        out_shape=jax.ShapeDtypeStruct((N * Ho_p, Wo, Co), out_dtype),
        grid_spec=pltpu.PrefetchScalarGridSpec(
            num_scalar_prefetch=0,
            grid=(N, nh),
            in_specs=[
                pl.BlockSpec((planes_rows * Wo_p, C), lambda n, h: (n, 0)),
                pl.BlockSpec((9, C, Co), lambda n, h: (0, 0, 0)),   # resident
                pl.BlockSpec((1, Co), lambda n, h: (0, 0)),
                pl.BlockSpec((1, Co), lambda n, h: (0, 0)),
            ],
            out_specs=pl.BlockSpec((rows, Wo, Co),
                                   lambda n, h: (n * nh + h, 0, 0)),
            scratch_shapes=[pltpu.VMEM((rows * Wo_p, Co), jnp.float32)]),
        # No state carried across grid steps -> fully parallel, so v7x can
        # shard the row-block axis across both TensorCores.
        compiler_params=_params(("parallel", "parallel")),
    )(xin, w9, scale.reshape(1, -1), bias.reshape(1, -1))
    return out.reshape(N, Ho_p, Wo, Co)[:, :Ho]


# ------------------------------ forward pass -------------------------------- #

def bottleneck_forward(x_nchw, params, stride, planes):
    expansion = 4
    # Cast to bf16 BEFORE the NCHW->NHWC transpose (halves its HBM traffic).
    x = jnp.transpose(x_nchw.astype(jnp.bfloat16), (0, 2, 3, 1))   # NHWC bf16
    N, H, W, Cin = x.shape
    Cin_p = _round_up(Cin, LANE)
    Cp = _round_up(planes, LANE)
    Cop = _round_up(expansion * planes, LANE)

    # conv1 (1x1) + bn1 + relu  -> bf16, lane-dense (Cp) output
    x2d = _pad2(x.reshape(-1, Cin), N * H * W, Cin_p)
    w1 = _pad2(params['w1'][:, :, 0, 0].T, Cin_p, Cp).astype(jnp.bfloat16)
    s1, b1 = fold_bn(*params['bn1'])
    out1 = matmul_bn(x2d, w1, _pad1(s1, Cp), _pad1(b1, Cp),
                     relu=True, out_dtype=jnp.bfloat16)
    out1 = out1.reshape(N, H, W, Cp)

    # conv2 (3x3, stride, pad=1) + bn2 + relu  (no materialized im2col)
    w2 = jnp.transpose(params['w2'], (2, 3, 1, 0)).reshape(9, planes, planes)
    w2 = jnp.pad(w2, ((0, 0), (0, Cp - planes), (0, Cp - planes)))
    w2 = w2.astype(jnp.bfloat16)
    s2, b2 = fold_bn(*params['bn2'])
    out2 = conv3x3_bn_relu(out1, w2, _pad1(s2, Cp), _pad1(b2, Cp),
                           stride=stride, out_dtype=jnp.bfloat16)
    _, Ho, Wo, _ = out2.shape
    out2_2d = out2.reshape(-1, Cp)

    # conv3 (1x1) + bn3 + shortcut + relu (shortcut fused into the epilogue)
    w3 = _pad2(params['w3'][:, :, 0, 0].T, Cp, Cop).astype(jnp.bfloat16)
    s3, b3 = fold_bn(*params['bn3'])
    s3, b3 = _pad1(s3, Cop), _pad1(b3, Cop)

    if stride != 1 or Cin != expansion * planes:
        xs = x[:, ::stride, ::stride, :].reshape(-1, Cin)      # bf16 strided slice
        ws = _pad2(params['ws'][:, :, 0, 0].T, Cin_p, Cop).astype(jnp.bfloat16)
        ss, bs = fold_bn(*params['bns'])
        out = matmul_bn_proj_relu(out2_2d, w3, s3, b3,
                                  xs, ws, _pad1(ss, Cop), _pad1(bs, Cop),
                                  out_dtype=jnp.bfloat16)
    else:
        res = x.reshape(-1, Cin)                               # bf16 identity residual
        out = matmul_bn_res_relu(out2_2d, w3, s3, b3, res,
                                 out_dtype=jnp.bfloat16)

    out = out.reshape(N, Ho, Wo, Cop)[:, :, :, :expansion * planes]
    return jnp.transpose(out, (0, 3, 1, 2)).astype(jnp.float32)   # back to NCHW


# -------------------------- pure-JAX reference ------------------------------ #

def _conv_nchw(x, w, stride=1, padding=0):
    return lax.conv_general_dilated(
        x, w, (stride, stride), [(padding, padding), (padding, padding)],
        dimension_numbers=('NCHW', 'OIHW', 'NCHW'))


def _bn_nchw(x, gamma, beta, mean, var):
    r = lambda v: v.reshape(1, -1, 1, 1)
    return (x - r(mean)) / jnp.sqrt(r(var) + EPS) * r(gamma) + r(beta)


def bottleneck_reference(x, params, stride, planes):
    out = jax.nn.relu(_bn_nchw(_conv_nchw(x, params['w1']), *params['bn1']))
    out = jax.nn.relu(_bn_nchw(_conv_nchw(out, params['w2'], stride, 1), *params['bn2']))
    out = _bn_nchw(_conv_nchw(out, params['w3']), *params['bn3'])
    if stride != 1 or x.shape[1] != 4 * planes:
        sc = _bn_nchw(_conv_nchw(x, params['ws'], stride), *params['bns'])
    else:
        sc = x
    return jax.nn.relu(out + sc)


# ------------------------------- params ------------------------------------- #

def init_params(key, in_planes, planes):
    expansion = 4
    ks = jax.random.split(key, 12)

    def bn(k, c):
        k1, k2, k3, k4 = jax.random.split(k, 4)
        gamma = 1.0 + 0.1 * jax.random.normal(k1, (c,), jnp.float32)
        beta = 0.1 * jax.random.normal(k2, (c,), jnp.float32)
        mean = 0.1 * jax.random.normal(k3, (c,), jnp.float32)
        var = 0.5 + 0.5 * jnp.abs(jax.random.normal(k4, (c,), jnp.float32))
        return (gamma, beta, mean, var)

    return {
        'w1': 0.1 * jax.random.normal(ks[0], (planes, in_planes, 1, 1), jnp.float32),
        'bn1': bn(ks[1], planes),
        'w2': 0.1 * jax.random.normal(ks[2], (planes, planes, 3, 3), jnp.float32),
        'bn2': bn(ks[3], planes),
        'w3': 0.1 * jax.random.normal(ks[4], (expansion * planes, planes, 1, 1), jnp.float32),
        'bn3': bn(ks[5], expansion * planes),
        'ws': 0.1 * jax.random.normal(ks[6], (expansion * planes, in_planes, 1, 1), jnp.float32),
        'bns': bn(ks[7], expansion * planes),
    }


# --------------------------------- main -------------------------------------- #

if __name__ == "__main__":
    key = jax.random.PRNGKey(0)
    fwd = jax.jit(bottleneck_forward, static_argnums=(2, 3))

    configs = [
        # (in_planes, planes, stride, batch, H, W)
        (16, 8, 2, 2, 8, 8),     # projection shortcut (stride 2)
        (32, 8, 1, 2, 8, 8),     # identity shortcut
    ]
    for cfg_i, (in_planes, planes, stride, batch, H, W) in enumerate(configs):
        kx, kp, key = jax.random.split(key, 3)
        x = jax.random.normal(kx, (batch, in_planes, H, W), jnp.float32)
        params = init_params(kp, in_planes, planes)

        out = jax.block_until_ready(fwd(x, params, stride, planes))
        ref = jax.block_until_ready(bottleneck_reference(x, params, stride, planes))

        Ho = (H - 1) // stride + 1
        Wo = (W - 1) // stride + 1
        assert out.shape == ref.shape == (batch, 4 * planes, Ho, Wo), (out.shape, ref.shape)
        err = float(jnp.max(jnp.abs(out - ref)))
        # bf16 activations/weights/outputs (fp32 accumulation) vs fp32 reference
        assert err < 5e-2, (cfg_i, err)

    print("KERNEL_OK")
</pallas_src>

<mosaic_0001>
module attributes {stable_mosaic.version = 11 : i64} {
  func.func @_mm_bn_kernel(%arg0: i32, %arg1: memref<128x128xbf16, #tpu.memory_space<vmem>>, %arg2: memref<128x128xbf16, #tpu.memory_space<vmem>>, %arg3: memref<1x128xf32, #tpu.memory_space<vmem>>, %arg4: memref<1x128xf32, #tpu.memory_space<vmem>>, %arg5: memref<128x128xbf16, #tpu.memory_space<vmem>>) attributes {dimension_semantics = [#tpu.dimension_semantics<parallel>], iteration_bounds = array<i64: 1>, scalar_prefetch = 0 : i64, scratch_operands = 0 : i64, tpu.core_type = #tpu.core_type<tc>, window_params = [{transform_indices = @transform_0, window_bounds = array<i64: 128, 128>}, {pipeline_mode = #tpu.pipeline_mode<synchronous>, transform_indices = @transform_1, window_bounds = array<i64: 128, 128>}, {pipeline_mode = #tpu.pipeline_mode<synchronous>, transform_indices = @transform_2, window_bounds = array<i64: 1, 128>}, {pipeline_mode = #tpu.pipeline_mode<synchronous>, transform_indices = @transform_3, window_bounds = array<i64: 1, 128>}, {transform_indices = @transform_4, window_bounds = array<i64: 128, 128>}]} {
    %c0 = arith.constant 0 : index
    %c0_0 = arith.constant 0 : index
    %0 = vector.load %arg1[%c0, %c0_0] : memref<128x128xbf16, #tpu.memory_space<vmem>>, vector<128x128xbf16>
    %c0_1 = arith.constant 0 : index
    %c0_2 = arith.constant 0 : index
    %1 = vector.load %arg2[%c0_1, %c0_2] : memref<128x128xbf16, #tpu.memory_space<vmem>>, vector<128x128xbf16>
    %cst = arith.constant dense<0.000000e+00> : vector<128x128xf32>
    %2 = tpu.matmul %0, %1, %cst {dimension_numbers = #tpu.dot_dimension_numbers<[1], [0], [0], [1], [0, 0, 1, 1], [], []>} : vector<128x128xbf16>, vector<128x128xbf16>, vector<128x128xf32> -> vector<128x128xf32>
    %c0_3 = arith.constant 0 : index
    %c0_4 = arith.constant 0 : index
    %3 = vector.load %arg3[%c0_3, %c0_4] : memref<1x128xf32, #tpu.memory_space<vmem>>, vector<1x128xf32>
    %4 = vector.broadcast %3 : vector<1x128xf32> to vector<128x128xf32>
    %5 = arith.mulf %2, %4 : vector<128x128xf32>
    %c0_5 = arith.constant 0 : index
    %c0_6 = arith.constant 0 : index
    %6 = vector.load %arg4[%c0_5, %c0_6] : memref<1x128xf32, #tpu.memory_space<vmem>>, vector<1x128xf32>
    %7 = vector.broadcast %6 : vector<1x128xf32> to vector<128x128xf32>
    %8 = arith.addf %5, %7 : vector<128x128xf32>
    %cst_7 = arith.constant 0.000000e+00 : f32
    %9 = vector.broadcast %cst_7 : f32 to vector<128x128xf32>
    %10 = arith.maximumf %8, %9 : vector<128x128xf32>
    %11 = arith.truncf %10 : vector<128x128xf32> to vector<128x128xbf16>
    %c0_8 = arith.constant 0 : index
    %c0_9 = arith.constant 0 : index
    %12 = vector.load %arg5[%c0_8, %c0_9] : memref<128x128xbf16, #tpu.memory_space<vmem>>, vector<128x128xbf16>
    tpu.vector_store %arg5[%c0_8, %c0_9], %11 {strides = array<i32>} : memref<128x128xbf16, #tpu.memory_space<vmem>>, vector<128x128xbf16>,
    return
  }
  func.func @transform_0(%arg0: i32) -> (i32, i32) {
    %c0_i32 = arith.constant 0 : i32
    %c0_i32_0 = arith.constant 0 : i32
    return %arg0, %c0_i32 : i32, i32
  }
  func.func @transform_1(%arg0: i32) -> (i32, i32) {
    %c0_i32 = arith.constant 0 : i32
    %c0_i32_0 = arith.constant 0 : i32
    %c0_i32_1 = arith.constant 0 : i32
    return %c0_i32, %c0_i32_0 : i32, i32
  }
  func.func @transform_2(%arg0: i32) -> (i32, i32) {
    %c0_i32 = arith.constant 0 : i32
    %c0_i32_0 = arith.constant 0 : i32
    %c0_i32_1 = arith.constant 0 : i32
    return %c0_i32, %c0_i32_0 : i32, i32
  }
  func.func @transform_3(%arg0: i32) -> (i32, i32) {
    %c0_i32 = arith.constant 0 : i32
    %c0_i32_0 = arith.constant 0 : i32
    %c0_i32_1 = arith.constant 0 : i32
    return %c0_i32, %c0_i32_0 : i32, i32
  }
  func.func @transform_4(%arg0: i32) -> (i32, i32) {
    %c0_i32 = arith.constant 0 : i32
    %c0_i32_0 = arith.constant 0 : i32
    return %arg0, %c0_i32 : i32, i32
  }
}

module attributes {stable_mosaic.version = 11 : i64} {
  func.func @_conv3x3_bn_relu_kernel(%arg0: i32, %arg1: i32, %arg2: memref<640x128xbf16, #tpu.memory_space<vmem>>, %arg3: memref<9x128x128xbf16, #tpu.memory_space<vmem>>, %arg4: memref<1x128xf32, #tpu.memory_space<vmem>>, %arg5: memref<1x128xf32, #tpu.memory_space<vmem>>, %arg6: memref<4x4x128xbf16, #tpu.memory_space<vmem>>, %arg7: memref<64x128xf32, #tpu.memory_space<vmem>>) attributes {dimension_semantics = [#tpu.dimension_semantics<parallel>, #tpu.dimension_semantics<parallel>], iteration_bounds = array<i64: 2, 1>, scalar_prefetch = 0 : i64, scratch_operands = 1 : i64, tpu.core_type = #tpu.core_type<tc>, window_params = [{transform_indices = @transform_0, window_bounds = array<i64: 640, 128>}, {pipeline_mode = #tpu.pipeline_mode<synchronous>, transform_indices = @transform_1, window_bounds = array<i64: 9, 128, 128>}, {pipeline_mode = #tpu.pipeline_mode<synchronous>, transform_indices = @transform_2, window_bounds = array<i64: 1, 128>}, {pipeline_mode = #tpu.pipeline_mode<synchronous>, transform_indices = @transform_3, window_bounds = array<i64: 1, 128>}, {transform_indices = @transform_4, window_bounds = array<i64: 4, 4, 128>}]} {
    %c4_i32 = arith.constant 4 : i32
    %0 = arith.muli %arg1, %c4_i32 : i32
    %c0_i32 = arith.constant 0 : i32
    %1 = arith.addi %c0_i32, %0 : i32
    %c16_i32 = arith.constant 16 : i32
    %2 = arith.muli %1, %c16_i32 : i32
    %3 = tpu.assume_multiple %2, 16 : i32
    %4 = arith.index_cast %3 : i32 to index
    %c0 = arith.constant 0 : index
    %5 = vector.load %arg2[%4, %c0] : memref<640x128xbf16, #tpu.memory_space<vmem>>, vector<64x128xbf16>
    %c0_0 = arith.constant 0 : index
    %c0_1 = arith.constant 0 : index
    %c0_2 = arith.constant 0 : index
    %6 = vector.load %arg3[%c0_0, %c0_1, %c0_2] : memref<9x128x128xbf16, #tpu.memory_space<vmem>>, vector<1x128x128xbf16>
    %7 = vector.shape_cast %6 : vector<1x128x128xbf16> to vector<128x128xbf16>
    %cst = arith.constant dense<0.000000e+00> : vector<64x128xf32>
    %8 = tpu.matmul %5, %7, %cst {dimension_numbers = #tpu.dot_dimension_numbers<[1], [0], [0], [1], [0, 0, 1, 1], [], []>} : vector<64x128xbf16>, vector<128x128xbf16>, vector<64x128xf32> -> vector<64x128xf32>
    %c0_3 = arith.constant 0 : index
    %c0_4 = arith.constant 0 : index
    %9 = vector.load %arg7[%c0_3, %c0_4] : memref<64x128xf32, #tpu.memory_space<vmem>>, vector<64x128xf32>
    tpu.vector_store %arg7[%c0_3, %c0_4], %8 {strides = array<i32>} : memref<64x128xf32, #tpu.memory_space<vmem>>, vector<64x128xf32>,
    %c5_i32 = arith.constant 5 : i32
    %10 = arith.addi %c5_i32, %0 : i32
    %c16_i32_5 = arith.constant 16 : i32
    %11 = arith.muli %10, %c16_i32_5 : i32
    %12 = tpu.assume_multiple %11, 16 : i32
    %13 = arith.index_cast %12 : i32 to index
    %c0_6 = arith.constant 0 : index
    %14 = vector.load %arg2[%13, %c0_6] : memref<640x128xbf16, #tpu.memory_space<vmem>>, vector<64x128xbf16>
    %c1 = arith.constant 1 : index
    %c0_7 = arith.constant 0 : index
    %c0_8 = arith.constant 0 : index
    %15 = vector.load %arg3[%c1, %c0_7, %c0_8] : memref<9x128x128xbf16, #tpu.memory_space<vmem>>, vector<1x128x128xbf16>
    %16 = vector.shape_cast %15 : vector<1x128x128xbf16> to vector<128x128xbf16>
    %cst_9 = arith.constant dense<0.000000e+00> : vector<64x128xf32>
    %17 = tpu.matmul %14, %16, %cst_9 {dimension_numbers = #tpu.dot_dimension_numbers<[1], [0], [0], [1], [0, 0, 1, 1], [], []>} : vector<64x128xbf16>, vector<128x128xbf16>, vector<64x128xf32> -> vector<64x128xf32>
    %c0_10 = arith.constant 0 : index
    %c0_11 = arith.constant 0 : index
    %18 = vector.load %arg7[%c0_10, %c0_11] : memref<64x128xf32, #tpu.memory_space<vmem>>, vector<64x128xf32>
    %19 = arith.addf %18, %17 : vector<64x128xf32>
    %c0_12 = arith.constant 0 : index
    %c0_13 = arith.constant 0 : index
    %20 = vector.load %arg7[%c0_12, %c0_13] : memref<64x128xf32, #tpu.memory_space<vmem>>, vector<64x128xf32>
    tpu.vector_store %arg7[%c0_12, %c0_13], %19 {strides = array<i32>} : memref<64x128xf32, #tpu.memory_space<vmem>>, vector<64x128xf32>,
    %c20_i32 = arith.constant 20 : i32
    %21 = arith.addi %c20_i32, %0 : i32
    %c16_i32_14 = arith.constant 16 : i32
    %22 = arith.muli %21, %c16_i32_14 : i32
    %23 = tpu.assume_multiple %22, 16 : i32
    %24 = arith.index_cast %23 : i32 to index
    %c0_15 = arith.constant 0 : index
    %25 = vector.load %arg2[%24, %c0_15] : memref<640x128xbf16, #tpu.memory_space<vmem>>, vector<64x128xbf16>
    %c2 = arith.constant 2 : index
    %c0_16 = arith.constant 0 : index
    %c0_17 = arith.constant 0 : index
    %26 = vector.load %arg3[%c2, %c0_16, %c0_17] : memref<9x128x128xbf16, #tpu.memory_space<vmem>>, vector<1x128x128xbf16>
    %27 = vector.shape_cast %26 : vector<1x128x128xbf16> to vector<128x128xbf16>
    %cst_18 = arith.constant dense<0.000000e+00> : vector<64x128xf32>
    %28 = tpu.matmul %25, %27, %cst_18 {dimension_numbers = #tpu.dot_dimension_numbers<[1], [0], [0], [1], [0, 0, 1, 1], [], []>} : vector<64x128xbf16>, vector<128x128xbf16>, vector<64x128xf32> -> vector<64x128xf32>
    %c0_19 = arith.constant 0 : index
    %c0_20 = arith.constant 0 : index
    %29 = vector.load %arg7[%c0_19, %c0_20] : memref<64x128xf32, #tpu.memory_space<vmem>>, vector<64x128xf32>
    %30 = arith.addf %29, %28 : vector<64x128xf32>
    %c0_21 = arith.constant 0 : index
    %c0_22 = arith.constant 0 : index
    %31 = vector.load %arg7[%c0_21, %c0_22] : memref<64x128xf32, #tpu.memory_space<vmem>>, vector<64x128xf32>
    tpu.vector_store %arg7[%c0_21, %c0_22], %30 {strides = array<i32>} : memref<64x128xf32, #tpu.memory_space<vmem>>, vector<64x128xf32>,
    %c10_i32 = arith.constant 10 : i32
    %32 = arith.addi %c10_i32, %0 : i32
    %c16_i32_23 = arith.constant 16 : i32
    %33 = arith.muli %32, %c16_i32_23 : i32
    %34 = tpu.assume_multiple %33, 16 : i32
    %35 = arith.index_cast %34 : i32 to index
    %c0_24 = arith.constant 0 : index
    %36 = vector.load %arg2[%35, %c0_24] : memref<640x128xbf16, #tpu.memory_space<vmem>>, vector<64x128xbf16>
    %c3 = arith.constant 3 : index
    %c0_25 = arith.constant 0 : index
    %c0_26 = arith.constant 0 : index
    %37 = vector.load %arg3[%c3, %c0_25, %c0_26] : memref<9x128x128xbf16, #tpu.memory_space<vmem>>, vector<1x128x128xbf16>
    %38 = vector.shape_cast %37 : vector<1x128x128xbf16> to vector<128x128xbf16>
    %cst_27 = arith.constant dense<0.000000e+00> : vector<64x128xf32>
    %39 = tpu.matmul %36, %38, %cst_27 {dimension_numbers = #tpu.dot_dimension_numbers<[1], [0], [0], [1], [0, 0, 1, 1], [], []>} : vector<64x128xbf16>, vector<128x128xbf16>, vector<64x128xf32> -> vector<64x128xf32>
    %c0_28 = arith.constant 0 : index
    %c0_29 = arith.constant 0 : index
    %40 = vector.load %arg7[%c0_28, %c0_29] : memref<64x128xf32, #tpu.memory_space<vmem>>, vector<64x128xf32>
    %41 = arith.addf %40, %39 : vector<64x128xf32>
    %c0_30 = arith.constant 0 : index
    %c0_31 = arith.constant 0 : index
    %42 = vector.load %arg7[%c0_30, %c0_31] : memref<64x128xf32, #tpu.memory_space<vmem>>, vector<64x128xf32>
    tpu.vector_store %arg7[%c0_30, %c0_31], %41 {strides = array<i32>} : memref<64x128xf32, #tpu.memory_space<vmem>>, vector<64x128xf32>,
    %c15_i32 = arith.constant 15 : i32
    %43 = arith.addi %c15_i32, %0 : i32
    %c16_i32_32 = arith.constant 16 : i32
    %44 = arith.muli %43, %c16_i32_32 : i32
    %45 = tpu.assume_multiple %44, 16 : i32
    %46 = arith.index_cast %45 : i32 to index
    %c0_33 = arith.constant 0 : index
    %47 = vector.load %arg2[%46, %c0_33] : memref<640x128xbf16, #tpu.memory_space<vmem>>, vector<64x128xbf16>
    %c4 = arith.constant 4 : index
    %c0_34 = arith.constant 0 : index
    %c0_35 = arith.constant 0 : index
    %48 = vector.load %arg3[%c4, %c0_34, %c0_35] : memref<9x128x128xbf16, #tpu.memory_space<vmem>>, vector<1x128x128xbf16>
    %49 = vector.shape_cast %48 : vector<1x128x128xbf16> to vector<128x128xbf16>
    %cst_36 = arith.constant dense<0.000000e+00> : vector<64x128xf32>
    %50 = tpu.matmul %47, %49, %cst_36 {dimension_numbers = #tpu.dot_dimension_numbers<[1], [0], [0], [1], [0, 0, 1, 1], [], []>} : vector<64x128xbf16>, vector<128x128xbf16>, vector<64x128xf32> -> vector<64x128xf32>
    %c0_37 = arith.constant 0 : index
    %c0_38 = arith.constant 0 : index
    %51 = vector.load %arg7[%c0_37, %c0_38] : memref<64x128xf32, #tpu.memory_space<vmem>>, vector<64x128xf32>
    %52 = arith.addf %51, %50 : vector<64x128xf32>
    %c0_39 = arith.constant 0 : index
    %c0_40 = arith.constant 0 : index
    %53 = vector.load %arg7[%c0_39, %c0_40] : memref<64x128xf32, #tpu.memory_space<vmem>>, vector<64x128xf32>
    tpu.vector_store %arg7[%c0_39, %c0_40], %52 {strides = array<i32>} : memref<64x128xf32, #tpu.memory_space<vmem>>, vector<64x128xf32>,
    %c30_i32 = arith.constant 30 : i32
    %54 = arith.addi %c30_i32, %0 : i32
    %c16_i32_41 = arith.constant 16 : i32
    %55 = arith.muli %54, %c16_i32_41 : i32
    %56 = tpu.assume_multiple %55, 16 : i32
    %57 = arith.index_cast %56 : i32 to index
    %c0_42 = arith.constant 0 : index
    %58 = vector.load %arg2[%57, %c0_42] : memref<640x128xbf16, #tpu.memory_space<vmem>>, vector<64x128xbf16>
    %c5 = arith.constant 5 : index
    %c0_43 = arith.constant 0 : index
    %c0_44 = arith.constant 0 : index
    %59 = vector.load %arg3[%c5, %c0_43, %c0_44] : memref<9x128x128xbf16, #tpu.memory_space<vmem>>, vector<1x128x128xbf16>
    %60 = vector.shape_cast %59 : vector<1x128x128xbf16> to vector<128x128xbf16>
    %cst_45 = arith.constant dense<0.000000e+00> : vector<64x128xf32>
    %61 = tpu.matmul %58, %60, %cst_45 {dimension_numbers = #tpu.dot_dimension_numbers<[1], [0], [0], [1], [0, 0, 1, 1], [], []>} : vector<64x128xbf16>, vector<128x128xbf16>, vector<64x128xf32> -> vector<64x128xf32>
    %c0_46 = arith.constant 0 : index
    %c0_47 = arith.constant 0 : index
    %62 = vector.load %arg7[%c0_46, %c0_47] : memref<64x128xf32, #tpu.memory_space<vmem>>, vector<64x128xf32>
    %63 = arith.addf %62, %61 : vector<64x128xf32>
    %c0_48 = arith.constant 0 : index
    %c0_49 = arith.constant 0 : index
    %64 = vector.load %arg7[%c0_48, %c0_49] : memref<64x128xf32, #tpu.memory_space<vmem>>, vector<64x128xf32>
    tpu.vector_store %arg7[%c0_48, %c0_49], %63 {strides = array<i32>} : memref<64x128xf32, #tpu.memory_space<vmem>>, vector<64x128xf32>,
    %c1_i32 = arith.constant 1 : i32
    %65 = arith.addi %c1_i32, %0 : i32
    %c16_i32_50 = arith.constant 16 : i32
    %66 = arith.muli %65, %c16_i32_50 : i32
    %67 = tpu.assume_multiple %66, 16 : i32
    %68 = arith.index_cast %67 : i32 to index
    %c0_51 = arith.constant 0 : index
    %69 = vector.load %arg2[%68, %c0_51] : memref<640x128xbf16, #tpu.memory_space<vmem>>, vector<64x128xbf16>
    %c6 = arith.constant 6 : index
    %c0_52 = arith.constant 0 : index
    %c0_53 = arith.constant 0 : index
    %70 = vector.load %arg3[%c6, %c0_52, %c0_53] : memref<9x128x128xbf16, #tpu.memory_space<vmem>>, vector<1x128x128xbf16>
    %71 = vector.shape_cast %70 : vector<1x128x128xbf16> to vector<128x128xbf16>
    %cst_54 = arith.constant dense<0.000000e+00> : vector<64x128xf32>
    %72 = tpu.matmul %69, %71, %cst_54 {dimension_numbers = #tpu.dot_dimension_numbers<[1], [0], [0], [1], [0, 0, 1, 1], [], []>} : vector<64x128xbf16>, vector<128x128xbf16>, vector<64x128xf32> -> vector<64x128xf32>
    %c0_55 = arith.constant 0 : index
    %c0_56 = arith.constant 0 : index
    %73 = vector.load %arg7[%c0_55, %c0_56] : memref<64x128xf32, #tpu.memory_space<vmem>>, vector<64x128xf32>
    %74 = arith.addf %73, %72 : vector<64x128xf32>
    %c0_57 = arith.constant 0 : index
    %c0_58 = arith.constant 0 : index
    %75 = vector.load %arg7[%c0_57, %c0_58] : memref<64x128xf32, #tpu.memory_space<vmem>>, vector<64x128xf32>
    tpu.vector_store %arg7[%c0_57, %c0_58], %74 {strides = array<i32>} : memref<64x128xf32, #tpu.memory_space<vmem>>, vector<64x128xf32>,
    %c6_i32 = arith.constant 6 : i32
    %76 = arith.addi %c6_i32, %0 : i32
    %c16_i32_59 = arith.constant 16 : i32
    %77 = arith.muli %76, %c16_i32_59 : i32
    %78 = tpu.assume_multiple %77, 16 : i32
    %79 = arith.index_cast %78 : i32 to index
    %c0_60 = arith.constant 0 : index
    %80 = vector.load %arg2[%79, %c0_60] : memref<640x128xbf16, #tpu.memory_space<vmem>>, vector<64x128xbf16>
    %c7 = arith.constant 7 : index
    %c0_61 = arith.constant 0 : index
    %c0_62 = arith.constant 0 : index
    %81 = vector.load %arg3[%c7, %c0_61, %c0_62] : memref<9x128x128xbf16, #tpu.memory_space<vmem>>, vector<1x128x128xbf16>
    %82 = vector.shape_cast %81 : vector<1x128x128xbf16> to vector<128x128xbf16>
    %cst_63 = arith.constant dense<0.000000e+00> : vector<64x128xf32>
    %83 = tpu.matmul %80, %82, %cst_63 {dimension_numbers = #tpu.dot_dimension_numbers<[1], [0], [0], [1], [0, 0, 1, 1], [], []>} : vector<64x128xbf16>, vector<128x128xbf16>, vector<64x128xf32> -> vector<64x128xf32>
    %c0_64 = arith.constant 0 : index
    %c0_65 = arith.constant 0 : index
    %84 = vector.load %arg7[%c0_64, %c0_65] : memref<64x128xf32, #tpu.memory_space<vmem>>, vector<64x128xf32>
    %85 = arith.addf %84, %83 : vector<64x128xf32>
    %c0_66 = arith.constant 0 : index
    %c0_67 = arith.constant 0 : index
    %86 = vector.load %arg7[%c0_66, %c0_67] : memref<64x128xf32, #tpu.memory_space<vmem>>, vector<64x128xf32>
    tpu.vector_store %arg7[%c0_66, %c0_67], %85 {strides = array<i32>} : memref<64x128xf32, #tpu.memory_space<vmem>>, vector<64x128xf32>,
    %c21_i32 = arith.constant 21 : i32
    %87 = arith.addi %c21_i32, %0 : i32
    %c16_i32_68 = arith.constant 16 : i32
    %88 = arith.muli %87, %c16_i32_68 : i32
    %89 = tpu.assume_multiple %88, 16 : i32
    %90 = arith.index_cast %89 : i32 to index
    %c0_69 = arith.constant 0 : index
    %91 = vector.load %arg2[%90, %c0_69] : memref<640x128xbf16, #tpu.memory_space<vmem>>, vector<64x128xbf16>
    %c8 = arith.constant 8 : index
    %c0_70 = arith.constant 0 : index
    %c0_71 = arith.constant 0 : index
    %92 = vector.load %arg3[%c8, %c0_70, %c0_71] : memref<9x128x128xbf16, #tpu.memory_space<vmem>>, vector<1x128x128xbf16>
    %93 = vector.shape_cast %92 : vector<1x128x128xbf16> to vector<128x128xbf16>
    %cst_72 = arith.constant dense<0.000000e+00> : vector<64x128xf32>
    %94 = tpu.matmul %91, %93, %cst_72 {dimension_numbers = #tpu.dot_dimension_numbers<[1], [0], [0], [1], [0, 0, 1, 1], [], []>} : vector<64x128xbf16>, vector<128x128xbf16>, vector<64x128xf32> -> vector<64x128xf32>
    %c0_73 = arith.constant 0 : index
    %c0_74 = arith.constant 0 : index
    %95 = vector.load %arg7[%c0_73, %c0_74] : memref<64x128xf32, #tpu.memory_space<vmem>>, vector<64x128xf32>
    %96 = arith.addf %95, %94 : vector<64x128xf32>
    %c0_75 = arith.constant 0 : index
    %c0_76 = arith.constant 0 : index
    %97 = vector.load %arg7[%c0_75, %c0_76] : memref<64x128xf32, #tpu.memory_space<vmem>>, vector<64x128xf32>
    tpu.vector_store %arg7[%c0_75, %c0_76], %96 {strides = array<i32>} : memref<64x128xf32, #tpu.memory_space<vmem>>, vector<64x128xf32>,
    %c0_77 = arith.constant 0 : index
    %c0_78 = arith.constant 0 : index
    %98 = vector.load %arg7[%c0_77, %c0_78] : memref<64x128xf32, #tpu.memory_space<vmem>>, vector<64x128xf32>
    %c0_79 = arith.constant 0 : index
    %c0_80 = arith.constant 0 : index
    %99 = vector.load %arg4[%c0_79, %c0_80] : memref<1x128xf32, #tpu.memory_space<vmem>>, vector<1x128xf32>
    %100 = vector.broadcast %99 : vector<1x128xf32> to vector<64x128xf32>
    %101 = arith.mulf %98, %100 : vector<64x128xf32>
    %c0_81 = arith.constant 0 : index
    %c0_82 = arith.constant 0 : index
    %102 = vector.load %arg5[%c0_81, %c0_82] : memref<1x128xf32, #tpu.memory_space<vmem>>, vector<1x128xf32>
    %103 = vector.broadcast %102 : vector<1x128xf32> to vector<64x128xf32>
    %104 = arith.addf %101, %103 : vector<64x128xf32>
    %cst_83 = arith.constant 0.000000e+00 : f32
    %105 = vector.broadcast %cst_83 : f32 to vector<64x128xf32>
    %106 = arith.maximumf %104, %105 : vector<64x128xf32>
    %107 = vector.shape_cast %106 : vector<64x128xf32> to vector<4x16x128xf32>
    %108 = vector.extract_strided_slice %107 {offsets = [0, 0, 0], sizes = [4, 4, 128], strides = [1, 1, 1]} : vector<4x16x128xf32> to vector<4x4x128xf32>
    %109 = arith.truncf %108 : vector<4x4x128xf32> to vector<4x4x128xbf16>
    %c0_84 = arith.constant 0 : index
    %c0_85 = arith.constant 0 : index
    %c0_86 = arith.constant 0 : index
    %110 = vector.load %arg6[%c0_84, %c0_85, %c0_86] : memref<4x4x128xbf16, #tpu.memory_space<vmem>>, vector<4x4x128xbf16>
    tpu.vector_store %arg6[%c0_84, %c0_85, %c0_86], %109 {strides = array<i32>} : memref<4x4x128xbf16, #tpu.memory_space<vmem>>, vector<4x4x128xbf16>,
    return
  }
  func.func @transform_0(%arg0: i32, %arg1: i32) -> (i32, i32) {
    %c0_i32 = arith.constant 0 : i32
    %c0_i32_0 = arith.constant 0 : i32
    return %arg0, %c0_i32 : i32, i32
  }
  func.func @transform_1(%arg0: i32, %arg1: i32) -> (i32, i32, i32) {
    %c0_i32 = arith.constant 0 : i32
    %c0_i32_0 = arith.constant 0 : i32
    %c0_i32_1 = arith.constant 0 : i32
    %c0_i32_2 = arith.constant 0 : i32
    return %c0_i32, %c0_i32_0, %c0_i32_1 : i32, i32, i32
  }
  func.func @transform_2(%arg0: i32, %arg1: i32) -> (i32, i32) {
    %c0_i32 = arith.constant 0 : i32
    %c0_i32_0 = arith.constant 0 : i32
    %c0_i32_1 = arith.constant 0 : i32
    return %c0_i32, %c0_i32_0 : i32, i32
  }
  func.func @transform_3(%arg0: i32, %arg1: i32) -> (i32, i32) {
    %c0_i32 = arith.constant 0 : i32
    %c0_i32_0 = arith.constant 0 : i32
    %c0_i32_1 = arith.constant 0 : i32
    return %c0_i32, %c0_i32_0 : i32, i32
  }
  func.func @transform_4(%arg0: i32, %arg1: i32) -> (i32, i32, i32) {
    %c1_i32 = arith.constant 1 : i32
    %0 = arith.muli %arg0, %c1_i32 : i32
    %1 = arith.addi %0, %arg1 : i32
    %c0_i32 = arith.constant 0 : i32
    %c0_i32_0 = arith.constant 0 : i32
    %c0_i32_1 = arith.constant 0 : i32
    return %1, %c0_i32, %c0_i32_0 : i32, i32, i32
  }
}

module attributes {stable_mosaic.version = 11 : i64} {
  func.func @_mm_bn_proj_relu_kernel(%arg0: i32, %arg1: memref<32x128xbf16, #tpu.memory_space<vmem>>, %arg2: memref<128x128xbf16, #tpu.memory_space<vmem>>, %arg3: memref<1x128xf32, #tpu.memory_space<vmem>>, %arg4: memref<1x128xf32, #tpu.memory_space<vmem>>, %arg5: memref<32x128xbf16, #tpu.memory_space<vmem>>, %arg6: memref<128x128xbf16, #tpu.memory_space<vmem>>, %arg7: memref<1x128xf32, #tpu.memory_space<vmem>>, %arg8: memref<1x128xf32, #tpu.memory_space<vmem>>, %arg9: memref<32x128xbf16, #tpu.memory_space<vmem>>) attributes {dimension_semantics = [#tpu.dimension_semantics<parallel>], iteration_bounds = array<i64: 1>, scalar_prefetch = 0 : i64, scratch_operands = 0 : i64, tpu.core_type = #tpu.core_type<tc>, window_params = [{transform_indices = @transform_0, window_bounds = array<i64: 32, 128>}, {pipeline_mode = #tpu.pipeline_mode<synchronous>, transform_indices = @transform_1, window_bounds = array<i64: 128, 128>}, {pipeline_mode = #tpu.pipeline_mode<synchronous>, transform_indices = @transform_2, window_bounds = array<i64: 1, 128>}, {pipeline_mode = #tpu.pipeline_mode<synchronous>, transform_indices = @transform_3, window_bounds = array<i64: 1, 128>}, {transform_indices = @transform_4, window_bounds = array<i64: 32, 128>}, {pipeline_mode = #tpu.pipeline_mode<synchronous>, transform_indices = @transform_5, window_bounds = array<i64: 128, 128>}, {pipeline_mode = #tpu.pipeline_mode<synchronous>, transform_indices = @transform_6, window_bounds = array<i64: 1, 128>}, {pipeline_mode = #tpu.pipeline_mode<synchronous>, transform_indices = @transform_7, window_bounds = array<i64: 1, 128>}, {transform_indices = @transform_8, window_bounds = array<i64: 32, 128>}]} {
    %c0 = arith.constant 0 : index
    %c0_0 = arith.constant 0 : index
    %0 = vector.load %arg1[%c0, %c0_0] : memref<32x128xbf16, #tpu.memory_space<vmem>>, vector<32x128xbf16>
    %c0_1 = arith.constant 0 : index
    %c0_2 = arith.constant 0 : index
    %1 = vector.load %arg2[%c0_1, %c0_2] : memref<128x128xbf16, #tpu.memory_space<vmem>>, vector<128x128xbf16>
    %cst = arith.constant dense<0.000000e+00> : vector<32x128xf32>
    %2 = tpu.matmul %0, %1, %cst {dimension_numbers = #tpu.dot_dimension_numbers<[1], [0], [0], [1], [0, 0, 1, 1], [], []>} : vector<32x128xbf16>, vector<128x128xbf16>, vector<32x128xf32> -> vector<32x128xf32>
    %c0_3 = arith.constant 0 : index
    %c0_4 = arith.constant 0 : index
    %3 = vector.load %arg3[%c0_3, %c0_4] : memref<1x128xf32, #tpu.memory_space<vmem>>, vector<1x128xf32>
    %4 = vector.broadcast %3 : vector<1x128xf32> to vector<32x128xf32>
    %5 = arith.mulf %2, %4 : vector<32x128xf32>
    %c0_5 = arith.constant 0 : index
    %c0_6 = arith.constant 0 : index
    %6 = vector.load %arg4[%c0_5, %c0_6] : memref<1x128xf32, #tpu.memory_space<vmem>>, vector<1x128xf32>
    %7 = vector.broadcast %6 : vector<1x128xf32> to vector<32x128xf32>
    %8 = arith.addf %5, %7 : vector<32x128xf32>
    %c0_7 = arith.constant 0 : index
    %c0_8 = arith.constant 0 : index
    %9 = vector.load %arg5[%c0_7, %c0_8] : memref<32x128xbf16, #tpu.memory_space<vmem>>, vector<32x128xbf16>
    %c0_9 = arith.constant 0 : index
    %c0_10 = arith.constant 0 : index
    %10 = vector.load %arg6[%c0_9, %c0_10] : memref<128x128xbf16, #tpu.memory_space<vmem>>, vector<128x128xbf16>
    %cst_11 = arith.constant dense<0.000000e+00> : vector<32x128xf32>
    %11 = tpu.matmul %9, %10, %cst_11 {dimension_numbers = #tpu.dot_dimension_numbers<[1], [0], [0], [1], [0, 0, 1, 1], [], []>} : vector<32x128xbf16>, vector<128x128xbf16>, vector<32x128xf32> -> vector<32x128xf32>
    %c0_12 = arith.constant 0 : index
    %c0_13 = arith.constant 0 : index
    %12 = vector.load %arg7[%c0_12, %c0_13] : memref<1x128xf32, #tpu.memory_space<vmem>>, vector<1x128xf32>
    %13 = vector.broadcast %12 : vector<1x128xf32> to vector<32x128xf32>
    %14 = arith.mulf %11, %13 : vector<32x128xf32>
    %c0_14 = arith.constant 0 : index
    %c0_15 = arith.constant 0 : index
    %15 = vector.load %arg8[%c0_14, %c0_15] : memref<1x128xf32, #tpu.memory_space<vmem>>, vector<1x128xf32>
    %16 = vector.broadcast %15 : vector<1x128xf32> to vector<32x128xf32>
    %17 = arith.addf %14, %16 : vector<32x128xf32>
    %18 = arith.addf %8, %17 : vector<32x128xf32>
    %cst_16 = arith.constant 0.000000e+00 : f32
    %19 = vector.broadcast %cst_16 : f32 to vector<32x128xf32>
    %20 = arith.maximumf %18, %19 : vector<32x128xf32>
    %21 = arith.truncf %20 : vector<32x128xf32> to vector<32x128xbf16>
    %c0_17 = arith.constant 0 : index
    %c0_18 = arith.constant 0 : index
    %22 = vector.load %arg9[%c0_17, %c0_18] : memref<32x128xbf16, #tpu.memory_space<vmem>>, vector<32x128xbf16>
    tpu.vector_store %arg9[%c0_17, %c0_18], %21 {strides = array<i32>} : memref<32x128xbf16, #tpu.memory_space<vmem>>, vector<32x128xbf16>,
    return
  }
  func.func @transform_0(%arg0: i32) -> (i32, i32) {
    %c0_i32 = arith.constant 0 : i32
    %c0_i32_0 = arith.constant 0 : i32
    return %arg0, %c0_i32 : i32, i32
  }
  func.func @transform_1(%arg0: i32) -> (i32, i32) {
    %c0_i32 = arith.constant 0 : i32
    %c0_i32_0 = arith.constant 0 : i32
    %c0_i32_1 = arith.constant 0 : i32
    return %c0_i32, %c0_i32_0 : i32, i32
  }
  func.func @transform_2(%arg0: i32) -> (i32, i32) {
    %c0_i32 = arith.constant 0 : i32
    %c0_i32_0 = arith.constant 0 : i32
    %c0_i32_1 = arith.constant 0 : i32
    return %c0_i32, %c0_i32_0 : i32, i32
  }
  func.func @transform_3(%arg0: i32) -> (i32, i32) {
    %c0_i32 = arith.constant 0 : i32
    %c0_i32_0 = arith.constant 0 : i32
    %c0_i32_1 = arith.constant 0 : i32
    return %c0_i32, %c0_i32_0 : i32, i32
  }
  func.func @transform_4(%arg0: i32) -> (i32, i32) {
    %c0_i32 = arith.constant 0 : i32
    %c0_i32_0 = arith.constant 0 : i32
    return %arg0, %c0_i32 : i32, i32
  }
  func.func @transform_5(%arg0: i32) -> (i32, i32) {
    %c0_i32 = arith.constant 0 : i32
    %c0_i32_0 = arith.constant 0 : i32
    %c0_i32_1 = arith.constant 0 : i32
    return %c0_i32, %c0_i32_0 : i32, i32
  }
  func.func @transform_6(%arg0: i32) -> (i32, i32) {
    %c0_i32 = arith.constant 0 : i32
    %c0_i32_0 = arith.constant 0 : i32
    %c0_i32_1 = arith.constant 0 : i32
    return %c0_i32, %c0_i32_0 : i32, i32
  }
  func.func @transform_7(%arg0: i32) -> (i32, i32) {
    %c0_i32 = arith.constant 0 : i32
    %c0_i32_0 = arith.constant 0 : i32
    %c0_i32_1 = arith.constant 0 : i32
    return %c0_i32, %c0_i32_0 : i32, i32
  }
  func.func @transform_8(%arg0: i32) -> (i32, i32) {
    %c0_i32 = arith.constant 0 : i32
    %c0_i32_0 = arith.constant 0 : i32
    return %arg0, %c0_i32 : i32, i32
  }
}

</mosaic_0001>

<llo_original>
// kernel: bottleneck_forward.3
$region0: #{bottleneck_forward.3}
  #allocation0 [shape = 'u32[]', space=smem, size = 0x4, offset = 0x4, fixed_abs, tag = 'smem constant byte address 0x4 - core index']
  #allocation1 [shape = 'u32[144,128]{1,0:T(1,128)}', space=vmem, size = 0x12000, scoped, tag = 'internal scratch']
  %s0 = inlined_call_operand.vmem [shape: bf16[128,128], index: 0, kind: input, shape index: {}]
  %s1 = inlined_call_operand.vmem [shape: bf16[128,128], index: 1, kind: input, shape index: {}]
  %s2 = inlined_call_operand.vmem [shape: f32[1,128], index: 2, kind: input, shape index: {}]
  %s3 = inlined_call_operand.vmem [shape: f32[1,128], index: 3, kind: input, shape index: {}]
  %s4 = inlined_call_operand.vmem [shape: bf16[128,128], index: 4, kind: output, shape index: {}]
  %s5 = sld [smem:[#allocation0]]
  $region26: #{bottleneck_forward.3} parent=0
    _
  %s7 = ssub.s32 1, %s5
  %s8 = scalar_select 0, %s7, %s5
  // Predicated region
  $region2: #{bottleneck_forward.3} parent=0 // pred_check
    _
  $region3: #{bottleneck_forward.3} parent=0 // pred_check_branch
    %10 = sbr.rel (0) target = $region5
  $region4: #{bottleneck_forward.3} parent=0 // pred_region
    _
  $region5: #{bottleneck_forward.3} parent=0 // pred_fallthru
    _
  // Predicated region
  $region6: #{bottleneck_forward.3} parent=0 // pred_check
    _
  $region7: #{bottleneck_forward.3} parent=0 // pred_check_branch
    %12 = sbr.rel (0) target = $region9
  $region8: #{bottleneck_forward.3} parent=0 // pred_region
    _
  $region9: #{bottleneck_forward.3} parent=0 // pred_fallthru
    _
  // Predicated region
  $region10: #{bottleneck_forward.3} parent=0 // pred_check
    _
  $region11: #{bottleneck_forward.3} parent=0 // pred_check_branch
    %14 = sbr.rel (0) target = $region13
  $region12: #{bottleneck_forward.3} parent=0 // pred_region
    _
  $region13: #{bottleneck_forward.3} parent=0 // pred_fallthru
    _
  // Predicated region
  $region14: #{bottleneck_forward.3} parent=0 // pred_check
    _
  $region15: #{bottleneck_forward.3} parent=0 // pred_check_branch
    %16 = sbr.rel (0) target = $region17
  $region16: #{bottleneck_forward.3} parent=0 // pred_region
    _
  $region17: #{bottleneck_forward.3} parent=0 // pred_fallthru
    _
  %v18 = vld [vmem:[%s0] sm:$0xf]
  %v19 = vld [vmem:[%s0 + $0x4] sm:$0xf]
  %v20 = vld [vmem:[%s0 + $0x8] sm:$0xf]
  %v21 = vld [vmem:[%s0 + $0xc] sm:$0xf]
  %v22 = vld [vmem:[%s0 + $0x10] sm:$0xf]
  %v23 = vld [vmem:[%s0 + $0x14] sm:$0xf]
  %v24 = vld [vmem:[%s0 + $0x18] sm:$0xf]
  %v25 = vld [vmem:[%s0 + $0x1c] sm:$0xf]
  %v26 = vld [vmem:[%s0 + $0x20] sm:$0xf]
  %v27 = vld [vmem:[%s0 + $0x24] sm:$0xf]
  %v28 = vld [vmem:[%s0 + $0x28] sm:$0xf]
  %v29 = vld [vmem:[%s0 + $0x2c] sm:$0xf]
  %v30 = vld [vmem:[%s0 + $0x30] sm:$0xf]
  %v31 = vld [vmem:[%s0 + $0x34] sm:$0xf]
  %v32 = vld [vmem:[%s0 + $0x38] sm:$0xf]
  %v33 = vld [vmem:[%s0 + $0x3c] sm:$0xf]
  %v34 = vld [vmem:[%s1] sm:$0xf]
  %v35 = vld [vmem:[%s1 + $0x4] sm:$0xf]
  %v36 = vld [vmem:[%s1 + $0x8] sm:$0xf]
  %v37 = vld [vmem:[%s1 + $0xc] sm:$0xf]
  %v38 = vld [vmem:[%s1 + $0x10] sm:$0xf]
  %v39 = vld [vmem:[%s1 + $0x14] sm:$0xf]
  %v40 = vld [vmem:[%s1 + $0x18] sm:$0xf]
  %v41 = vld [vmem:[%s1 + $0x1c] sm:$0xf]
  %v42 = vld [vmem:[%s1 + $0x20] sm:$0xf]
  %v43 = vld [vmem:[%s1 + $0x24] sm:$0xf]
  %v44 = vld [vmem:[%s1 + $0x28] sm:$0xf]
  %v45 = vld [vmem:[%s1 + $0x2c] sm:$0xf]
  %v46 = vld [vmem:[%s1 + $0x30] sm:$0xf]
  %v47 = vld [vmem:[%s1 + $0x34] sm:$0xf]
  %v48 = vld [vmem:[%s1 + $0x38] sm:$0xf]
  %v49 = vld [vmem:[%s1 + $0x3c] sm:$0xf]
  %v66 = vunpack.c.l.b16 %v18
  %v67 = vunpack.c.l.b16 %v19
  %v68 = vunpack.c.l.b16 %v20
  %v69 = vunpack.c.l.b16 %v21
  %v70 = vunpack.c.l.b16 %v22
  %v71 = vunpack.c.l.b16 %v23
  %v72 = vunpack.c.l.b16 %v24
  %v73 = vunpack.c.l.b16 %v25
  %v74 = vunpack.c.l.b16 %v26
  %v75 = vunpack.c.l.b16 %v27
  %v76 = vunpack.c.l.b16 %v28
  %v77 = vunpack.c.l.b16 %v29
  %v78 = vunpack.c.l.b16 %v30
  %v79 = vunpack.c.l.b16 %v31
  %v80 = vunpack.c.l.b16 %v32
  %v81 = vunpack.c.l.b16 %v33
  %v82 = vpack.c.b16 %v67, %v66
  %v83 = vpack.c.b16 %v69, %v68
  %v84 = vpack.c.b16 %v71, %v70
  %v85 = vpack.c.b16 %v73, %v72
  %v86 = vpack.c.b16 %v75, %v74
  %v87 = vpack.c.b16 %v77, %v76
  %v88 = vpack.c.b16 %v79, %v78
  %v89 = vpack.c.b16 %v81, %v80
  %v114 = vunpack.c.l.b16 %v34
  %v115 = vunpack.c.l.b16 %v35
  %v116 = vunpack.c.l.b16 %v36
  %v117 = vunpack.c.l.b16 %v37
  %v118 = vunpack.c.l.b16 %v38
  %v119 = vunpack.c.l.b16 %v39
  %v120 = vunpack.c.l.b16 %v40
  %v121 = vunpack.c.l.b16 %v41
  %v122 = vunpack.c.l.b16 %v42
  %v123 = vunpack.c.l.b16 %v43
  %v124 = vunpack.c.l.b16 %v44
  %v125 = vunpack.c.l.b16 %v45
  %v126 = vunpack.c.l.b16 %v46
  %v127 = vunpack.c.l.b16 %v47
  %v128 = vunpack.c.l.b16 %v48
  %v129 = vunpack.c.l.b16 %v49
  %v130 = vpack.c.b16 %v115, %v114
  %v131 = vpack.c.b16 %v117, %v116
  %v132 = vpack.c.b16 %v119, %v118
  %v133 = vpack.c.b16 %v121, %v120
  %v134 = vpack.c.b16 %v123, %v122
  %v135 = vpack.c.b16 %v125, %v124
  %v136 = vpack.c.b16 %v127, %v126
  %v137 = vpack.c.b16 %v129, %v128
  %146 = vmatprep.subr.bf16.mxu0 0
  %147 = vmatpush1.bf16.msra.mxu0 %v137
  %148 = vmatprep.subr.bf16.mxu0 0
  %149 = vmatpush1.bf16.msra.mxu0 %v136
  %150 = vmatprep.subr.bf16.mxu0 0
  %151 = vmatpush1.bf16.msra.mxu0 %v135
  %152 = vmatprep.subr.bf16.mxu0 0
  %153 = vmatpush1.bf16.msra.mxu0 %v134
  %154 = vmatprep.subr.bf16.mxu0 0
  %155 = vmatpush1.bf16.msra.mxu0 %v133
  %156 = vmatprep.subr.bf16.mxu0 0
  %157 = vmatpush1.bf16.msra.mxu0 %v132
  %158 = vmatprep.subr.bf16.mxu0 0
  %159 = vmatpush1.bf16.msra.mxu0 %v131
  %160 = vmatprep.subr.bf16.mxu0 0
  %161 = vmatpush1.bf16.msra.mxu0 %v130
  %162 = vmatprep.subr.bf16.mxu0 0
  %163 = vmatpush2.bf16.msra.mxu0 0
  %164 = vmatprep.subr.bf16.mxu0 0
  %165 = vmatpush2.bf16.msra.mxu0 0
  %166 = vmatprep.subr.bf16.mxu0 0
  %167 = vmatpush2.bf16.msra.mxu0 0
  %168 = vmatprep.subr.bf16.mxu0 0
  %169 = vmatpush2.bf16.msra.mxu0 0
  %170 = vmatprep.subr.bf16.mxu0 0
  %171 = vmatpush2.bf16.msra.mxu0 0
  %172 = vmatprep.subr.bf16.mxu0 0
  %173 = vmatpush2.bf16.msra.mxu0 0
  %174 = vmatprep.subr.bf16.mxu0 0
  %175 = vmatpush2.bf16.msra.mxu0 0
  %176 = vmatprep.subr.bf16.mxu0 0
  %177 = vmatpush2.bf16.msra.mxu0 0
  %178 = vmatprep.mubr.bf16.mxu0 0
  %179 = vmatmul.mubr.bf16.gmra.mxu0 %v82
  %v180 = vpop.f32.mrf.mxu0
  %v181 = vadd.f32 0.0, %v180
  %v182 = vpop.f32.mrf.mxu0
  %v183 = vpop.f32.mrf.mxu0
  %v184 = vadd.f32 0.0, %v183
  %v185 = vpop.f32.mrf.mxu0
  %186 = vmatprep.mubr.bf16.mxu0 0
  %187 = vmatmul.mubr.bf16.gmra.mxu0 %v83
  %v188 = vpop.f32.mrf.mxu0
  %v189 = vadd.f32 0.0, %v188
  %v190 = vpop.f32.mrf.mxu0
  %v191 = vpop.f32.mrf.mxu0
  %v192 = vadd.f32 0.0, %v191
  %v193 = vpop.f32.mrf.mxu0
  %194 = vmatprep.mubr.bf16.mxu0 0
  %195 = vmatmul.mubr.bf16.gmra.mxu0 %v84
  %v196 = vpop.f32.mrf.mxu0
  %v197 = vadd.f32 0.0, %v196
  %v198 = vpop.f32.mrf.mxu0
  %v199 = vpop.f32.mrf.mxu0
  %v200 = vadd.f32 0.0, %v199
  %v201 = vpop.f32.mrf.mxu0
  %202 = vmatprep.mubr.bf16.mxu0 0
  %203 = vmatmul.mubr.bf16.gmra.mxu0 %v85
  %v204 = vpop.f32.mrf.mxu0
  %v205 = vadd.f32 0.0, %v204
  %v206 = vpop.f32.mrf.mxu0
  %v207 = vpop.f32.mrf.mxu0
  %v208 = vadd.f32 0.0, %v207
  %v209 = vpop.f32.mrf.mxu0
  %210 = vmatprep.mubr.bf16.mxu0 0
  %211 = vmatmul.mubr.bf16.gmra.mxu0 %v86
  %v212 = vpop.f32.mrf.mxu0
  %v213 = vadd.f32 0.0, %v212
  %v214 = vpop.f32.mrf.mxu0
  %v215 = vpop.f32.mrf.mxu0
  %v216 = vadd.f32 0.0, %v215
  %v217 = vpop.f32.mrf.mxu0
  %218 = vmatprep.mubr.bf16.mxu0 0
  %219 = vmatmul.mubr.bf16.gmra.mxu0 %v87
  %v220 = vpop.f32.mrf.mxu0
  %v221 = vadd.f32 0.0, %v220
  %v222 = vpop.f32.mrf.mxu0
  %v223 = vpop.f32.mrf.mxu0
  %v224 = vadd.f32 0.0, %v223
  %v225 = vpop.f32.mrf.mxu0
  %226 = vmatprep.mubr.bf16.mxu0 0
  %227 = vmatmul.mubr.bf16.gmra.mxu0 %v88
  %v228 = vpop.f32.mrf.mxu0
  %v229 = vadd.f32 0.0, %v228
  %v230 = vpop.f32.mrf.mxu0
  %v231 = vpop.f32.mrf.mxu0
  %v232 = vadd.f32 0.0, %v231
  %v233 = vpop.f32.mrf.mxu0
  %234 = vmatprep.mubr.bf16.mxu0 0
  %235 = vmatmul.mubr.bf16.gmra.mxu0 %v89
  %v236 = vpop.f32.mrf.mxu0
  %v237 = vadd.f32 0.0, %v236
  %v238 = vpop.f32.mrf.mxu0
  %v239 = vpop.f32.mrf.mxu0
  %v240 = vadd.f32 0.0, %v239
  %v241 = vpop.f32.mrf.mxu0
  %242 = vdwg.mxu0
  %v243 = vld [vmem:[%s2] sm:$0x1]
  %v245 = vlaneseq
  %v246 = vshrl.u32 %v245, 7
  %v247 = vsub.s32 0, %v246
  %v248 = vrot.slane %v243, %v247
  %v250 = vmul.f32 %v181, %v248
  %v251 = vmul.f32 %v184, %v248
  %v252 = vmul.f32 %v189, %v248
  %v253 = vmul.f32 %v192, %v248
  %v254 = vmul.f32 %v197, %v248
  %v255 = vmul.f32 %v200, %v248
  %v256 = vmul.f32 %v205, %v248
  %v257 = vmul.f32 %v208, %v248
  %v258 = vmul.f32 %v213, %v248
  %v259 = vmul.f32 %v216, %v248
  %v260 = vmul.f32 %v221, %v248
  %v261 = vmul.f32 %v224, %v248
  %v262 = vmul.f32 %v229, %v248
  %v263 = vmul.f32 %v232, %v248
  %v264 = vmul.f32 %v237, %v248
  %v265 = vmul.f32 %v240, %v248
  %v266 = vld [vmem:[%s3] sm:$0x1]
  %v268 = vlaneseq
  %v269 = vshrl.u32 %v268, 7
  %v270 = vsub.s32 0, %v269
  %v271 = vrot.slane %v266, %v270
  %v273 = vadd.f32 %v250, %v271
  %v274 = vadd.f32 %v251, %v271
  %v275 = vadd.f32 %v252, %v271
  %v276 = vadd.f32 %v253, %v271
  %v277 = vadd.f32 %v254, %v271
  %v278 = vadd.f32 %v255, %v271
  %v279 = vadd.f32 %v256, %v271
  %v280 = vadd.f32 %v257, %v271
  %v281 = vadd.f32 %v258, %v271
  %v282 = vadd.f32 %v259, %v271
  %v283 = vadd.f32 %v260, %v271
  %v284 = vadd.f32 %v261, %v271
  %v285 = vadd.f32 %v262, %v271
  %v286 = vadd.f32 %v263, %v271
  %v287 = vadd.f32 %v264, %v271
  %v288 = vadd.f32 %v265, %v271
  %v289 = vmax.f32 %v273, 0.0
  %v290 = vmax.f32 %v274, 0.0
  %v291 = vmax.f32 %v275, 0.0
  %v292 = vmax.f32 %v276, 0.0
  %v293 = vmax.f32 %v277, 0.0
  %v294 = vmax.f32 %v278, 0.0
  %v295 = vmax.f32 %v279, 0.0
  %v296 = vmax.f32 %v280, 0.0
  %v297 = vmax.f32 %v281, 0.0
  %v298 = vmax.f32 %v282, 0.0
  %v299 = vmax.f32 %v283, 0.0
  %v300 = vmax.f32 %v284, 0.0
  %v301 = vmax.f32 %v285, 0.0
  %v302 = vmax.f32 %v286, 0.0
  %v303 = vmax.f32 %v287, 0.0
  %v304 = vmax.f32 %v288, 0.0
  %v305 = vpack.c.bf16 %v290, %v289
  %v306 = vpack.c.bf16 %v292, %v291
  %v307 = vpack.c.bf16 %v294, %v293
  %v308 = vpack.c.bf16 %v296, %v295
  %v309 = vpack.c.bf16 %v298, %v297
  %v310 = vpack.c.bf16 %v300, %v299
  %v311 = vpack.c.bf16 %v302, %v301
  %v312 = vpack.c.bf16 %v304, %v303
  %v321 = vunpack.c.l.b16 %v305
  %v322 = vunpack.c.h.b16 %v305
  %v323 = vunpack.c.l.b16 %v306
  %v324 = vunpack.c.h.b16 %v306
  %v325 = vunpack.c.l.b16 %v307
  %v326 = vunpack.c.h.b16 %v307
  %v327 = vunpack.c.l.b16 %v308
  %v328 = vunpack.c.h.b16 %v308
  %v329 = vunpack.c.l.b16 %v309
  %v330 = vunpack.c.h.b16 %v309
  %v331 = vunpack.c.l.b16 %v310
  %v332 = vunpack.c.h.b16 %v310
  %v333 = vunpack.c.l.b16 %v311
  %v334 = vunpack.c.h.b16 %v311
  %v335 = vunpack.c.l.b16 %v312
  %v336 = vunpack.c.h.b16 %v312
  %v337 = vpack.c.b16 %v321, %v321
  %v338 = vpack.c.b16 %v322, %v322
  %v339 = vpack.c.b16 %v323, %v323
  %v340 = vpack.c.b16 %v324, %v324
  %v341 = vpack.c.b16 %v325, %v325
  %v342 = vpack.c.b16 %v326, %v326
  %v343 = vpack.c.b16 %v327, %v327
  %v344 = vpack.c.b16 %v328, %v328
  %v345 = vpack.c.b16 %v329, %v329
  %v346 = vpack.c.b16 %v330, %v330
  %v347 = vpack.c.b16 %v331, %v331
  %v348 = vpack.c.b16 %v332, %v332
  %v349 = vpack.c.b16 %v333, %v333
  %v350 = vpack.c.b16 %v334, %v334
  %v351 = vpack.c.b16 %v335, %v335
  %v352 = vpack.c.b16 %v336, %v336
  %369 = vst [vmem:[%s4] sm:$0xf] %v337
  %370 = vst [vmem:[%s4 + $0x4] sm:$0xf] %v338
  %371 = vst [vmem:[%s4 + $0x8] sm:$0xf] %v339
  %372 = vst [vmem:[%s4 + $0xc] sm:$0xf] %v340
  %373 = vst [vmem:[%s4 + $0x10] sm:$0xf] %v341
  %374 = vst [vmem:[%s4 + $0x14] sm:$0xf] %v342
  %375 = vst [vmem:[%s4 + $0x18] sm:$0xf] %v343
  %376 = vst [vmem:[%s4 + $0x1c] sm:$0xf] %v344
  %377 = vst [vmem:[%s4 + $0x20] sm:$0xf] %v345
  %378 = vst [vmem:[%s4 + $0x24] sm:$0xf] %v346
  %379 = vst [vmem:[%s4 + $0x28] sm:$0xf] %v347
  %380 = vst [vmem:[%s4 + $0x2c] sm:$0xf] %v348
  %381 = vst [vmem:[%s4 + $0x30] sm:$0xf] %v349
  %382 = vst [vmem:[%s4 + $0x34] sm:$0xf] %v350
  %383 = vst [vmem:[%s4 + $0x38] sm:$0xf] %v351
  %384 = vst [vmem:[%s4 + $0x3c] sm:$0xf] %v352
  // Predicated region
  $region18: #{bottleneck_forward.3} parent=0 // pred_check
    _
  $region19: #{bottleneck_forward.3} parent=0 // pred_check_branch
    %386 = sbr.rel (0) target = $region21
  $region20: #{bottleneck_forward.3} parent=0 // pred_region
    _
  $region21: #{bottleneck_forward.3} parent=0 // pred_fallthru
    _
  // Predicated region
  $region22: #{bottleneck_forward.3} parent=0 // pred_check
    _
  $region23: #{bottleneck_forward.3} parent=0 // pred_check_branch
    %388 = sbr.rel (0) target = $region25
  $region24: #{bottleneck_forward.3} parent=0 // pred_region
    _
  $region25: #{bottleneck_forward.3} parent=0 // pred_fallthru
    _

// kernel: bottleneck_forward.5
$region0: #{bottleneck_forward.5}
  #allocation0 [shape = 'u32[]', space=smem, size = 0x4, offset = 0x4, fixed_abs, tag = 'smem constant byte address 0x4 - core index']
  #allocation1 [shape = 'u32[144,128]{1,0:T(1,128)}', space=vmem, size = 0x12000, scoped, tag = 'internal scratch']
  %s0 = inlined_call_operand.vmem [shape: bf16[32,128], index: 0, kind: input, shape index: {}]
  %s1 = inlined_call_operand.vmem [shape: bf16[128,128], index: 1, kind: input, shape index: {}]
  %s2 = inlined_call_operand.vmem [shape: f32[1,128], index: 2, kind: input, shape index: {}]
  %s3 = inlined_call_operand.vmem [shape: f32[1,128], index: 3, kind: input, shape index: {}]
  %s4 = inlined_call_operand.vmem [shape: bf16[32,128], index: 4, kind: input, shape index: {}]
  %s5 = inlined_call_operand.vmem [shape: bf16[128,128], index: 5, kind: input, shape index: {}]
  %s6 = inlined_call_operand.vmem [shape: f32[1,128], index: 6, kind: input, shape index: {}]
  %s7 = inlined_call_operand.vmem [shape: f32[1,128], index: 7, kind: input, shape index: {}]
  %s8 = inlined_call_operand.vmem [shape: bf16[32,128], index: 8, kind: output, shape index: {}]
  %s9 = sld [smem:[#allocation0]]
  $region42: #{bottleneck_forward.5} parent=0
    _
  %s11 = ssub.s32 1, %s9
  %s12 = scalar_select 0, %s11, %s9
  // Predicated region
  $region2: #{bottleneck_forward.5} parent=0 // pred_check
    _
  $region3: #{bottleneck_forward.5} parent=0 // pred_check_branch
    %14 = sbr.rel (0) target = $region5
  $region4: #{bottleneck_forward.5} parent=0 // pred_region
    _
  $region5: #{bottleneck_forward.5} parent=0 // pred_fallthru
    _
  // Predicated region
  $region6: #{bottleneck_forward.5} parent=0 // pred_check
    _
  $region7: #{bottleneck_forward.5} parent=0 // pred_check_branch
    %16 = sbr.rel (0) target = $region9
  $region8: #{bottleneck_forward.5} parent=0 // pred_region
    _
  $region9: #{bottleneck_forward.5} parent=0 // pred_fallthru
    _
  // Predicated region
  $region10: #{bottleneck_forward.5} parent=0 // pred_check
    _
  $region11: #{bottleneck_forward.5} parent=0 // pred_check_branch
    %18 = sbr.rel (0) target = $region13
  $region12: #{bottleneck_forward.5} parent=0 // pred_region
    _
  $region13: #{bottleneck_forward.5} parent=0 // pred_fallthru
    _
  // Predicated region
  $region14: #{bottleneck_forward.5} parent=0 // pred_check
    _
  $region15: #{bottleneck_forward.5} parent=0 // pred_check_branch
    %20 = sbr.rel (0) target = $region17
  $region16: #{bottleneck_forward.5} parent=0 // pred_region
    _
  $region17: #{bottleneck_forward.5} parent=0 // pred_fallthru
    _
  // Predicated region
  $region18: #{bottleneck_forward.5} parent=0 // pred_check
    _
  $region19: #{bottleneck_forward.5} parent=0 // pred_check_branch
    %22 = sbr.rel (0) target = $region21
  $region20: #{bottleneck_forward.5} parent=0 // pred_region
    _
  $region21: #{bottleneck_forward.5} parent=0 // pred_fallthru
    _
  // Predicated region
  $region22: #{bottleneck_forward.5} parent=0 // pred_check
    _
  $region23: #{bottleneck_forward.5} parent=0 // pred_check_branch
    %24 = sbr.rel (0) target = $region25
  $region24: #{bottleneck_forward.5} parent=0 // pred_region
    _
  $region25: #{bottleneck_forward.5} parent=0 // pred_fallthru
    _
  // Predicated region
  $region26: #{bottleneck_forward.5} parent=0 // pred_check
    _
  $region27: #{bottleneck_forward.5} parent=0 // pred_check_branch
    %26 = sbr.rel (0) target = $region29
  $region28: #{bottleneck_forward.5} parent=0 // pred_region
    _
  $region29: #{bottleneck_forward.5} parent=0 // pred_fallthru
    _
  // Predicated region
  $region30: #{bottleneck_forward.5} parent=0 // pred_check
    _
  $region31: #{bottleneck_forward.5} parent=0 // pred_check_branch
    %28 = sbr.rel (0) target = $region33
  $region32: #{bottleneck_forward.5} parent=0 // pred_region
    _
  $region33: #{bottleneck_forward.5} parent=0 // pred_fallthru
    _
  %v30 = vld [vmem:[%s0] sm:$0xf]
  %v31 = vld [vmem:[%s0 + $0x4] sm:$0xf]
  %v32 = vld [vmem:[%s0 + $0x8] sm:$0xf]
  %v33 = vld [vmem:[%s0 + $0xc] sm:$0xf]
  %v34 = vld [vmem:[%s1] sm:$0xf]
  %v35 = vld [vmem:[%s1 + $0x4] sm:$0xf]
  %v36 = vld [vmem:[%s1 + $0x8] sm:$0xf]
  %v37 = vld [vmem:[%s1 + $0xc] sm:$0xf]
  %v38 = vld [vmem:[%s1 + $0x10] sm:$0xf]
  %v39 = vld [vmem:[%s1 + $0x14] sm:$0xf]
  %v40 = vld [vmem:[%s1 + $0x18] sm:$0xf]
  %v41 = vld [vmem:[%s1 + $0x1c] sm:$0xf]
  %v42 = vld [vmem:[%s1 + $0x20] sm:$0xf]
  %v43 = vld [vmem:[%s1 + $0x24] sm:$0xf]
  %v44 = vld [vmem:[%s1 + $0x28] sm:$0xf]
  %v45 = vld [vmem:[%s1 + $0x2c] sm:$0xf]
  %v46 = vld [vmem:[%s1 + $0x30] sm:$0xf]
  %v47 = vld [vmem:[%s1 + $0x34] sm:$0xf]
  %v48 = vld [vmem:[%s1 + $0x38] sm:$0xf]
  %v49 = vld [vmem:[%s1 + $0x3c] sm:$0xf]
  %v54 = vunpack.c.l.b16 %v30
  %v55 = vunpack.c.l.b16 %v31
  %v56 = vunpack.c.l.b16 %v32
  %v57 = vunpack.c.l.b16 %v33
  %v58 = vpack.c.b16 %v55, %v54
  %v59 = vpack.c.b16 %v57, %v56
  %v78 = vunpack.c.l.b16 %v34
  %v79 = vunpack.c.l.b16 %v35
  %v80 = vunpack.c.l.b16 %v36
  %v81 = vunpack.c.l.b16 %v37
  %v82 = vunpack.c.l.b16 %v38
  %v83 = vunpack.c.l.b16 %v39
  %v84 = vunpack.c.l.b16 %v40
  %v85 = vunpack.c.l.b16 %v41
  %v86 = vunpack.c.l.b16 %v42
  %v87 = vunpack.c.l.b16 %v43
  %v88 = vunpack.c.l.b16 %v44
  %v89 = vunpack.c.l.b16 %v45
  %v90 = vunpack.c.l.b16 %v46
  %v91 = vunpack.c.l.b16 %v47
  %v92 = vunpack.c.l.b16 %v48
  %v93 = vunpack.c.l.b16 %v49
  %v94 = vpack.c.b16 %v79, %v78
  %v95 = vpack.c.b16 %v81, %v80
  %v96 = vpack.c.b16 %v83, %v82
  %v97 = vpack.c.b16 %v85, %v84
  %v98 = vpack.c.b16 %v87, %v86
  %v99 = vpack.c.b16 %v89, %v88
  %v100 = vpack.c.b16 %v91, %v90
  %v101 = vpack.c.b16 %v93, %v92
  %110 = vmatprep.subr.bf16.mxu0 0
  %111 = vmatpush1.bf16.msra.mxu0 %v101
  %112 = vmatprep.subr.bf16.mxu0 0
  %113 = vmatpush1.bf16.msra.mxu0 %v100
  %114 = vmatprep.subr.bf16.mxu0 0
  %115 = vmatpush1.bf16.msra.mxu0 %v99
  %116 = vmatprep.subr.bf16.mxu0 0
  %117 = vmatpush1.bf16.msra.mxu0 %v98
  %118 = vmatprep.subr.bf16.mxu0 0
  %119 = vmatpush1.bf16.msra.mxu0 %v97
  %120 = vmatprep.subr.bf16.mxu0 0
  %121 = vmatpush1.bf16.msra.mxu0 %v96
  %122 = vmatprep.subr.bf16.mxu0 0
  %123 = vmatpush1.bf16.msra.mxu0 %v95
  %124 = vmatprep.subr.bf16.mxu0 0
  %125 = vmatpush1.bf16.msra.mxu0 %v94
  %126 = vmatprep.subr.bf16.mxu0 0
  %127 = vmatpush2.bf16.msra.mxu0 0
  %128 = vmatprep.subr.bf16.mxu0 0
  %129 = vmatpush2.bf16.msra.mxu0 0
  %130 = vmatprep.subr.bf16.mxu0 0
  %131 = vmatpush2.bf16.msra.mxu0 0
  %132 = vmatprep.subr.bf16.mxu0 0
  %133 = vmatpush2.bf16.msra.mxu0 0
  %134 = vmatprep.subr.bf16.mxu0 0
  %135 = vmatpush2.bf16.msra.mxu0 0
  %136 = vmatprep.subr.bf16.mxu0 0
  %137 = vmatpush2.bf16.msra.mxu0 0
  %138 = vmatprep.subr.bf16.mxu0 0
  %139 = vmatpush2.bf16.msra.mxu0 0
  %140 = vmatprep.subr.bf16.mxu0 0
  %141 = vmatpush2.bf16.msra.mxu0 0
  %142 = vmatprep.mubr.bf16.mxu0 0
  %143 = vmatmul.mubr.bf16.gmra.mxu0 %v58
  %v144 = vpop.f32.mrf.mxu0
  %v145 = vadd.f32 0.0, %v144
  %v146 = vpop.f32.mrf.mxu0
  %v147 = vpop.f32.mrf.mxu0
  %v148 = vadd.f32 0.0, %v147
  %v149 = vpop.f32.mrf.mxu0
  %150 = vmatprep.mubr.bf16.mxu0 0
  %151 = vmatmul.mubr.bf16.gmra.mxu0 %v59
  %v152 = vpop.f32.mrf.mxu0
  %v153 = vadd.f32 0.0, %v152
  %v154 = vpop.f32.mrf.mxu0
  %v155 = vpop.f32.mrf.mxu0
  %v156 = vadd.f32 0.0, %v155
  %v157 = vpop.f32.mrf.mxu0
  %158 = vdwg.mxu0
  %v159 = vld [vmem:[%s2] sm:$0x1]
  %v161 = vlaneseq
  %v162 = vshrl.u32 %v161, 7
  %v163 = vsub.s32 0, %v162
  %v164 = vrot.slane %v159, %v163
  %v166 = vmul.f32 %v145, %v164
  %v167 = vmul.f32 %v148, %v164
  %v168 = vmul.f32 %v153, %v164
  %v169 = vmul.f32 %v156, %v164
  %v170 = vld [vmem:[%s3] sm:$0x1]
  %v172 = vlaneseq
  %v173 = vshrl.u32 %v172, 7
  %v174 = vsub.s32 0, %v173
  %v175 = vrot.slane %v170, %v174
  %v177 = vadd.f32 %v166, %v175
  %v178 = vadd.f32 %v167, %v175
  %v179 = vadd.f32 %v168, %v175
  %v180 = vadd.f32 %v169, %v175
  %v181 = vld [vmem:[%s4] sm:$0xf]
  %v182 = vld [vmem:[%s4 + $0x4] sm:$0xf]
  %v183 = vld [vmem:[%s4 + $0x8] sm:$0xf]
  %v184 = vld [vmem:[%s4 + $0xc] sm:$0xf]
  %v185 = vld [vmem:[%s5] sm:$0xf]
  %v186 = vld [vmem:[%s5 + $0x4] sm:$0xf]
  %v187 = vld [vmem:[%s5 + $0x8] sm:$0xf]
  %v188 = vld [vmem:[%s5 + $0xc] sm:$0xf]
  %v189 = vld [vmem:[%s5 + $0x10] sm:$0xf]
  %v190 = vld [vmem:[%s5 + $0x14] sm:$0xf]
  %v191 = vld [vmem:[%s5 + $0x18] sm:$0xf]
  %v192 = vld [vmem:[%s5 + $0x1c] sm:$0xf]
  %v193 = vld [vmem:[%s5 + $0x20] sm:$0xf]
  %v194 = vld [vmem:[%s5 + $0x24] sm:$0xf]
  %v195 = vld [vmem:[%s5 + $0x28] sm:$0xf]
  %v196 = vld [vmem:[%s5 + $0x2c] sm:$0xf]
  %v197 = vld [vmem:[%s5 + $0x30] sm:$0xf]
  %v198 = vld [vmem:[%s5 + $0x34] sm:$0xf]
  %v199 = vld [vmem:[%s5 + $0x38] sm:$0xf]
  %v200 = vld [vmem:[%s5 + $0x3c] sm:$0xf]
  %v205 = vunpack.c.l.b16 %v181
  %v206 = vunpack.c.l.b16 %v182
  %v207 = vunpack.c.l.b16 %v183
  %v208 = vunpack.c.l.b16 %v184
  %v209 = vpack.c.b16 %v206, %v205
  %v210 = vpack.c.b16 %v208, %v207
  %v229 = vunpack.c.l.b16 %v185
  %v230 = vunpack.c.l.b16 %v186
  %v231 = vunpack.c.l.b16 %v187
  %v232 = vunpack.c.l.b16 %v188
  %v233 = vunpack.c.l.b16 %v189
  %v234 = vunpack.c.l.b16 %v190
  %v235 = vunpack.c.l.b16 %v191
  %v236 = vunpack.c.l.b16 %v192
  %v237 = vunpack.c.l.b16 %v193
  %v238 = vunpack.c.l.b16 %v194
  %v239 = vunpack.c.l.b16 %v195
  %v240 = vunpack.c.l.b16 %v196
  %v241 = vunpack.c.l.b16 %v197
  %v242 = vunpack.c.l.b16 %v198
  %v243 = vunpack.c.l.b16 %v199
  %v244 = vunpack.c.l.b16 %v200
  %v245 = vpack.c.b16 %v230, %v229
  %v246 = vpack.c.b16 %v232, %v231
  %v247 = vpack.c.b16 %v234, %v233
  %v248 = vpack.c.b16 %v236, %v235
  %v249 = vpack.c.b16 %v238, %v237
  %v250 = vpack.c.b16 %v240, %v239
  %v251 = vpack.c.b16 %v242, %v241
  %v252 = vpack.c.b16 %v244, %v243
  %261 = vmatprep.subr.bf16.mxu0 0
  %262 = vmatpush1.bf16.msra.mxu0 %v252
  %263 = vmatprep.subr.bf16.mxu0 0
  %264 = vmatpush1.bf16.msra.mxu0 %v251
  %265 = vmatprep.subr.bf16.mxu0 0
  %266 = vmatpush1.bf16.msra.mxu0 %v250
  %267 = vmatprep.subr.bf16.mxu0 0
  %268 = vmatpush1.bf16.msra.mxu0 %v249
  %269 = vmatprep.subr.bf16.mxu0 0
  %270 = vmatpush1.bf16.msra.mxu0 %v248
  %271 = vmatprep.subr.bf16.mxu0 0
  %272 = vmatpush1.bf16.msra.mxu0 %v247
  %273 = vmatprep.subr.bf16.mxu0 0
  %274 = vmatpush1.bf16.msra.mxu0 %v246
  %275 = vmatprep.subr.bf16.mxu0 0
  %276 = vmatpush1.bf16.msra.mxu0 %v245
  %277 = vmatprep.subr.bf16.mxu0 0
  %278 = vmatpush2.bf16.msra.mxu0 0
  %279 = vmatprep.subr.bf16.mxu0 0
  %280 = vmatpush2.bf16.msra.mxu0 0
  %281 = vmatprep.subr.bf16.mxu0 0
  %282 = vmatpush2.bf16.msra.mxu0 0
  %283 = vmatprep.subr.bf16.mxu0 0
  %284 = vmatpush2.bf16.msra.mxu0 0
  %285 = vmatprep.subr.bf16.mxu0 0
  %286 = vmatpush2.bf16.msra.mxu0 0
  %287 = vmatprep.subr.bf16.mxu0 0
  %288 = vmatpush2.bf16.msra.mxu0 0
  %289 = vmatprep.subr.bf16.mxu0 0
  %290 = vmatpush2.bf16.msra.mxu0 0
  %291 = vmatprep.subr.bf16.mxu0 0
  %292 = vmatpush2.bf16.msra.mxu0 0
  %293 = vmatprep.mubr.bf16.mxu0 0
  %294 = vmatmul.mubr.bf16.gmra.mxu0 %v209
  %v295 = vpop.f32.mrf.mxu0
  %v296 = vadd.f32 0.0, %v295
  %v297 = vpop.f32.mrf.mxu0
  %v298 = vpop.f32.mrf.mxu0
  %v299 = vadd.f32 0.0, %v298
  %v300 = vpop.f32.mrf.mxu0
  %301 = vmatprep.mubr.bf16.mxu0 0
  %302 = vmatmul.mubr.bf16.gmra.mxu0 %v210
  %v303 = vpop.f32.mrf.mxu0
  %v304 = vadd.f32 0.0, %v303
  %v305 = vpop.f32.mrf.mxu0
  %v306 = vpop.f32.mrf.mxu0
  %v307 = vadd.f32 0.0, %v306
  %v308 = vpop.f32.mrf.mxu0
  %309 = vdwg.mxu0
  %v310 = vld [vmem:[%s6] sm:$0x1]
  %v312 = vlaneseq
  %v313 = vshrl.u32 %v312, 7
  %v314 = vsub.s32 0, %v313
  %v315 = vrot.slane %v310, %v314
  %v317 = vmul.f32 %v296, %v315
  %v318 = vmul.f32 %v299, %v315
  %v319 = vmul.f32 %v304, %v315
  %v320 = vmul.f32 %v307, %v315
  %v321 = vld [vmem:[%s7] sm:$0x1]
  %v323 = vlaneseq
  %v324 = vshrl.u32 %v323, 7
  %v325 = vsub.s32 0, %v324
  %v326 = vrot.slane %v321, %v325
  %v328 = vadd.f32 %v317, %v326
  %v329 = vadd.f32 %v318, %v326
  %v330 = vadd.f32 %v319, %v326
  %v331 = vadd.f32 %v320, %v326
  %v332 = vadd.f32 %v177, %v328
  %v333 = vadd.f32 %v178, %v329
  %v334 = vadd.f32 %v179, %v330
  %v335 = vadd.f32 %v180, %v331
  %v336 = vmax.f32 %v332, 0.0
  %v337 = vmax.f32 %v333, 0.0
  %v338 = vmax.f32 %v334, 0.0
  %v339 = vmax.f32 %v335, 0.0
  %v340 = vpack.c.bf16 %v337, %v336
  %v341 = vpack.c.bf16 %v339, %v338
  %v344 = vunpack.c.l.b16 %v340
  %v345 = vunpack.c.h.b16 %v340
  %v346 = vunpack.c.l.b16 %v341
  %v347 = vunpack.c.h.b16 %v341
  %v348 = vpack.c.b16 %v344, %v344
  %v349 = vpack.c.b16 %v345, %v345
  %v350 = vpack.c.b16 %v346, %v346
  %v351 = vpack.c.b16 %v347, %v347
  %356 = vst [vmem:[%s8] sm:$0xf] %v348
  %357 = vst [vmem:[%s8 + $0x4] sm:$0xf] %v349
  %358 = vst [vmem:[%s8 + $0x8] sm:$0xf] %v350
  %359 = vst [vmem:[%s8 + $0xc] sm:$0xf] %v351
  // Predicated region
  $region34: #{bottleneck_forward.5} parent=0 // pred_check
    _
  $region35: #{bottleneck_forward.5} parent=0 // pred_check_branch
    %361 = sbr.rel (0) target = $region37
  $region36: #{bottleneck_forward.5} parent=0 // pred_region
    _
  $region37: #{bottleneck_forward.5} parent=0 // pred_fallthru
    _
  // Predicated region
  $region38: #{bottleneck_forward.5} parent=0 // pred_check
    _
  $region39: #{bottleneck_forward.5} parent=0 // pred_check_branch
    %363 = sbr.rel (0) target = $region41
  $region40: #{bottleneck_forward.5} parent=0 // pred_region
    _
  $region41: #{bottleneck_forward.5} parent=0 // pred_fallthru
    _

// kernel: bottleneck_forward.4
$region0: #{bottleneck_forward.4}
  #allocation0 [shape = 'u32[]', space=smem, size = 0x4, offset = 0x4, fixed_abs, tag = 'smem constant byte address 0x4 - core index']
  #allocation1 [shape = 'u32[144,128]{1,0:T(1,128)}', space=vmem, size = 0x12000, scoped, tag = 'internal scratch']
  #allocation2 [shape = 'f32[64,128]{1,0:T(8,128)}', space=vmem, size = 0x8000, scoped, tag = 'scratch operand']
  %s0 = inlined_call_operand.vmem [shape: bf16[1280,128], index: 0, kind: input, shape index: {}]
  %s1 = inlined_call_operand.vmem [shape: bf16[9,128,128], index: 1, kind: input, shape index: {}]
  %s2 = inlined_call_operand.vmem [shape: f32[1,128], index: 2, kind: input, shape index: {}]
  %s3 = inlined_call_operand.vmem [shape: f32[1,128], index: 3, kind: input, shape index: {}]
  %s4 = inlined_call_operand.vmem [shape: bf16[8,4,128], index: 4, kind: output, shape index: {}]
  %s5 = sld [smem:[#allocation0]]
  $region49: #{bottleneck_forward.4} parent=0
    _
  %s7 = ssub.s32 1, %s5
  %s8 = scalar_select 0, %s7, %s5
  loop: start=0, step=1, limit=4
  $region2: #{bottleneck_forward.4} parent=0 // loop_pre_header
    _
  $region3: #{bottleneck_forward.4} parent=0 // loop_header
    %s10 = sphi 0, %s14
    %p11 = scmp.ge.s32.totalorder %s10, 4
    %s17 = sphi 0, %s29
    %s18 = sphi 0, %s25
    %s19 = sphi 0, %s17
    %s20 = sphi 0, %s18
    %s21 = sphi 0, %s19
    %s22 = sphi 0, %s20
    %s32 = sphi 0, %s34
    %s35 = sphi 0, %s32
    %s36 = sphi 0, %s35
    %s52 = sphi 0, %s36
    %s56 = sphi 0, %s56
    %s58 = sphi 0, %s56
    %s59 = sphi 0, %s58
    %s73 = sphi 0, %s59
    %s77 = sphi 0, %s77
    %s79 = sphi 0, %s77
    %s80 = sphi 0, %s79
    %s94 = sphi 0, %s80
    %s98 = sphi 0, %s98
    %s100 = sphi 0, %s98
    %s101 = sphi 0, %s100
    %s115 = sphi 0, %s101
    %s123 = sphi 0, %s125
    %s126 = sphi 0, %s123
    %s127 = sphi 0, %s126
    %s143 = sphi 0, %s127
  $region4: #{bottleneck_forward.4} parent=0 // loop_header_branch
    %13 = sbr.rel (%p11) target = $region8
  $region5: #{bottleneck_forward.4} parent=0 // loop_body
    %s15 = ssub.s32 %s10, 1
    %s16 = ssub.s32 %s10, 2
    %s23 = sadd.s32 1, %s18
    %p24 = scmp.ge.s32.totalorder %s23, 1
    %s25 = scalar_select %p24, 0, %s23
    %s26 = sadd.s32 1, %s17
    %s27 = scalar_select %p24, %s26, %s17
    %p28 = scmp.ge.s32.totalorder %s27, 2
    %s29 = scalar_select %p28, 0, %s27
    %s30 = ssub.s32 %s17, %s29
    %p31 = scmp.eq.s32.totalorder %s30, 0
    %s33 = sadd.s32 %s32, 1
    %s34 = scalar_select %p31, %s32, %s33
    %p37 = pneg %p31
    %p38 = scmp.eq.s32.totalorder %s10, 1
    %p39 = por %p37, %p38
    %p40 = scmp.ne.s32.totalorder %s32, %s35
    %p41 = scmp.eq.s32.totalorder %s10, 0
    %p42 = por %p40, %p41
    %p43 = scmp.ne.s32.totalorder %s32, %s35
    %p44 = scmp.eq.s32.totalorder %s15, 1
    %p45 = por %p43, %p44
    %p46 = scmp.ne.s32.totalorder %s35, %s36
    %p47 = scmp.eq.s32.totalorder %s15, 0
    %p48 = por %p46, %p47
    %p49 = scmp.ne.s32.totalorder %s35, %s36
    %p50 = scmp.eq.s32.totalorder %s16, 1
    %p51 = por %p49, %p50
    %p53 = scmp.ne.s32.totalorder %s36, %s52
    %p54 = scmp.eq.s32.totalorder %s16, 0
    %p55 = por %p53, %p54
    %s57 = sadd.s32 %s56, 1
    %p60 = scmp.eq.s32.totalorder %s10, 1
    %p61 = scmp.ne.s32.totalorder %s56, %s58
    %p62 = scmp.eq.s32.totalorder %s10, 0
    %p63 = por %p61, %p62
    %p64 = scmp.ne.s32.totalorder %s56, %s58
    %p65 = scmp.eq.s32.totalorder %s15, 1
    %p66 = por %p64, %p65
    %p67 = scmp.ne.s32.totalorder %s58, %s59
    %p68 = scmp.eq.s32.totalorder %s15, 0
    %p69 = por %p67, %p68
    %p70 = scmp.ne.s32.totalorder %s58, %s59
    %p71 = scmp.eq.s32.totalorder %s16, 1
    %p72 = por %p70, %p71
    %p74 = scmp.ne.s32.totalorder %s59, %s73
    %p75 = scmp.eq.s32.totalorder %s16, 0
    %p76 = por %p74, %p75
    %s78 = sadd.s32 %s77, 1
    %p81 = scmp.eq.s32.totalorder %s10, 1
    %p82 = scmp.ne.s32.totalorder %s77, %s79
    %p83 = scmp.eq.s32.totalorder %s10, 0
    %p84 = por %p82, %p83
    %p85 = scmp.ne.s32.totalorder %s77, %s79
    %p86 = scmp.eq.s32.totalorder %s15, 1
    %p87 = por %p85, %p86
    %p88 = scmp.ne.s32.totalorder %s79, %s80
    %p89 = scmp.eq.s32.totalorder %s15, 0
    %p90 = por %p88, %p89
    %p91 = scmp.ne.s32.totalorder %s79, %s80
    %p92 = scmp.eq.s32.totalorder %s16, 1
    %p93 = por %p91, %p92
    %p95 = scmp.ne.s32.totalorder %s80, %s94
    %p96 = scmp.eq.s32.totalorder %s16, 0
    %p97 = por %p95, %p96
    %s99 = sadd.s32 %s98, 1
    %p102 = scmp.eq.s32.totalorder %s10, 1
    %p103 = scmp.ne.s32.totalorder %s98, %s100
    %p104 = scmp.eq.s32.totalorder %s10, 0
    %p105 = por %p103, %p104
    %p106 = scmp.ne.s32.totalorder %s98, %s100
    %p107 = scmp.eq.s32.totalorder %s15, 1
    %p108 = por %p106, %p107
    %p109 = scmp.ne.s32.totalorder %s100, %s101
    %p110 = scmp.eq.s32.totalorder %s15, 0
    %p111 = por %p109, %p110
    %p112 = scmp.ne.s32.totalorder %s100, %s101
    %p113 = scmp.eq.s32.totalorder %s16, 1
    %p114 = por %p112, %p113
    %p116 = scmp.ne.s32.totalorder %s101, %s115
    %p117 = scmp.eq.s32.totalorder %s16, 0
    %p118 = por %p116, %p117
    %s119 = sadd.s32 %s17, %s18
    %s120 = sadd.s32 %s29, %s25
    %s121 = ssub.s32 %s119, %s120
    %p122 = scmp.eq.s32.totalorder %s121, 0
    %s124 = sadd.s32 %s123, 1
    %s125 = scalar_select %p122, %s123, %s124
    %p128 = pneg %p122
    %p129 = scmp.eq.s32.totalorder %s10, 1
    %p130 = por %p128, %p129
    %p131 = scmp.ne.s32.totalorder %s123, %s126
    %p132 = scmp.eq.s32.totalorder %s10, 0
    %p133 = por %p131, %p132
    %p134 = scmp.ne.s32.totalorder %s123, %s126
    %p135 = scmp.eq.s32.totalorder %s15, 1
    %p136 = por %p134, %p135
    %p137 = scmp.ne.s32.totalorder %s126, %s127
    %p138 = scmp.eq.s32.totalorder %s15, 0
    %p139 = por %p137, %p138
    %p140 = scmp.ne.s32.totalorder %s126, %s127
    %p141 = scmp.eq.s32.totalorder %s16, 1
    %p142 = por %p140, %p141
    %p144 = scmp.ne.s32.totalorder %s127, %s143
    %p145 = scmp.eq.s32.totalorder %s16, 0
    %p146 = por %p144, %p145
    %p147 = scmp.le.s32.totalorder 1, %s10
    %p148 = scmp.lt.s32.totalorder %s10, 3
    %p149 = pnand %p147, %p148
    %p150 = pneg %p149
    // Predicated region
    $region9: #{bottleneck_forward.4} parent=5 // pred_check
      _
    $region10: #{bottleneck_forward.4} parent=5 // pred_check_branch
      %152 = sbr.rel (%p149) target = $region12
    $region11: #{bottleneck_forward.4} parent=5 // pred_region
      %s153 = ssub.s32 %s10, 1
      // Predicated region
      $region13: #{bottleneck_forward.4} parent=11 // pred_check
        %p154 = pneg %p69
      $region14: #{bottleneck_forward.4} parent=11 // pred_check_branch
        %156 = sbr.rel (%p154) target = $region16
      $region15: #{bottleneck_forward.4} parent=11 // pred_region
        _
      $region16: #{bottleneck_forward.4} parent=11 // pred_fallthru
        _
      // Predicated region
      $region17: #{bottleneck_forward.4} parent=11 // pred_check
        %p157 = pneg %p90
      $region18: #{bottleneck_forward.4} parent=11 // pred_check_branch
        %159 = sbr.rel (%p157) target = $region20
      $region19: #{bottleneck_forward.4} parent=11 // pred_region
        _
      $region20: #{bottleneck_forward.4} parent=11 // pred_fallthru
        _
      // Predicated region
      $region21: #{bottleneck_forward.4} parent=11 // pred_check
        %p160 = pneg %p111
      $region22: #{bottleneck_forward.4} parent=11 // pred_check_branch
        %162 = sbr.rel (%p160) target = $region24
      $region23: #{bottleneck_forward.4} parent=11 // pred_region
        _
      $region24: #{bottleneck_forward.4} parent=11 // pred_fallthru
        _
    $region12: #{bottleneck_forward.4} parent=5 // pred_fallthru
      _
    %p163 = scmp.lt.s32.totalorder %s10, 2
    // Predicated region
    $region25: #{bottleneck_forward.4} parent=5 // pred_check
      %p164 = pneg %p163
    $region26: #{bottleneck_forward.4} parent=5 // pred_check_branch
      %166 = sbr.rel (%p164) target = $region28
    $region27: #{bottleneck_forward.4} parent=5 // pred_region
      // Predicated region
      $region29: #{bottleneck_forward.4} parent=27 // pred_check
        %p167 = pneg %p42
      $region30: #{bottleneck_forward.4} parent=27 // pred_check_branch
        %169 = sbr.rel (%p167) target = $region32
      $region31: #{bottleneck_forward.4} parent=27 // pred_region
        %s170 = smul.u32 80, %s17
        %p171 = scmp.lt.s32.totalorder %s170, 159
        %s172 = scalar_select %p171, %s170, 159
        %s173 = smul.addr %s172, 4
        %s174 = scalar_lea.vmem %s0, %s173
        %s175 = smul.u32 80, %s17
      $region32: #{bottleneck_forward.4} parent=27 // pred_fallthru
        _
    $region28: #{bottleneck_forward.4} parent=5 // pred_fallthru
      _
    %p176 = scmp.le.s32.totalorder 1, %s10
    %p177 = scmp.lt.s32.totalorder %s10, 3
    %p178 = pnand %p176, %p177
    %p179 = pneg %p178
    // Predicated region
    $region33: #{bottleneck_forward.4} parent=5 // pred_check
      _
    $region34: #{bottleneck_forward.4} parent=5 // pred_check_branch
      %181 = sbr.rel (%p178) target = $region36
    $region35: #{bottleneck_forward.4} parent=5 // pred_region
      %s182 = ssub.s32 %s10, 1
      %s183 = smul.u32 80, %s19
      %p184 = scmp.lt.s32.totalorder %s183, 159
      %s185 = scalar_select %p184, %s183, 159
      %s186 = smul.addr %s185, 4
      %s187 = scalar_lea.vmem %s0, %s186
      %p188 = pneg %p48
      %p189 = pneg %p45
      %p190 = pneg %p69
      %p191 = pneg %p66
      %p192 = pneg %p90
      %p193 = pneg %p87
      %p194 = pneg %p111
      %p195 = pneg %p108
      %p196 = pneg %p139
      %p197 = pneg %p136
      %s198 = sadd.s32 %s19, %s20
      %s199 = smul.u32 4, %s198
      %p200 = scmp.lt.s32.totalorder %s199, 7
      %s201 = scalar_select %p200, %s199, 7
      %s202 = smul.addr %s201, 2
      %s203 = scalar_lea.vmem %s4, %s202
      %s204 = smul.u32 80, %s19
      %p205 = scmp.lt.s32.totalorder %s204, 159
      %s206 = scalar_select %p205, %s204, 159
      %s207 = smul.addr %s206, 4
      %s208 = scalar_lea.vmem %s0, %s207
      %s209 = smul.u32 80, %s19
      %s210 = sadd.s32 %s19, %s20
      %s211 = smul.u32 4, %s210
      %p212 = scmp.lt.s32.totalorder %s211, 7
      %s213 = scalar_select %p212, %s211, 7
      %s214 = smul.addr %s213, 2
      %s215 = scalar_lea.vmem %s4, %s214
      %s216 = sadd.s32 %s19, %s20
      %s217 = smul.u32 4, %s216
      %s219 = smul.u32 %s20, 4
      %s220 = smul.u32 %s20, 64
      %s221 = sshra.s32 %s220, 3
      %s222 = sand.u32 %s220, 7
      %s223 = smul.addr %s221, 4
      %s224 = scalar_lea.vmem %s208, %s223
      %v225 = vld [vmem:[%s224] sm:$0xf]
      %v226 = vld [vmem:[%s224 + $0x4] sm:$0xf]
      %v227 = vld [vmem:[%s224 + $0x8] sm:$0xf]
      %v228 = vld [vmem:[%s224 + $0xc] sm:$0xf]
      %v229 = vld [vmem:[%s224 + $0x10] sm:$0xf]
      %v230 = vld [vmem:[%s224 + $0x14] sm:$0xf]
      %v231 = vld [vmem:[%s224 + $0x18] sm:$0xf]
      %v232 = vld [vmem:[%s224 + $0x1c] sm:$0xf]
      %v233 = vld [vmem:[%s1] sm:$0xf]
      %v234 = vld [vmem:[%s1 + $0x4] sm:$0xf]
      %v235 = vld [vmem:[%s1 + $0x8] sm:$0xf]
      %v236 = vld [vmem:[%s1 + $0xc] sm:$0xf]
      %v237 = vld [vmem:[%s1 + $0x10] sm:$0xf]
      %v238 = vld [vmem:[%s1 + $0x14] sm:$0xf]
      %v239 = vld [vmem:[%s1 + $0x18] sm:$0xf]
      %v240 = vld [vmem:[%s1 + $0x1c] sm:$0xf]
      %v241 = vld [vmem:[%s1 + $0x20] sm:$0xf]
      %v242 = vld [vmem:[%s1 + $0x24] sm:$0xf]
      %v243 = vld [vmem:[%s1 + $0x28] sm:$0xf]
      %v244 = vld [vmem:[%s1 + $0x2c] sm:$0xf]
      %v245 = vld [vmem:[%s1 + $0x30] sm:$0xf]
      %v246 = vld [vmem:[%s1 + $0x34] sm:$0xf]
      %v247 = vld [vmem:[%s1 + $0x38] sm:$0xf]
      %v248 = vld [vmem:[%s1 + $0x3c] sm:$0xf]
      %v257 = vunpack.c.l.b16 %v225
      %v258 = vunpack.c.l.b16 %v226
      %v259 = vunpack.c.l.b16 %v227
      %v260 = vunpack.c.l.b16 %v228
      %v261 = vunpack.c.l.b16 %v229
      %v262 = vunpack.c.l.b16 %v230
      %v263 = vunpack.c.l.b16 %v231
      %v264 = vunpack.c.l.b16 %v232
      %v265 = vpack.c.b16 %v258, %v257
      %v266 = vpack.c.b16 %v260, %v259
      %v267 = vpack.c.b16 %v262, %v261
      %v268 = vpack.c.b16 %v264, %v263
      %v289 = vunpack.c.l.b16 %v233
      %v290 = vunpack.c.l.b16 %v234
      %v291 = vunpack.c.l.b16 %v235
      %v292 = vunpack.c.l.b16 %v236
      %v293 = vunpack.c.l.b16 %v237
      %v294 = vunpack.c.l.b16 %v238
      %v295 = vunpack.c.l.b16 %v239
      %v296 = vunpack.c.l.b16 %v240
      %v297 = vunpack.c.l.b16 %v241
      %v298 = vunpack.c.l.b16 %v242
      %v299 = vunpack.c.l.b16 %v243
      %v300 = vunpack.c.l.b16 %v244
      %v301 = vunpack.c.l.b16 %v245
      %v302 = vunpack.c.l.b16 %v246
      %v303 = vunpack.c.l.b16 %v247
      %v304 = vunpack.c.l.b16 %v248
      %v305 = vpack.c.b16 %v290, %v289
      %v306 = vpack.c.b16 %v292, %v291
      %v307 = vpack.c.b16 %v294, %v293
      %v308 = vpack.c.b16 %v296, %v295
      %v309 = vpack.c.b16 %v298, %v297
      %v310 = vpack.c.b16 %v300, %v299
      %v311 = vpack.c.b16 %v302, %v301
      %v312 = vpack.c.b16 %v304, %v303
      %321 = vmatprep.subr.bf16.mxu0 0
      %322 = vmatpush1.bf16.msra.mxu0 %v312
      %323 = vmatprep.subr.bf16.mxu0 0
      %324 = vmatpush1.bf16.msra.mxu0 %v311
      %325 = vmatprep.subr.bf16.mxu0 0
      %326 = vmatpush1.bf16.msra.mxu0 %v310
      %327 = vmatprep.subr.bf16.mxu0 0
      %328 = vmatpush1.bf16.msra.mxu0 %v309
      %329 = vmatprep.subr.bf16.mxu0 0
      %330 = vmatpush1.bf16.msra.mxu0 %v308
      %331 = vmatprep.subr.bf16.mxu0 0
      %332 = vmatpush1.bf16.msra.mxu0 %v307
      %333 = vmatprep.subr.bf16.mxu0 0
      %334 = vmatpush1.bf16.msra.mxu0 %v306
      %335 = vmatprep.subr.bf16.mxu0 0
      %336 = vmatpush1.bf16.msra.mxu0 %v305
      %337 = vmatprep.subr.bf16.mxu0 0
      %338 = vmatpush2.bf16.msra.mxu0 0
      %339 = vmatprep.subr.bf16.mxu0 0
      %340 = vmatpush2.bf16.msra.mxu0 0
      %341 = vmatprep.subr.bf16.mxu0 0
      %342 = vmatpush2.bf16.msra.mxu0 0
      %343 = vmatprep.subr.bf16.mxu0 0
      %344 = vmatpush2.bf16.msra.mxu0 0
      %345 = vmatprep.subr.bf16.mxu0 0
      %346 = vmatpush2.bf16.msra.mxu0 0
      %347 = vmatprep.subr.bf16.mxu0 0
      %348 = vmatpush2.bf16.msra.mxu0 0
      %349 = vmatprep.subr.bf16.mxu0 0
      %350 = vmatpush2.bf16.msra.mxu0 0
      %351 = vmatprep.subr.bf16.mxu0 0
      %352 = vmatpush2.bf16.msra.mxu0 0
      %353 = vmatprep.mubr.bf16.mxu0 0
      %354 = vmatmul.mubr.bf16.gmra.mxu0 %v265
      %v355 = vpop.f32.mrf.mxu0
      %v356 = vadd.f32 0.0, %v355
      %v357 = vpop.f32.mrf.mxu0
      %v358 = vpop.f32.mrf.mxu0
      %v359 = vadd.f32 0.0, %v358
      %v360 = vpop.f32.mrf.mxu0
      %361 = vmatprep.mubr.bf16.mxu0 0
      %362 = vmatmul.mubr.bf16.gmra.mxu0 %v266
      %v363 = vpop.f32.mrf.mxu0
      %v364 = vadd.f32 0.0, %v363
      %v365 = vpop.f32.mrf.mxu0
      %v366 = vpop.f32.mrf.mxu0
      %v367 = vadd.f32 0.0, %v366
      %v368 = vpop.f32.mrf.mxu0
      %369 = vmatprep.mubr.bf16.mxu0 0
      %370 = vmatmul.mubr.bf16.gmra.mxu0 %v267
      %v371 = vpop.f32.mrf.mxu0
      %v372 = vadd.f32 0.0, %v371
      %v373 = vpop.f32.mrf.mxu0
      %v374 = vpop.f32.mrf.mxu0
      %v375 = vadd.f32 0.0, %v374
      %v376 = vpop.f32.mrf.mxu0
      %377 = vmatprep.mubr.bf16.mxu0 0
      %378 = vmatmul.mubr.bf16.gmra.mxu0 %v268
      %v379 = vpop.f32.mrf.mxu0
      %v380 = vadd.f32 0.0, %v379
      %v381 = vpop.f32.mrf.mxu0
      %v382 = vpop.f32.mrf.mxu0
      %v383 = vadd.f32 0.0, %v382
      %v384 = vpop.f32.mrf.mxu0
      %385 = vdwg.mxu0
      %386 = vst [vmem:[#allocation2] sm:$0xff] %v356
      %387 = vst [vmem:[#allocation2 + $0x8] sm:$0xff] %v359
      %388 = vst [vmem:[#allocation2 + $0x10] sm:$0xff] %v364
      %389 = vst [vmem:[#allocation2 + $0x18] sm:$0xff] %v367
      %390 = vst [vmem:[#allocation2 + $0x20] sm:$0xff] %v372
      %391 = vst [vmem:[#allocation2 + $0x28] sm:$0xff] %v375
      %392 = vst [vmem:[#allocation2 + $0x30] sm:$0xff] %v380
      %393 = vst [vmem:[#allocation2 + $0x38] sm:$0xff] %v383
      %s394 = sadd.s32 %s219, 5
      %s395 = smul.u32 %s394, 16
      %s396 = sshra.s32 %s395, 3
      %s397 = sand.u32 %s395, 7
      %s398 = smul.addr %s396, 4
      %s399 = scalar_lea.vmem %s208, %s398
      %v400 = vld [vmem:[%s399] sm:$0xf]
      %v401 = vld [vmem:[%s399 + $0x4] sm:$0xf]
      %v402 = vld [vmem:[%s399 + $0x8] sm:$0xf]
      %v403 = vld [vmem:[%s399 + $0xc] sm:$0xf]
      %v404 = vld [vmem:[%s399 + $0x10] sm:$0xf]
      %v405 = vld [vmem:[%s399 + $0x14] sm:$0xf]
      %v406 = vld [vmem:[%s399 + $0x18] sm:$0xf]
      %v407 = vld [vmem:[%s399 + $0x1c] sm:$0xf]
      %s408 = scalar_lea.vmem %s1, 64
      %v409 = vld [vmem:[%s408] sm:$0xf]
      %v410 = vld [vmem:[%s408 + $0x4] sm:$0xf]
      %v411 = vld [vmem:[%s408 + $0x8] sm:$0xf]
      %v412 = vld [vmem:[%s408 + $0xc] sm:$0xf]
      %v413 = vld [vmem:[%s408 + $0x10] sm:$0xf]
      %v414 = vld [vmem:[%s408 + $0x14] sm:$0xf]
      %v415 = vld [vmem:[%s408 + $0x18] sm:$0xf]
      %v416 = vld [vmem:[%s408 + $0x1c] sm:$0xf]
      %v417 = vld [vmem:[%s408 + $0x20] sm:$0xf]
      %v418 = vld [vmem:[%s408 + $0x24] sm:$0xf]
      %v419 = vld [vmem:[%s408 + $0x28] sm:$0xf]
      %v420 = vld [vmem:[%s408 + $0x2c] sm:$0xf]
      %v421 = vld [vmem:[%s408 + $0x30] sm:$0xf]
      %v422 = vld [vmem:[%s408 + $0x34] sm:$0xf]
      %v423 = vld [vmem:[%s408 + $0x38] sm:$0xf]
      %v424 = vld [vmem:[%s408 + $0x3c] sm:$0xf]
      %v433 = vunpack.c.l.b16 %v400
      %v434 = vunpack.c.l.b16 %v401
      %v435 = vunpack.c.l.b16 %v402
      %v436 = vunpack.c.l.b16 %v403
      %v437 = vunpack.c.l.b16 %v404
      %v438 = vunpack.c.l.b16 %v405
      %v439 = vunpack.c.l.b16 %v406
      %v440 = vunpack.c.l.b16 %v407
      %v441 = vpack.c.b16 %v434, %v433
      %v442 = vpack.c.b16 %v436, %v435
      %v443 = vpack.c.b16 %v438, %v437
      %v444 = vpack.c.b16 %v440, %v439
      %v465 = vunpack.c.l.b16 %v409
      %v466 = vunpack.c.l.b16 %v410
      %v467 = vunpack.c.l.b16 %v411
      %v468 = vunpack.c.l.b16 %v412
      %v469 = vunpack.c.l.b16 %v413
      %v470 = vunpack.c.l.b16 %v414
      %v471 = vunpack.c.l.b16 %v415
      %v472 = vunpack.c.l.b16 %v416
      %v473 = vunpack.c.l.b16 %v417
      %v474 = vunpack.c.l.b16 %v418
      %v475 = vunpack.c.l.b16 %v419
      %v476 = vunpack.c.l.b16 %v420
      %v477 = vunpack.c.l.b16 %v421
      %v478 = vunpack.c.l.b16 %v422
      %v479 = vunpack.c.l.b16 %v423
      %v480 = vunpack.c.l.b16 %v424
      %v481 = vpack.c.b16 %v466, %v465
      %v482 = vpack.c.b16 %v468, %v467
      %v483 = vpack.c.b16 %v470, %v469
      %v484 = vpack.c.b16 %v472, %v471
      %v485 = vpack.c.b16 %v474, %v473
      %v486 = vpack.c.b16 %v476, %v475
      %v487 = vpack.c.b16 %v478, %v477
      %v488 = vpack.c.b16 %v480, %v479
      %497 = vmatprep.subr.bf16.mxu0 0
      %498 = vmatpush1.bf16.msra.mxu0 %v488
      %499 = vmatprep.subr.bf16.mxu0 0
      %500 = vmatpush1.bf16.msra.mxu0 %v487
      %501 = vmatprep.subr.bf16.mxu0 0
      %502 = vmatpush1.bf16.msra.mxu0 %v486
      %503 = vmatprep.subr.bf16.mxu0 0
      %504 = vmatpush1.bf16.msra.mxu0 %v485
      %505 = vmatprep.subr.bf16.mxu0 0
      %506 = vmatpush1.bf16.msra.mxu0 %v484
      %507 = vmatprep.subr.bf16.mxu0 0
      %508 = vmatpush1.bf16.msra.mxu0 %v483
      %509 = vmatprep.subr.bf16.mxu0 0
      %510 = vmatpush1.bf16.msra.mxu0 %v482
      %511 = vmatprep.subr.bf16.mxu0 0
      %512 = vmatpush1.bf16.msra.mxu0 %v481
      %513 = vmatprep.subr.bf16.mxu0 0
      %514 = vmatpush2.bf16.msra.mxu0 0
      %515 = vmatprep.subr.bf16.mxu0 0
      %516 = vmatpush2.bf16.msra.mxu0 0
      %517 = vmatprep.subr.bf16.mxu0 0
      %518 = vmatpush2.bf16.msra.mxu0 0
      %519 = vmatprep.subr.bf16.mxu0 0
      %520 = vmatpush2.bf16.msra.mxu0 0
      %521 = vmatprep.subr.bf16.mxu0 0
      %522 = vmatpush2.bf16.msra.mxu0 0
      %523 = vmatprep.subr.bf16.mxu0 0
      %524 = vmatpush2.bf16.msra.mxu0 0
      %525 = vmatprep.subr.bf16.mxu0 0
      %526 = vmatpush2.bf16.msra.mxu0 0
      %527 = vmatprep.subr.bf16.mxu0 0
      %528 = vmatpush2.bf16.msra.mxu0 0
      %529 = vmatprep.mubr.bf16.mxu0 0
      %530 = vmatmul.mubr.bf16.gmra.mxu0 %v441
      %v531 = vpop.f32.mrf.mxu0
      %v532 = vadd.f32 0.0, %v531
      %v533 = vpop.f32.mrf.mxu0
      %v534 = vpop.f32.mrf.mxu0
      %v535 = vadd.f32 0.0, %v534
      %v536 = vpop.f32.mrf.mxu0
      %537 = vmatprep.mubr.bf16.mxu0 0
      %538 = vmatmul.mubr.bf16.gmra.mxu0 %v442
      %v539 = vpop.f32.mrf.mxu0
      %v540 = vadd.f32 0.0, %v539
      %v541 = vpop.f32.mrf.mxu0
      %v542 = vpop.f32.mrf.mxu0
      %v543 = vadd.f32 0.0, %v542
      %v544 = vpop.f32.mrf.mxu0
      %545 = vmatprep.mubr.bf16.mxu0 0
      %546 = vmatmul.mubr.bf16.gmra.mxu0 %v443
      %v547 = vpop.f32.mrf.mxu0
      %v548 = vadd.f32 0.0, %v547
      %v549 = vpop.f32.mrf.mxu0
      %v550 = vpop.f32.mrf.mxu0
      %v551 = vadd.f32 0.0, %v550
      %v552 = vpop.f32.mrf.mxu0
      %553 = vmatprep.mubr.bf16.mxu0 0
      %554 = vmatmul.mubr.bf16.gmra.mxu0 %v444
      %v555 = vpop.f32.mrf.mxu0
      %v556 = vadd.f32 0.0, %v555
      %v557 = vpop.f32.mrf.mxu0
      %v558 = vpop.f32.mrf.mxu0
      %v559 = vadd.f32 0.0, %v558
      %v560 = vpop.f32.mrf.mxu0
      %561 = vdwg.mxu0
      %v562 = vld [vmem:[#allocation2] sm:$0xff]
      %v563 = vld [vmem:[#allocation2 + $0x8] sm:$0xff]
      %v564 = vld [vmem:[#allocation2 + $0x10] sm:$0xff]
      %v565 = vld [vmem:[#allocation2 + $0x18] sm:$0xff]
      %v566 = vld [vmem:[#allocation2 + $0x20] sm:$0xff]
      %v567 = vld [vmem:[#allocation2 + $0x28] sm:$0xff]
      %v568 = vld [vmem:[#allocation2 + $0x30] sm:$0xff]
      %v569 = vld [vmem:[#allocation2 + $0x38] sm:$0xff]
      %v570 = vadd.f32 %v562, %v532
      %v571 = vadd.f32 %v563, %v535
      %v572 = vadd.f32 %v564, %v540
      %v573 = vadd.f32 %v565, %v543
      %v574 = vadd.f32 %v566, %v548
      %v575 = vadd.f32 %v567, %v551
      %v576 = vadd.f32 %v568, %v556
      %v577 = vadd.f32 %v569, %v559
      %578 = vst [vmem:[#allocation2] sm:$0xff] %v570
      %579 = vst [vmem:[#allocation2 + $0x8] sm:$0xff] %v571
      %580 = vst [vmem:[#allocation2 + $0x10] sm:$0xff] %v572
      %581 = vst [vmem:[#allocation2 + $0x18] sm:$0xff] %v573
      %582 = vst [vmem:[#allocation2 + $0x20] sm:$0xff] %v574
      %583 = vst [vmem:[#allocation2 + $0x28] sm:$0xff] %v575
      %584 = vst [vmem:[#allocation2 + $0x30] sm:$0xff] %v576
      %585 = vst [vmem:[#allocation2 + $0x38] sm:$0xff] %v577
      %s586 = sadd.s32 %s219, 20
      %s587 = smul.u32 %s586, 16
      %s588 = sshra.s32 %s587, 3
      %s589 = sand.u32 %s587, 7
      %s590 = smul.addr %s588, 4
      %s591 = scalar_lea.vmem %s208, %s590
      %v592 = vld [vmem:[%s591] sm:$0xf]
      %v593 = vld [vmem:[%s591 + $0x4] sm:$0xf]
      %v594 = vld [vmem:[%s591 + $0x8] sm:$0xf]
      %v595 = vld [vmem:[%s591 + $0xc] sm:$0xf]
      %v596 = vld [vmem:[%s591 + $0x10] sm:$0xf]
      %v597 = vld [vmem:[%s591 + $0x14] sm:$0xf]
      %v598 = vld [vmem:[%s591 + $0x18] sm:$0xf]
      %v599 = vld [vmem:[%s591 + $0x1c] sm:$0xf]
      %s600 = scalar_lea.vmem %s1, 128
      %v601 = vld [vmem:[%s600] sm:$0xf]
      %v602 = vld [vmem:[%s600 + $0x4] sm:$0xf]
      %v603 = vld [vmem:[%s600 + $0x8] sm:$0xf]
      %v604 = vld [vmem:[%s600 + $0xc] sm:$0xf]
      %v605 = vld [vmem:[%s600 + $0x10] sm:$0xf]
      %v606 = vld [vmem:[%s600 + $0x14] sm:$0xf]
      %v607 = vld [vmem:[%s600 + $0x18] sm:$0xf]
      %v608 = vld [vmem:[%s600 + $0x1c] sm:$0xf]
      %v609 = vld [vmem:[%s600 + $0x20] sm:$0xf]
      %v610 = vld [vmem:[%s600 + $0x24] sm:$0xf]
      %v611 = vld [vmem:[%s600 + $0x28] sm:$0xf]
      %v612 = vld [vmem:[%s600 + $0x2c] sm:$0xf]
      %v613 = vld [vmem:[%s600 + $0x30] sm:$0xf]
      %v614 = vld [vmem:[%s600 + $0x34] sm:$0xf]
      %v615 = vld [vmem:[%s600 + $0x38] sm:$0xf]
      %v616 = vld [vmem:[%s600 + $0x3c] sm:$0xf]
      %v625 = vunpack.c.l.b16 %v592
      %v626 = vunpack.c.l.b16 %v593
      %v627 = vunpack.c.l.b16 %v594
      %v628 = vunpack.c.l.b16 %v595
      %v629 = vunpack.c.l.b16 %v596
      %v630 = vunpack.c.l.b16 %v597
      %v631 = vunpack.c.l.b16 %v598
      %v632 = vunpack.c.l.b16 %v599
      %v633 = vpack.c.b16 %v626, %v625
      %v634 = vpack.c.b16 %v628, %v627
      %v635 = vpack.c.b16 %v630, %v629
      %v636 = vpack.c.b16 %v632, %v631
      %v657 = vunpack.c.l.b16 %v601
      %v658 = vunpack.c.l.b16 %v602
      %v659 = vunpack.c.l.b16 %v603
      %v660 = vunpack.c.l.b16 %v604
      %v661 = vunpack.c.l.b16 %v605
      %v662 = vunpack.c.l.b16 %v606
      %v663 = vunpack.c.l.b16 %v607
      %v664 = vunpack.c.l.b16 %v608
      %v665 = vunpack.c.l.b16 %v609
      %v666 = vunpack.c.l.b16 %v610
      %v667 = vunpack.c.l.b16 %v611
      %v668 = vunpack.c.l.b16 %v612
      %v669 = vunpack.c.l.b16 %v613
      %v670 = vunpack.c.l.b16 %v614
      %v671 = vunpack.c.l.b16 %v615
      %v672 = vunpack.c.l.b16 %v616
      %v673 = vpack.c.b16 %v658, %v657
      %v674 = vpack.c.b16 %v660, %v659
      %v675 = vpack.c.b16 %v662, %v661
      %v676 = vpack.c.b16 %v664, %v663
      %v677 = vpack.c.b16 %v666, %v665
      %v678 = vpack.c.b16 %v668, %v667
      %v679 = vpack.c.b16 %v670, %v669
      %v680 = vpack.c.b16 %v672, %v671
      %689 = vmatprep.subr.bf16.mxu0 0
      %690 = vmatpush1.bf16.msra.mxu0 %v680
      %691 = vmatprep.subr.bf16.mxu0 0
      %692 = vmatpush1.bf16.msra.mxu0 %v679
      %693 = vmatprep.subr.bf16.mxu0 0
      %694 = vmatpush1.bf16.msra.mxu0 %v678
      %695 = vmatprep.subr.bf16.mxu0 0
      %696 = vmatpush1.bf16.msra.mxu0 %v677
      %697 = vmatprep.subr.bf16.mxu0 0
      %698 = vmatpush1.bf16.msra.mxu0 %v676
      %699 = vmatprep.subr.bf16.mxu0 0
      %700 = vmatpush1.bf16.msra.mxu0 %v675
      %701 = vmatprep.subr.bf16.mxu0 0
      %702 = vmatpush1.bf16.msra.mxu0 %v674
      %703 = vmatprep.subr.bf16.mxu0 0
      %704 = vmatpush1.bf16.msra.mxu0 %v673
      %705 = vmatprep.subr.bf16.mxu0 0
      %706 = vmatpush2.bf16.msra.mxu0 0
      %707 = vmatprep.subr.bf16.mxu0 0
      %708 = vmatpush2.bf16.msra.mxu0 0
      %709 = vmatprep.subr.bf16.mxu0 0
      %710 = vmatpush2.bf16.msra.mxu0 0
      %711 = vmatprep.subr.bf16.mxu0 0
      %712 = vmatpush2.bf16.msra.mxu0 0
      %713 = vmatprep.subr.bf16.mxu0 0
      %714 = vmatpush2.bf16.msra.mxu0 0
      %715 = vmatprep.subr.bf16.mxu0 0
      %716 = vmatpush2.bf16.msra.mxu0 0
      %717 = vmatprep.subr.bf16.mxu0 0
      %718 = vmatpush2.bf16.msra.mxu0 0
      %719 = vmatprep.subr.bf16.mxu0 0
      %720 = vmatpush2.bf16.msra.mxu0 0
      %721 = vmatprep.mubr.bf16.mxu0 0
      %722 = vmatmul.mubr.bf16.gmra.mxu0 %v633
      %v723 = vpop.f32.mrf.mxu0
      %v724 = vadd.f32 0.0, %v723
      %v725 = vpop.f32.mrf.mxu0
      %v726 = vpop.f32.mrf.mxu0
      %v727 = vadd.f32 0.0, %v726
      %v728 = vpop.f32.mrf.mxu0
      %729 = vmatprep.mubr.bf16.mxu0 0
      %730 = vmatmul.mubr.bf16.gmra.mxu0 %v634
      %v731 = vpop.f32.mrf.mxu0
      %v732 = vadd.f32 0.0, %v731
      %v733 = vpop.f32.mrf.mxu0
      %v734 = vpop.f32.mrf.mxu0
      %v735 = vadd.f32 0.0, %v734
      %v736 = vpop.f32.mrf.mxu0
      %737 = vmatprep.mubr.bf16.mxu0 0
      %738 = vmatmul.mubr.bf16.gmra.mxu0 %v635
      %v739 = vpop.f32.mrf.mxu0
      %v740 = vadd.f32 0.0, %v739
      %v741 = vpop.f32.mrf.mxu0
      %v742 = vpop.f32.mrf.mxu0
      %v743 = vadd.f32 0.0, %v742
      %v744 = vpop.f32.mrf.mxu0
      %745 = vmatprep.mubr.bf16.mxu0 0
      %746 = vmatmul.mubr.bf16.gmra.mxu0 %v636
      %v747 = vpop.f32.mrf.mxu0
      %v748 = vadd.f32 0.0, %v747
      %v749 = vpop.f32.mrf.mxu0
      %v750 = vpop.f32.mrf.mxu0
      %v751 = vadd.f32 0.0, %v750
      %v752 = vpop.f32.mrf.mxu0
      %753 = vdwg.mxu0
      %v754 = vld [vmem:[#allocation2] sm:$0xff]
      %v755 = vld [vmem:[#allocation2 + $0x8] sm:$0xff]
      %v756 = vld [vmem:[#allocation2 + $0x10] sm:$0xff]
      %v757 = vld [vmem:[#allocation2 + $0x18] sm:$0xff]
      %v758 = vld [vmem:[#allocation2 + $0x20] sm:$0xff]
      %v759 = vld [vmem:[#allocation2 + $0x28] sm:$0xff]
      %v760 = vld [vmem:[#allocation2 + $0x30] sm:$0xff]
      %v761 = vld [vmem:[#allocation2 + $0x38] sm:$0xff]
      %v762 = vadd.f32 %v754, %v724
      %v763 = vadd.f32 %v755, %v727
      %v764 = vadd.f32 %v756, %v732
      %v765 = vadd.f32 %v757, %v735
      %v766 = vadd.f32 %v758, %v740
      %v767 = vadd.f32 %v759, %v743
      %v768 = vadd.f32 %v760, %v748
      %v769 = vadd.f32 %v761, %v751
      %770 = vst [vmem:[#allocation2] sm:$0xff] %v762
      %771 = vst [vmem:[#allocation2 + $0x8] sm:$0xff] %v763
      %772 = vst [vmem:[#allocation2 + $0x10] sm:$0xff] %v764
      %773 = vst [vmem:[#allocation2 + $0x18] sm:$0xff] %v765
      %774 = vst [vmem:[#allocation2 + $0x20] sm:$0xff] %v766
      %775 = vst [vmem:[#allocation2 + $0x28] sm:$0xff] %v767
      %776 = vst [vmem:[#allocation2 + $0x30] sm:$0xff] %v768
      %777 = vst [vmem:[#allocation2 + $0x38] sm:$0xff] %v769
      %s778 = sadd.s32 %s219, 10
      %s779 = smul.u32 %s778, 16
      %s780 = sshra.s32 %s779, 3
      %s781 = sand.u32 %s779, 7
      %s782 = smul.addr %s780, 4
      %s783 = scalar_lea.vmem %s208, %s782
      %v784 = vld [vmem:[%s783] sm:$0xf]
      %v785 = vld [vmem:[%s783 + $0x4] sm:$0xf]
      %v786 = vld [vmem:[%s783 + $0x8] sm:$0xf]
      %v787 = vld [vmem:[%s783 + $0xc] sm:$0xf]
      %v788 = vld [vmem:[%s783 + $0x10] sm:$0xf]
      %v789 = vld [vmem:[%s783 + $0x14] sm:$0xf]
      %v790 = vld [vmem:[%s783 + $0x18] sm:$0xf]
      %v791 = vld [vmem:[%s783 + $0x1c] sm:$0xf]
      %s792 = scalar_lea.vmem %s1, 192
      %v793 = vld [vmem:[%s792] sm:$0xf]
      %v794 = vld [vmem:[%s792 + $0x4] sm:$0xf]
      %v795 = vld [vmem:[%s792 + $0x8] sm:$0xf]
      %v796 = vld [vmem:[%s792 + $0xc] sm:$0xf]
      %v797 = vld [vmem:[%s792 + $0x10] sm:$0xf]
      %v798 = vld [vmem:[%s792 + $0x14] sm:$0xf]
      %v799 = vld [vmem:[%s792 + $0x18] sm:$0xf]
      %v800 = vld [vmem:[%s792 + $0x1c] sm:$0xf]
      %v801 = vld [vmem:[%s792 + $0x20] sm:$0xf]
      %v802 = vld [vmem:[%s792 + $0x24] sm:$0xf]
      %v803 = vld [vmem:[%s792 + $0x28] sm:$0xf]
      %v804 = vld [vmem:[%s792 + $0x2c] sm:$0xf]
      %v805 = vld [vmem:[%s792 + $0x30] sm:$0xf]
      %v806 = vld [vmem:[%s792 + $0x34] sm:$0xf]
      %v807 = vld [vmem:[%s792 + $0x38] sm:$0xf]
      %v808 = vld [vmem:[%s792 + $0x3c] sm:$0xf]
      %v817 = vunpack.c.l.b16 %v784
      %v818 = vunpack.c.l.b16 %v785
      %v819 = vunpack.c.l.b16 %v786
      %v820 = vunpack.c.l.b16 %v787
      %v821 = vunpack.c.l.b16 %v788
      %v822 = vunpack.c.l.b16 %v789
      %v823 = vunpack.c.l.b16 %v790
      %v824 = vunpack.c.l.b16 %v791
      %v825 = vpack.c.b16 %v818, %v817
      %v826 = vpack.c.b16 %v820, %v819
      %v827 = vpack.c.b16 %v822, %v821
      %v828 = vpack.c.b16 %v824, %v823
      %v849 = vunpack.c.l.b16 %v793
      %v850 = vunpack.c.l.b16 %v794
      %v851 = vunpack.c.l.b16 %v795
      %v852 = vunpack.c.l.b16 %v796
      %v853 = vunpack.c.l.b16 %v797
      %v854 = vunpack.c.l.b16 %v798
      %v855 = vunpack.c.l.b16 %v799
      %v856 = vunpack.c.l.b16 %v800
      %v857 = vunpack.c.l.b16 %v801
      %v858 = vunpack.c.l.b16 %v802
      %v859 = vunpack.c.l.b16 %v803
      %v860 = vunpack.c.l.b16 %v804
      %v861 = vunpack.c.l.b16 %v805
      %v862 = vunpack.c.l.b16 %v806
      %v863 = vunpack.c.l.b16 %v807
      %v864 = vunpack.c.l.b16 %v808
      %v865 = vpack.c.b16 %v850, %v849
      %v866 = vpack.c.b16 %v852, %v851
      %v867 = vpack.c.b16 %v854, %v853
      %v868 = vpack.c.b16 %v856, %v855
      %v869 = vpack.c.b16 %v858, %v857
      %v870 = vpack.c.b16 %v860, %v859
      %v871 = vpack.c.b16 %v862, %v861
      %v872 = vpack.c.b16 %v864, %v863
      %881 = vmatprep.subr.bf16.mxu0 0
      %882 = vmatpush1.bf16.msra.mxu0 %v872
      %883 = vmatprep.subr.bf16.mxu0 0
      %884 = vmatpush1.bf16.msra.mxu0 %v871
      %885 = vmatprep.subr.bf16.mxu0 0
      %886 = vmatpush1.bf16.msra.mxu0 %v870
      %887 = vmatprep.subr.bf16.mxu0 0
      %888 = vmatpush1.bf16.msra.mxu0 %v869
      %889 = vmatprep.subr.bf16.mxu0 0
      %890 = vmatpush1.bf16.msra.mxu0 %v868
      %891 = vmatprep.subr.bf16.mxu0 0
      %892 = vmatpush1.bf16.msra.mxu0 %v867
      %893 = vmatprep.subr.bf16.mxu0 0
      %894 = vmatpush1.bf16.msra.mxu0 %v866
      %895 = vmatprep.subr.bf16.mxu0 0
      %896 = vmatpush1.bf16.msra.mxu0 %v865
      %897 = vmatprep.subr.bf16.mxu0 0
      %898 = vmatpush2.bf16.msra.mxu0 0
      %899 = vmatprep.subr.bf16.mxu0 0
      %900 = vmatpush2.bf16.msra.mxu0 0
      %901 = vmatprep.subr.bf16.mxu0 0
      %902 = vmatpush2.bf16.msra.mxu0 0
      %903 = vmatprep.subr.bf16.mxu0 0
      %904 = vmatpush2.bf16.msra.mxu0 0
      %905 = vmatprep.subr.bf16.mxu0 0
      %906 = vmatpush2.bf16.msra.mxu0 0
      %907 = vmatprep.subr.bf16.mxu0 0
      %908 = vmatpush2.bf16.msra.mxu0 0
      %909 = vmatprep.subr.bf16.mxu0 0
      %910 = vmatpush2.bf16.msra.mxu0 0
      %911 = vmatprep.subr.bf16.mxu0 0
      %912 = vmatpush2.bf16.msra.mxu0 0
      %913 = vmatprep.mubr.bf16.mxu0 0
      %914 = vmatmul.mubr.bf16.gmra.mxu0 %v825
      %v915 = vpop.f32.mrf.mxu0
      %v916 = vadd.f32 0.0, %v915
      %v917 = vpop.f32.mrf.mxu0
      %v918 = vpop.f32.mrf.mxu0
      %v919 = vadd.f32 0.0, %v918
      %v920 = vpop.f32.mrf.mxu0
      %921 = vmatprep.mubr.bf16.mxu0 0
      %922 = vmatmul.mubr.bf16.gmra.mxu0 %v826
      %v923 = vpop.f32.mrf.mxu0
      %v924 = vadd.f32 0.0, %v923
      %v925 = vpop.f32.mrf.mxu0
      %v926 = vpop.f32.mrf.mxu0
      %v927 = vadd.f32 0.0, %v926
      %v928 = vpop.f32.mrf.mxu0
      %929 = vmatprep.mubr.bf16.mxu0 0
      %930 = vmatmul.mubr.bf16.gmra.mxu0 %v827
      %v931 = vpop.f32.mrf.mxu0
      %v932 = vadd.f32 0.0, %v931
      %v933 = vpop.f32.mrf.mxu0
      %v934 = vpop.f32.mrf.mxu0
      %v935 = vadd.f32 0.0, %v934
      %v936 = vpop.f32.mrf.mxu0
      %937 = vmatprep.mubr.bf16.mxu0 0
      %938 = vmatmul.mubr.bf16.gmra.mxu0 %v828
      %v939 = vpop.f32.mrf.mxu0
      %v940 = vadd.f32 0.0, %v939
      %v941 = vpop.f32.mrf.mxu0
      %v942 = vpop.f32.mrf.mxu0
      %v943 = vadd.f32 0.0, %v942
      %v944 = vpop.f32.mrf.mxu0
      %945 = vdwg.mxu0
      %v946 = vld [vmem:[#allocation2] sm:$0xff]
      %v947 = vld [vmem:[#allocation2 + $0x8] sm:$0xff]
      %v948 = vld [vmem:[#allocation2 + $0x10] sm:$0xff]
      %v949 = vld [vmem:[#allocation2 + $0x18] sm:$0xff]
      %v950 = vld [vmem:[#allocation2 + $0x20] sm:$0xff]
      %v951 = vld [vmem:[#allocation2 + $0x28] sm:$0xff]
      %v952 = vld [vmem:[#allocation2 + $0x30] sm:$0xff]
      %v953 = vld [vmem:[#allocation2 + $0x38] sm:$0xff]
      %v954 = vadd.f32 %v946, %v916
      %v955 = vadd.f32 %v947, %v919
      %v956 = vadd.f32 %v948, %v924
      %v957 = vadd.f32 %v949, %v927
      %v958 = vadd.f32 %v950, %v932
      %v959 = vadd.f32 %v951, %v935
      %v960 = vadd.f32 %v952, %v940
      %v961 = vadd.f32 %v953, %v943
      %962 = vst [vmem:[#allocation2] sm:$0xff] %v954
      %963 = vst [vmem:[#allocation2 + $0x8] sm:$0xff] %v955
      %964 = vst [vmem:[#allocation2 + $0x10] sm:$0xff] %v956
      %965 = vst [vmem:[#allocation2 + $0x18] sm:$0xff] %v957
      %966 = vst [vmem:[#allocation2 + $0x20] sm:$0xff] %v958
      %967 = vst [vmem:[#allocation2 + $0x28] sm:$0xff] %v959
      %968 = vst [vmem:[#allocation2 + $0x30] sm:$0xff] %v960
      %969 = vst [vmem:[#allocation2 + $0x38] sm:$0xff] %v961
      %s970 = sadd.s32 %s219, 15
      %s971 = smul.u32 %s970, 16
      %s972 = sshra.s32 %s971, 3
      %s973 = sand.u32 %s971, 7
      %s974 = smul.addr %s972, 4
      %s975 = scalar_lea.vmem %s208, %s974
      %v976 = vld [vmem:[%s975] sm:$0xf]
      %v977 = vld [vmem:[%s975 + $0x4] sm:$0xf]
      %v978 = vld [vmem:[%s975 + $0x8] sm:$0xf]
      %v979 = vld [vmem:[%s975 + $0xc] sm:$0xf]
      %v980 = vld [vmem:[%s975 + $0x10] sm:$0xf]
      %v981 = vld [vmem:[%s975 + $0x14] sm:$0xf]
      %v982 = vld [vmem:[%s975 + $0x18] sm:$0xf]
      %v983 = vld [vmem:[%s975 + $0x1c] sm:$0xf]
      %s984 = scalar_lea.vmem %s1, 256
      %v985 = vld [vmem:[%s984] sm:$0xf]
      %v986 = vld [vmem:[%s984 + $0x4] sm:$0xf]
      %v987 = vld [vmem:[%s984 + $0x8] sm:$0xf]
      %v988 = vld [vmem:[%s984 + $0xc] sm:$0xf]
      %v989 = vld [vmem:[%s984 + $0x10] sm:$0xf]
      %v990 = vld [vmem:[%s984 + $0x14] sm:$0xf]
      %v991 = vld [vmem:[%s984 + $0x18] sm:$0xf]
      %v992 = vld [vmem:[%s984 + $0x1c] sm:$0xf]
      %v993 = vld [vmem:[%s984 + $0x20] sm:$0xf]
      %v994 = vld [vmem:[%s984 + $0x24] sm:$0xf]
      %v995 = vld [vmem:[%s984 + $0x28] sm:$0xf]
      %v996 = vld [vmem:[%s984 + $0x2c] sm:$0xf]
      %v997 = vld [vmem:[%s984 + $0x30] sm:$0xf]
      %v998 = vld [vmem:[%s984 + $0x34] sm:$0xf]
      %v999 = vld [vmem:[%s984 + $0x38] sm:$0xf]
      %v1000 = vld [vmem:[%s984 + $0x3c] sm:$0xf]
      %v1009 = vunpack.c.l.b16 %v976
      %v1010 = vunpack.c.l.b16 %v977
      %v1011 = vunpack.c.l.b16 %v978
      %v1012 = vunpack.c.l.b16 %v979
      %v1013 = vunpack.c.l.b16 %v980
      %v1014 = vunpack.c.l.b16 %v981
      %v1015 = vunpack.c.l.b16 %v982
      %v1016 = vunpack.c.l.b16 %v983
      %v1017 = vpack.c.b16 %v1010, %v1009
      %v1018 = vpack.c.b16 %v1012, %v1011
      %v1019 = vpack.c.b16 %v1014, %v1013
      %v1020 = vpack.c.b16 %v1016, %v1015
      %v1041 = vunpack.c.l.b16 %v985
      %v1042 = vunpack.c.l.b16 %v986
      %v1043 = vunpack.c.l.b16 %v987
      %v1044 = vunpack.c.l.b16 %v988
      %v1045 = vunpack.c.l.b16 %v989
      %v1046 = vunpack.c.l.b16 %v990
      %v1047 = vunpack.c.l.b16 %v991
      %v1048 = vunpack.c.l.b16 %v992
      %v1049 = vunpack.c.l.b16 %v993
      %v1050 = vunpack.c.l.b16 %v994
      %v1051 = vunpack.c.l.b16 %v995
      %v1052 = vunpack.c.l.b16 %v996
      %v1053 = vunpack.c.l.b16 %v997
      %v1054 = vunpack.c.l.b16 %v998
      %v1055 = vunpack.c.l.b16 %v999
      %v1056 = vunpack.c.l.b16 %v1000
      %v1057 = vpack.c.b16 %v1042, %v1041
      %v1058 = vpack.c.b16 %v1044, %v1043
      %v1059 = vpack.c.b16 %v1046, %v1045
      %v1060 = vpack.c.b16 %v1048, %v1047
      %v1061 = vpack.c.b16 %v1050, %v1049
      %v1062 = vpack.c.b16 %v1052, %v1051
      %v1063 = vpack.c.b16 %v1054, %v1053
      %v1064 = vpack.c.b16 %v1056, %v1055
      %1073 = vmatprep.subr.bf16.mxu0 0
      %1074 = vmatpush1.bf16.msra.mxu0 %v1064
      %1075 = vmatprep.subr.bf16.mxu0 0
      %1076 = vmatpush1.bf16.msra.mxu0 %v1063
      %1077 = vmatprep.subr.bf16.mxu0 0
      %1078 = vmatpush1.bf16.msra.mxu0 %v1062
      %1079 = vmatprep.subr.bf16.mxu0 0
      %1080 = vmatpush1.bf16.msra.mxu0 %v1061
      %1081 = vmatprep.subr.bf16.mxu0 0
      %1082 = vmatpush1.bf16.msra.mxu0 %v1060
      %1083 = vmatprep.subr.bf16.mxu0 0
      %1084 = vmatpush1.bf16.msra.mxu0 %v1059
      %1085 = vmatprep.subr.bf16.mxu0 0
      %1086 = vmatpush1.bf16.msra.mxu0 %v1058
      %1087 = vmatprep.subr.bf16.mxu0 0
      %1088 = vmatpush1.bf16.msra.mxu0 %v1057
      %1089 = vmatprep.subr.bf16.mxu0 0
      %1090 = vmatpush2.bf16.msra.mxu0 0
      %1091 = vmatprep.subr.bf16.mxu0 0
      %1092 = vmatpush2.bf16.msra.mxu0 0
      %1093 = vmatprep.subr.bf16.mxu0 0
      %1094 = vmatpush2.bf16.msra.mxu0 0
      %1095 = vmatprep.subr.bf16.mxu0 0
      %1096 = vmatpush2.bf16.msra.mxu0 0
      %1097 = vmatprep.subr.bf16.mxu0 0
      %1098 = vmatpush2.bf16.msra.mxu0 0
      %1099 = vmatprep.subr.bf16.mxu0 0
      %1100 = vmatpush2.bf16.msra.mxu0 0
      %1101 = vmatprep.subr.bf16.mxu0 0
      %1102 = vmatpush2.bf16.msra.mxu0 0
      %1103 = vmatprep.subr.bf16.mxu0 0
      %1104 = vmatpush2.bf16.msra.mxu0 0
      %1105 = vmatprep.mubr.bf16.mxu0 0
      %1106 = vmatmul.mubr.bf16.gmra.mxu0 %v1017
      %v1107 = vpop.f32.mrf.mxu0
      %v1108 = vadd.f32 0.0, %v1107
      %v1109 = vpop.f32.mrf.mxu0
      %v1110 = vpop.f32.mrf.mxu0
      %v1111 = vadd.f32 0.0, %v1110
      %v1112 = vpop.f32.mrf.mxu0
      %1113 = vmatprep.mubr.bf16.mxu0 0
      %1114 = vmatmul.mubr.bf16.gmra.mxu0 %v1018
      %v1115 = vpop.f32.mrf.mxu0
      %v1116 = vadd.f32 0.0, %v1115
      %v1117 = vpop.f32.mrf.mxu0
      %v1118 = vpop.f32.mrf.mxu0
      %v1119 = vadd.f32 0.0, %v1118
      %v1120 = vpop.f32.mrf.mxu0
      %1121 = vmatprep.mubr.bf16.mxu0 0
      %1122 = vmatmul.mubr.bf16.gmra.mxu0 %v1019
      %v1123 = vpop.f32.mrf.mxu0
      %v1124 = vadd.f32 0.0, %v1123
      %v1125 = vpop.f32.mrf.mxu0
      %v1126 = vpop.f32.mrf.mxu0
      %v1127 = vadd.f32 0.0, %v1126
      %v1128 = vpop.f32.mrf.mxu0
      %1129 = vmatprep.mubr.bf16.mxu0 0
      %1130 = vmatmul.mubr.bf16.gmra.mxu0 %v1020
      %v1131 = vpop.f32.mrf.mxu0
      %v1132 = vadd.f32 0.0, %v1131
      %v1133 = vpop.f32.mrf.mxu0
      %v1134 = vpop.f32.mrf.mxu0
      %v1135 = vadd.f32 0.0, %v1134
      %v1136 = vpop.f32.mrf.mxu0
      %1137 = vdwg.mxu0
      %v1138 = vld [vmem:[#allocation2] sm:$0xff]
      %v1139 = vld [vmem:[#allocation2 + $0x8] sm:$0xff]
      %v1140 = vld [vmem:[#allocation2 + $0x10] sm:$0xff]
      %v1141 = vld [vmem:[#allocation2 + $0x18] sm:$0xff]
      %v1142 = vld [vmem:[#allocation2 + $0x20] sm:$0xff]
      %v1143 = vld [vmem:[#allocation2 + $0x28] sm:$0xff]
      %v1144 = vld [vmem:[#allocation2 + $0x30] sm:$0xff]
      %v1145 = vld [vmem:[#allocation2 + $0x38] sm:$0xff]
      %v1146 = vadd.f32 %v1138, %v1108
      %v1147 = vadd.f32 %v1139, %v1111
      %v1148 = vadd.f32 %v1140, %v1116
      %v1149 = vadd.f32 %v1141, %v1119
      %v1150 = vadd.f32 %v1142, %v1124
      %v1151 = vadd.f32 %v1143, %v1127
      %v1152 = vadd.f32 %v1144, %v1132
      %v1153 = vadd.f32 %v1145, %v1135
      %1154 = vst [vmem:[#allocation2] sm:$0xff] %v1146
      %1155 = vst [vmem:[#allocation2 + $0x8] sm:$0xff] %v1147
      %1156 = vst [vmem:[#allocation2 + $0x10] sm:$0xff] %v1148
      %1157 = vst [vmem:[#allocation2 + $0x18] sm:$0xff] %v1149
      %1158 = vst [vmem:[#allocation2 + $0x20] sm:$0xff] %v1150
      %1159 = vst [vmem:[#allocation2 + $0x28] sm:$0xff] %v1151
      %1160 = vst [vmem:[#allocation2 + $0x30] sm:$0xff] %v1152
      %1161 = vst [vmem:[#allocation2 + $0x38] sm:$0xff] %v1153
      %s1162 = sadd.s32 %s219, 30
      %s1163 = smul.u32 %s1162, 16
      %s1164 = sshra.s32 %s1163, 3
      %s1165 = sand.u32 %s1163, 7
      %s1166 = smul.addr %s1164, 4
      %s1167 = scalar_lea.vmem %s208, %s1166
      %v1168 = vld [vmem:[%s1167] sm:$0xf]
      %v1169 = vld [vmem:[%s1167 + $0x4] sm:$0xf]
      %v1170 = vld [vmem:[%s1167 + $0x8] sm:$0xf]
      %v1171 = vld [vmem:[%s1167 + $0xc] sm:$0xf]
      %v1172 = vld [vmem:[%s1167 + $0x10] sm:$0xf]
      %v1173 = vld [vmem:[%s1167 + $0x14] sm:$0xf]
      %v1174 = vld [vmem:[%s1167 + $0x18] sm:$0xf]
      %v1175 = vld [vmem:[%s1167 + $0x1c] sm:$0xf]
      %s1176 = scalar_lea.vmem %s1, 320
      %v1177 = vld [vmem:[%s1176] sm:$0xf]
      %v1178 = vld [vmem:[%s1176 + $0x4] sm:$0xf]
      %v1179 = vld [vmem:[%s1176 + $0x8] sm:$0xf]
      %v1180 = vld [vmem:[%s1176 + $0xc] sm:$0xf]
      %v1181 = vld [vmem:[%s1176 + $0x10] sm:$0xf]
      %v1182 = vld [vmem:[%s1176 + $0x14] sm:$0xf]
      %v1183 = vld [vmem:[%s1176 + $0x18] sm:$0xf]
      %v1184 = vld [vmem:[%s1176 + $0x1c] sm:$0xf]
      %v1185 = vld [vmem:[%s1176 + $0x20] sm:$0xf]
      %v1186 = vld [vmem:[%s1176 + $0x24] sm:$0xf]
      %v1187 = vld [vmem:[%s1176 + $0x28] sm:$0xf]
      %v1188 = vld [vmem:[%s1176 + $0x2c] sm:$0xf]
      %v1189 = vld [vmem:[%s1176 + $0x30] sm:$0xf]
      %v1190 = vld [vmem:[%s1176 + $0x34] sm:$0xf]
      %v1191 = vld [vmem:[%s1176 + $0x38] sm:$0xf]
      %v1192 = vld [vmem:[%s1176 + $0x3c] sm:$0xf]
      %v1201 = vunpack.c.l.b16 %v1168
      %v1202 = vunpack.c.l.b16 %v1169
      %v1203 = vunpack.c.l.b16 %v1170
      %v1204 = vunpack.c.l.b16 %v1171
      %v1205 = vunpack.c.l.b16 %v1172
      %v1206 = vunpack.c.l.b16 %v1173
      %v1207 = vunpack.c.l.b16 %v1174
      %v1208 = vunpack.c.l.b16 %v1175
      %v1209 = vpack.c.b16 %v1202, %v1201
      %v1210 = vpack.c.b16 %v1204, %v1203
      %v1211 = vpack.c.b16 %v1206, %v1205
      %v1212 = vpack.c.b16 %v1208, %v1207
      %v1233 = vunpack.c.l.b16 %v1177
      %v1234 = vunpack.c.l.b16 %v1178
      %v1235 = vunpack.c.l.b16 %v1179
      %v1236 = vunpack.c.l.b16 %v1180
      %v1237 = vunpack.c.l.b16 %v1181
      %v1238 = vunpack.c.l.b16 %v1182
      %v1239 = vunpack.c.l.b16 %v1183
      %v1240 = vunpack.c.l.b16 %v1184
      %v1241 = vunpack.c.l.b16 %v1185
      %v1242 = vunpack.c.l.b16 %v1186
      %v1243 = vunpack.c.l.b16 %v1187
      %v1244 = vunpack.c.l.b16 %v1188
      %v1245 = vunpack.c.l.b16 %v1189
      %v1246 = vunpack.c.l.b16 %v1190
      %v1247 = vunpack.c.l.b16 %v1191
      %v1248 = vunpack.c.l.b16 %v1192
      %v1249 = vpack.c.b16 %v1234, %v1233
      %v1250 = vpack.c.b16 %v1236, %v1235
      %v1251 = vpack.c.b16 %v1238, %v1237
      %v1252 = vpack.c.b16 %v1240, %v1239
      %v1253 = vpack.c.b16 %v1242, %v1241
      %v1254 = vpack.c.b16 %v1244, %v1243
      %v1255 = vpack.c.b16 %v1246, %v1245
      %v1256 = vpack.c.b16 %v1248, %v1247
      %1265 = vmatprep.subr.bf16.mxu0 0
      %1266 = vmatpush1.bf16.msra.mxu0 %v1256
      %1267 = vmatprep.subr.bf16.mxu0 0
      %1268 = vmatpush1.bf16.msra.mxu0 %v1255
      %1269 = vmatprep.subr.bf16.mxu0 0
      %1270 = vmatpush1.bf16.msra.mxu0 %v1254
      %1271 = vmatprep.subr.bf16.mxu0 0
      %1272 = vmatpush1.bf16.msra.mxu0 %v1253
      %1273 = vmatprep.subr.bf16.mxu0 0
      %1274 = vmatpush1.bf16.msra.mxu0 %v1252
      %1275 = vmatprep.subr.bf16.mxu0 0
      %1276 = vmatpush1.bf16.msra.mxu0 %v1251
      %1277 = vmatprep.subr.bf16.mxu0 0
      %1278 = vmatpush1.bf16.msra.mxu0 %v1250
      %1279 = vmatprep.subr.bf16.mxu0 0
      %1280 = vmatpush1.bf16.msra.mxu0 %v1249
      %1281 = vmatprep.subr.bf16.mxu0 0
      %1282 = vmatpush2.bf16.msra.mxu0 0
      %1283 = vmatprep.subr.bf16.mxu0 0
      %1284 = vmatpush2.bf16.msra.mxu0 0
      %1285 = vmatprep.subr.bf16.mxu0 0
      %1286 = vmatpush2.bf16.msra.mxu0 0
      %1287 = vmatprep.subr.bf16.mxu0 0
      %1288 = vmatpush2.bf16.msra.mxu0 0
      %1289 = vmatprep.subr.bf16.mxu0 0
      %1290 = vmatpush2.bf16.msra.mxu0 0
      %1291 = vmatprep.subr.bf16.mxu0 0
      %1292 = vmatpush2.bf16.msra.mxu0 0
      %1293 = vmatprep.subr.bf16.mxu0 0
      %1294 = vmatpush2.bf16.msra.mxu0 0
      %1295 = vmatprep.subr.bf16.mxu0 0
      %1296 = vmatpush2.bf16.msra.mxu0 0
      %1297 = vmatprep.mubr.bf16.mxu0 0
      %1298 = vmatmul.mubr.bf16.gmra.mxu0 %v1209
      %v1299 = vpop.f32.mrf.mxu0
      %v1300 = vadd.f32 0.0, %v1299
      %v1301 = vpop.f32.mrf.mxu0
      %v1302 = vpop.f32.mrf.mxu0
      %v1303 = vadd.f32 0.0, %v1302
      %v1304 = vpop.f32.mrf.mxu0
      %1305 = vmatprep.mubr.bf16.mxu0 0
      %1306 = vmatmul.mubr.bf16.gmra.mxu0 %v1210
      %v1307 = vpop.f32.mrf.mxu0
      %v1308 = vadd.f32 0.0, %v1307
      %v1309 = vpop.f32.mrf.mxu0
      %v1310 = vpop.f32.mrf.mxu0
      %v1311 = vadd.f32 0.0, %v1310
      %v1312 = vpop.f32.mrf.mxu0
      %1313 = vmatprep.mubr.bf16.mxu0 0
      %1314 = vmatmul.mubr.bf16.gmra.mxu0 %v1211
      %v1315 = vpop.f32.mrf.mxu0
      %v1316 = vadd.f32 0.0, %v1315
      %v1317 = vpop.f32.mrf.mxu0
      %v1318 = vpop.f32.mrf.mxu0
      %v1319 = vadd.f32 0.0, %v1318
      %v1320 = vpop.f32.mrf.mxu0
      %1321 = vmatprep.mubr.bf16.mxu0 0
      %1322 = vmatmul.mubr.bf16.gmra.mxu0 %v1212
      %v1323 = vpop.f32.mrf.mxu0
      %v1324 = vadd.f32 0.0, %v1323
      %v1325 = vpop.f32.mrf.mxu0
      %v1326 = vpop.f32.mrf.mxu0
      %v1327 = vadd.f32 0.0, %v1326
      %v1328 = vpop.f32.mrf.mxu0
      %1329 = vdwg.mxu0
      %v1330 = vld [vmem:[#allocation2] sm:$0xff]
      %v1331 = vld [vmem:[#allocation2 + $0x8] sm:$0xff]
      %v1332 = vld [vmem:[#allocation2 + $0x10] sm:$0xff]
      %v1333 = vld [vmem:[#allocation2 + $0x18] sm:$0xff]
      %v1334 = vld [vmem:[#allocation2 + $0x20] sm:$0xff]
      %v1335 = vld [vmem:[#allocation2 + $0x28] sm:$0xff]
      %v1336 = vld [vmem:[#allocation2 + $0x30] sm:$0xff]
      %v1337 = vld [vmem:[#allocation2 + $0x38] sm:$0xff]
      %v1338 = vadd.f32 %v1330, %v1300
      %v1339 = vadd.f32 %v1331, %v1303
      %v1340 = vadd.f32 %v1332, %v1308
      %v1341 = vadd.f32 %v1333, %v1311
      %v1342 = vadd.f32 %v1334, %v1316
      %v1343 = vadd.f32 %v1335, %v1319
      %v1344 = vadd.f32 %v1336, %v1324
      %v1345 = vadd.f32 %v1337, %v1327
      %1346 = vst [vmem:[#allocation2] sm:$0xff] %v1338
      %1347 = vst [vmem:[#allocation2 + $0x8] sm:$0xff] %v1339
      %1348 = vst [vmem:[#allocation2 + $0x10] sm:$0xff] %v1340
      %1349 = vst [vmem:[#allocation2 + $0x18] sm:$0xff] %v1341
      %1350 = vst [vmem:[#allocation2 + $0x20] sm:$0xff] %v1342
      %1351 = vst [vmem:[#allocation2 + $0x28] sm:$0xff] %v1343
      %1352 = vst [vmem:[#allocation2 + $0x30] sm:$0xff] %v1344
      %1353 = vst [vmem:[#allocation2 + $0x38] sm:$0xff] %v1345
      %s1354 = sadd.s32 %s219, 1
      %s1355 = smul.u32 %s1354, 16
      %s1356 = sshra.s32 %s1355, 3
      %s1357 = sand.u32 %s1355, 7
      %s1358 = smul.addr %s1356, 4
      %s1359 = scalar_lea.vmem %s208, %s1358
      %v1360 = vld [vmem:[%s1359] sm:$0xf]
      %v1361 = vld [vmem:[%s1359 + $0x4] sm:$0xf]
      %v1362 = vld [vmem:[%s1359 + $0x8] sm:$0xf]
      %v1363 = vld [vmem:[%s1359 + $0xc] sm:$0xf]
      %v1364 = vld [vmem:[%s1359 + $0x10] sm:$0xf]
      %v1365 = vld [vmem:[%s1359 + $0x14] sm:$0xf]
      %v1366 = vld [vmem:[%s1359 + $0x18] sm:$0xf]
      %v1367 = vld [vmem:[%s1359 + $0x1c] sm:$0xf]
      %s1368 = scalar_lea.vmem %s1, 384
      %v1369 = vld [vmem:[%s1368] sm:$0xf]
      %v1370 = vld [vmem:[%s1368 + $0x4] sm:$0xf]
      %v1371 = vld [vmem:[%s1368 + $0x8] sm:$0xf]
      %v1372 = vld [vmem:[%s1368 + $0xc] sm:$0xf]
      %v1373 = vld [vmem:[%s1368 + $0x10] sm:$0xf]
      %v1374 = vld [vmem:[%s1368 + $0x14] sm:$0xf]
      %v1375 = vld [vmem:[%s1368 + $0x18] sm:$0xf]
      %v1376 = vld [vmem:[%s1368 + $0x1c] sm:$0xf]
      %v1377 = vld [vmem:[%s1368 + $0x20] sm:$0xf]
      %v1378 = vld [vmem:[%s1368 + $0x24] sm:$0xf]
      %v1379 = vld [vmem:[%s1368 + $0x28] sm:$0xf]
      %v1380 = vld [vmem:[%s1368 + $0x2c] sm:$0xf]
      %v1381 = vld [vmem:[%s1368 + $0x30] sm:$0xf]
      %v1382 = vld [vmem:[%s1368 + $0x34] sm:$0xf]
      %v1383 = vld [vmem:[%s1368 + $0x38] sm:$0xf]
      %v1384 = vld [vmem:[%s1368 + $0x3c] sm:$0xf]
      %v1393 = vunpack.c.l.b16 %v1360
      %v1394 = vunpack.c.l.b16 %v1361
      %v1395 = vunpack.c.l.b16 %v1362
      %v1396 = vunpack.c.l.b16 %v1363
      %v1397 = vunpack.c.l.b16 %v1364
      %v1398 = vunpack.c.l.b16 %v1365
      %v1399 = vunpack.c.l.b16 %v1366
      %v1400 = vunpack.c.l.b16 %v1367
      %v1401 = vpack.c.b16 %v1394, %v1393
      %v1402 = vpack.c.b16 %v1396, %v1395
      %v1403 = vpack.c.b16 %v1398, %v1397
      %v1404 = vpack.c.b16 %v1400, %v1399
      %v1425 = vunpack.c.l.b16 %v1369
      %v1426 = vunpack.c.l.b16 %v1370
      %v1427 = vunpack.c.l.b16 %v1371
      %v1428 = vunpack.c.l.b16 %v1372
      %v1429 = vunpack.c.l.b16 %v1373
      %v1430 = vunpack.c.l.b16 %v1374
      %v1431 = vunpack.c.l.b16 %v1375
      %v1432 = vunpack.c.l.b16 %v1376
      %v1433 = vunpack.c.l.b16 %v1377
      %v1434 = vunpack.c.l.b16 %v1378
      %v1435 = vunpack.c.l.b16 %v1379
      %v1436 = vunpack.c.l.b16 %v1380
      %v1437 = vunpack.c.l.b16 %v1381
      %v1438 = vunpack.c.l.b16 %v1382
      %v1439 = vunpack.c.l.b16 %v1383
      %v1440 = vunpack.c.l.b16 %v1384
      %v1441 = vpack.c.b16 %v1426, %v1425
      %v1442 = vpack.c.b16 %v1428, %v1427
      %v1443 = vpack.c.b16 %v1430, %v1429
      %v1444 = vpack.c.b16 %v1432, %v1431
      %v1445 = vpack.c.b16 %v1434, %v1433
      %v1446 = vpack.c.b16 %v1436, %v1435
      %v1447 = vpack.c.b16 %v1438, %v1437
      %v1448 = vpack.c.b16 %v1440, %v1439
      %1457 = vmatprep.subr.bf16.mxu0 0
      %1458 = vmatpush1.bf16.msra.mxu0 %v1448
      %1459 = vmatprep.subr.bf16.mxu0 0
      %1460 = vmatpush1.bf16.msra.mxu0 %v1447
      %1461 = vmatprep.subr.bf16.mxu0 0
      %1462 = vmatpush1.bf16.msra.mxu0 %v1446
      %1463 = vmatprep.subr.bf16.mxu0 0
      %1464 = vmatpush1.bf16.msra.mxu0 %v1445
      %1465 = vmatprep.subr.bf16.mxu0 0
      %1466 = vmatpush1.bf16.msra.mxu0 %v1444
      %1467 = vmatprep.subr.bf16.mxu0 0
      %1468 = vmatpush1.bf16.msra.mxu0 %v1443
      %1469 = vmatprep.subr.bf16.mxu0 0
      %1470 = vmatpush1.bf16.msra.mxu0 %v1442
      %1471 = vmatprep.subr.bf16.mxu0 0
      %1472 = vmatpush1.bf16.msra.mxu0 %v1441
      %1473 = vmatprep.subr.bf16.mxu0 0
      %1474 = vmatpush2.bf16.msra.mxu0 0
      %1475 = vmatprep.subr.bf16.mxu0 0
      %1476 = vmatpush2.bf16.msra.mxu0 0
      %1477 = vmatprep.subr.bf16.mxu0 0
      %1478 = vmatpush2.bf16.msra.mxu0 0
      %1479 = vmatprep.subr.bf16.mxu0 0
      %1480 = vmatpush2.bf16.msra.mxu0 0
      %1481 = vmatprep.subr.bf16.mxu0 0
      %1482 = vmatpush2.bf16.msra.mxu0 0
      %1483 = vmatprep.subr.bf16.mxu0 0
      %1484 = vmatpush2.bf16.msra.mxu0 0
      %1485 = vmatprep.subr.bf16.mxu0 0
      %1486 = vmatpush2.bf16.msra.mxu0 0
      %1487 = vmatprep.subr.bf16.mxu0 0
      %1488 = vmatpush2.bf16.msra.mxu0 0
      %1489 = vmatprep.mubr.bf16.mxu0 0
      %1490 = vmatmul.mubr.bf16.gmra.mxu0 %v1401
      %v1491 = vpop.f32.mrf.mxu0
      %v1492 = vadd.f32 0.0, %v1491
      %v1493 = vpop.f32.mrf.mxu0
      %v1494 = vpop.f32.mrf.mxu0
      %v1495 = vadd.f32 0.0, %v1494
      %v1496 = vpop.f32.mrf.mxu0
      %1497 = vmatprep.mubr.bf16.mxu0 0
      %1498 = vmatmul.mubr.bf16.gmra.mxu0 %v1402
      %v1499 = vpop.f32.mrf.mxu0
      %v1500 = vadd.f32 0.0, %v1499
      %v1501 = vpop.f32.mrf.mxu0
      %v1502 = vpop.f32.mrf.mxu0
      %v1503 = vadd.f32 0.0, %v1502
      %v1504 = vpop.f32.mrf.mxu0
      %1505 = vmatprep.mubr.bf16.mxu0 0
      %1506 = vmatmul.mubr.bf16.gmra.mxu0 %v1403
      %v1507 = vpop.f32.mrf.mxu0
      %v1508 = vadd.f32 0.0, %v1507
      %v1509 = vpop.f32.mrf.mxu0
      %v1510 = vpop.f32.mrf.mxu0
      %v1511 = vadd.f32 0.0, %v1510
      %v1512 = vpop.f32.mrf.mxu0
      %1513 = vmatprep.mubr.bf16.mxu0 0
      %1514 = vmatmul.mubr.bf16.gmra.mxu0 %v1404
      %v1515 = vpop.f32.mrf.mxu0
      %v1516 = vadd.f32 0.0, %v1515
      %v1517 = vpop.f32.mrf.mxu0
      %v1518 = vpop.f32.mrf.mxu0
      %v1519 = vadd.f32 0.0, %v1518
      %v1520 = vpop.f32.mrf.mxu0
      %1521 = vdwg.mxu0
      %v1522 = vld [vmem:[#allocation2] sm:$0xff]
      %v1523 = vld [vmem:[#allocation2 + $0x8] sm:$0xff]
      %v1524 = vld [vmem:[#allocation2 + $0x10] sm:$0xff]
      %v1525 = vld [vmem:[#allocation2 + $0x18] sm:$0xff]
      %v1526 = vld [vmem:[#allocation2 + $0x20] sm:$0xff]
      %v1527 = vld [vmem:[#allocation2 + $0x28] sm:$0xff]
      %v1528 = vld [vmem:[#allocation2 + $0x30] sm:$0xff]
      %v1529 = vld [vmem:[#allocation2 + $0x38] sm:$0xff]
      %v1530 = vadd.f32 %v1522, %v1492
      %v1531 = vadd.f32 %v1523, %v1495
      %v1532 = vadd.f32 %v1524, %v1500
      %v1533 = vadd.f32 %v1525, %v1503
      %v1534 = vadd.f32 %v1526, %v1508
      %v1535 = vadd.f32 %v1527, %v1511
      %v1536 = vadd.f32 %v1528, %v1516
      %v1537 = vadd.f32 %v1529, %v1519
      %1538 = vst [vmem:[#allocation2] sm:$0xff] %v1530
      %1539 = vst [vmem:[#allocation2 + $0x8] sm:$0xff] %v1531
      %1540 = vst [vmem:[#allocation2 + $0x10] sm:$0xff] %v1532
      %1541 = vst [vmem:[#allocation2 + $0x18] sm:$0xff] %v1533
      %1542 = vst [vmem:[#allocation2 + $0x20] sm:$0xff] %v1534
      %1543 = vst [vmem:[#allocation2 + $0x28] sm:$0xff] %v1535
      %1544 = vst [vmem:[#allocation2 + $0x30] sm:$0xff] %v1536
      %1545 = vst [vmem:[#allocation2 + $0x38] sm:$0xff] %v1537
      %s1546 = sadd.s32 %s219, 6
      %s1547 = smul.u32 %s1546, 16
      %s1548 = sshra.s32 %s1547, 3
      %s1549 = sand.u32 %s1547, 7
      %s1550 = smul.addr %s1548, 4
      %s1551 = scalar_lea.vmem %s208, %s1550
      %v1552 = vld [vmem:[%s1551] sm:$0xf]
      %v1553 = vld [vmem:[%s1551 + $0x4] sm:$0xf]
      %v1554 = vld [vmem:[%s1551 + $0x8] sm:$0xf]
      %v1555 = vld [vmem:[%s1551 + $0xc] sm:$0xf]
      %v1556 = vld [vmem:[%s1551 + $0x10] sm:$0xf]
      %v1557 = vld [vmem:[%s1551 + $0x14] sm:$0xf]
      %v1558 = vld [vmem:[%s1551 + $0x18] sm:$0xf]
      %v1559 = vld [vmem:[%s1551 + $0x1c] sm:$0xf]
      %s1560 = scalar_lea.vmem %s1, 448
      %v1561 = vld [vmem:[%s1560] sm:$0xf]
      %v1562 = vld [vmem:[%s1560 + $0x4] sm:$0xf]
      %v1563 = vld [vmem:[%s1560 + $0x8] sm:$0xf]
      %v1564 = vld [vmem:[%s1560 + $0xc] sm:$0xf]
      %v1565 = vld [vmem:[%s1560 + $0x10] sm:$0xf]
      %v1566 = vld [vmem:[%s1560 + $0x14] sm:$0xf]
      %v1567 = vld [vmem:[%s1560 + $0x18] sm:$0xf]
      %v1568 = vld [vmem:[%s1560 + $0x1c] sm:$0xf]
      %v1569 = vld [vmem:[%s1560 + $0x20] sm:$0xf]
      %v1570 = vld [vmem:[%s1560 + $0x24] sm:$0xf]
      %v1571 = vld [vmem:[%s1560 + $0x28] sm:$0xf]
      %v1572 = vld [vmem:[%s1560 + $0x2c] sm:$0xf]
      %v1573 = vld [vmem:[%s1560 + $0x30] sm:$0xf]
      %v1574 = vld [vmem:[%s1560 + $0x34] sm:$0xf]
      %v1575 = vld [vmem:[%s1560 + $0x38] sm:$0xf]
      %v1576 = vld [vmem:[%s1560 + $0x3c] sm:$0xf]
      %v1585 = vunpack.c.l.b16 %v1552
      %v1586 = vunpack.c.l.b16 %v1553
      %v1587 = vunpack.c.l.b16 %v1554
      %v1588 = vunpack.c.l.b16 %v1555
      %v1589 = vunpack.c.l.b16 %v1556
      %v1590 = vunpack.c.l.b16 %v1557
      %v1591 = vunpack.c.l.b16 %v1558
      %v1592 = vunpack.c.l.b16 %v1559
      %v1593 = vpack.c.b16 %v1586, %v1585
      %v1594 = vpack.c.b16 %v1588, %v1587
      %v1595 = vpack.c.b16 %v1590, %v1589
      %v1596 = vpack.c.b16 %v1592, %v1591
      %v1617 = vunpack.c.l.b16 %v1561
      %v1618 = vunpack.c.l.b16 %v1562
      %v1619 = vunpack.c.l.b16 %v1563
      %v1620 = vunpack.c.l.b16 %v1564
      %v1621 = vunpack.c.l.b16 %v1565
      %v1622 = vunpack.c.l.b16 %v1566
      %v1623 = vunpack.c.l.b16 %v1567
      %v1624 = vunpack.c.l.b16 %v1568
      %v1625 = vunpack.c.l.b16 %v1569
      %v1626 = vunpack.c.l.b16 %v1570
      %v1627 = vunpack.c.l.b16 %v1571
      %v1628 = vunpack.c.l.b16 %v1572
      %v1629 = vunpack.c.l.b16 %v1573
      %v1630 = vunpack.c.l.b16 %v1574
      %v1631 = vunpack.c.l.b16 %v1575
      %v1632 = vunpack.c.l.b16 %v1576
      %v1633 = vpack.c.b16 %v1618, %v1617
      %v1634 = vpack.c.b16 %v1620, %v1619
      %v1635 = vpack.c.b16 %v1622, %v1621
      %v1636 = vpack.c.b16 %v1624, %v1623
      %v1637 = vpack.c.b16 %v1626, %v1625
      %v1638 = vpack.c.b16 %v1628, %v1627
      %v1639 = vpack.c.b16 %v1630, %v1629
      %v1640 = vpack.c.b16 %v1632, %v1631
      %1649 = vmatprep.subr.bf16.mxu0 0
      %1650 = vmatpush1.bf16.msra.mxu0 %v1640
      %1651 = vmatprep.subr.bf16.mxu0 0
      %1652 = vmatpush1.bf16.msra.mxu0 %v1639
      %1653 = vmatprep.subr.bf16.mxu0 0
      %1654 = vmatpush1.bf16.msra.mxu0 %v1638
      %1655 = vmatprep.subr.bf16.mxu0 0
      %1656 = vmatpush1.bf16.msra.mxu0 %v1637
      %1657 = vmatprep.subr.bf16.mxu0 0
      %1658 = vmatpush1.bf16.msra.mxu0 %v1636
      %1659 = vmatprep.subr.bf16.mxu0 0
      %1660 = vmatpush1.bf16.msra.mxu0 %v1635
      %1661 = vmatprep.subr.bf16.mxu0 0
      %1662 = vmatpush1.bf16.msra.mxu0 %v1634
      %1663 = vmatprep.subr.bf16.mxu0 0
      %1664 = vmatpush1.bf16.msra.mxu0 %v1633
      %1665 = vmatprep.subr.bf16.mxu0 0
      %1666 = vmatpush2.bf16.msra.mxu0 0
      %1667 = vmatprep.subr.bf16.mxu0 0
      %1668 = vmatpush2.bf16.msra.mxu0 0
      %1669 = vmatprep.subr.bf16.mxu0 0
      %1670 = vmatpush2.bf16.msra.mxu0 0
      %1671 = vmatprep.subr.bf16.mxu0 0
      %1672 = vmatpush2.bf16.msra.mxu0 0
      %1673 = vmatprep.subr.bf16.mxu0 0
      %1674 = vmatpush2.bf16.msra.mxu0 0
      %1675 = vmatprep.subr.bf16.mxu0 0
      %1676 = vmatpush2.bf16.msra.mxu0 0
      %1677 = vmatprep.subr.bf16.mxu0 0
      %1678 = vmatpush2.bf16.msra.mxu0 0
      %1679 = vmatprep.subr.bf16.mxu0 0
      %1680 = vmatpush2.bf16.msra.mxu0 0
      %1681 = vmatprep.mubr.bf16.mxu0 0
      %1682 = vmatmul.mubr.bf16.gmra.mxu0 %v1593
      %v1683 = vpop.f32.mrf.mxu0
      %v1684 = vadd.f32 0.0, %v1683
      %v1685 = vpop.f32.mrf.mxu0
      %v1686 = vpop.f32.mrf.mxu0
      %v1687 = vadd.f32 0.0, %v1686
      %v1688 = vpop.f32.mrf.mxu0
      %1689 = vmatprep.mubr.bf16.mxu0 0
      %1690 = vmatmul.mubr.bf16.gmra.mxu0 %v1594
      %v1691 = vpop.f32.mrf.mxu0
      %v1692 = vadd.f32 0.0, %v1691
      %v1693 = vpop.f32.mrf.mxu0
      %v1694 = vpop.f32.mrf.mxu0
      %v1695 = vadd.f32 0.0, %v1694
      %v1696 = vpop.f32.mrf.mxu0
      %1697 = vmatprep.mubr.bf16.mxu0 0
      %1698 = vmatmul.mubr.bf16.gmra.mxu0 %v1595
      %v1699 = vpop.f32.mrf.mxu0
      %v1700 = vadd.f32 0.0, %v1699
      %v1701 = vpop.f32.mrf.mxu0
      %v1702 = vpop.f32.mrf.mxu0
      %v1703 = vadd.f32 0.0, %v1702
      %v1704 = vpop.f32.mrf.mxu0
      %1705 = vmatprep.mubr.bf16.mxu0 0
      %1706 = vmatmul.mubr.bf16.gmra.mxu0 %v1596
      %v1707 = vpop.f32.mrf.mxu0
      %v1708 = vadd.f32 0.0, %v1707
      %v1709 = vpop.f32.mrf.mxu0
      %v1710 = vpop.f32.mrf.mxu0
      %v1711 = vadd.f32 0.0, %v1710
      %v1712 = vpop.f32.mrf.mxu0
      %1713 = vdwg.mxu0
      %v1714 = vld [vmem:[#allocation2] sm:$0xff]
      %v1715 = vld [vmem:[#allocation2 + $0x8] sm:$0xff]
      %v1716 = vld [vmem:[#allocation2 + $0x10] sm:$0xff]
      %v1717 = vld [vmem:[#allocation2 + $0x18] sm:$0xff]
      %v1718 = vld [vmem:[#allocation2 + $0x20] sm:$0xff]
      %v1719 = vld [vmem:[#allocation2 + $0x28] sm:$0xff]
      %v1720 = vld [vmem:[#allocation2 + $0x30] sm:$0xff]
      %v1721 = vld [vmem:[#allocation2 + $0x38] sm:$0xff]
      %v1722 = vadd.f32 %v1714, %v1684
      %v1723 = vadd.f32 %v1715, %v1687
      %v1724 = vadd.f32 %v1716, %v1692
      %v1725 = vadd.f32 %v1717, %v1695
      %v1726 = vadd.f32 %v1718, %v1700
      %v1727 = vadd.f32 %v1719, %v1703
      %v1728 = vadd.f32 %v1720, %v1708
      %v1729 = vadd.f32 %v1721, %v1711
      %1730 = vst [vmem:[#allocation2] sm:$0xff] %v1722
      %1731 = vst [vmem:[#allocation2 + $0x8] sm:$0xff] %v1723
      %1732 = vst [vmem:[#allocation2 + $0x10] sm:$0xff] %v1724
      %1733 = vst [vmem:[#allocation2 + $0x18] sm:$0xff] %v1725
      %1734 = vst [vmem:[#allocation2 + $0x20] sm:$0xff] %v1726
      %1735 = vst [vmem:[#allocation2 + $0x28] sm:$0xff] %v1727
      %1736 = vst [vmem:[#allocation2 + $0x30] sm:$0xff] %v1728
      %1737 = vst [vmem:[#allocation2 + $0x38] sm:$0xff] %v1729
      %s1738 = sadd.s32 %s219, 21
      %s1739 = smul.u32 %s1738, 16
      %s1740 = sshra.s32 %s1739, 3
      %s1741 = sand.u32 %s1739, 7
      %s1742 = smul.addr %s1740, 4
      %s1743 = scalar_lea.vmem %s208, %s1742
      %v1744 = vld [vmem:[%s1743] sm:$0xf]
      %v1745 = vld [vmem:[%s1743 + $0x4] sm:$0xf]
      %v1746 = vld [vmem:[%s1743 + $0x8] sm:$0xf]
      %v1747 = vld [vmem:[%s1743 + $0xc] sm:$0xf]
      %v1748 = vld [vmem:[%s1743 + $0x10] sm:$0xf]
      %v1749 = vld [vmem:[%s1743 + $0x14] sm:$0xf]
      %v1750 = vld [vmem:[%s1743 + $0x18] sm:$0xf]
      %v1751 = vld [vmem:[%s1743 + $0x1c] sm:$0xf]
      %s1752 = scalar_lea.vmem %s1, 512
      %v1753 = vld [vmem:[%s1752] sm:$0xf]
      %v1754 = vld [vmem:[%s1752 + $0x4] sm:$0xf]
      %v1755 = vld [vmem:[%s1752 + $0x8] sm:$0xf]
      %v1756 = vld [vmem:[%s1752 + $0xc] sm:$0xf]
      %v1757 = vld [vmem:[%s1752 + $0x10] sm:$0xf]
      %v1758 = vld [vmem:[%s1752 + $0x14] sm:$0xf]
      %v1759 = vld [vmem:[%s1752 + $0x18] sm:$0xf]
      %v1760 = vld [vmem:[%s1752 + $0x1c] sm:$0xf]
      %v1761 = vld [vmem:[%s1752 + $0x20] sm:$0xf]
      %v1762 = vld [vmem:[%s1752 + $0x24] sm:$0xf]
      %v1763 = vld [vmem:[%s1752 + $0x28] sm:$0xf]
      %v1764 = vld [vmem:[%s1752 + $0x2c] sm:$0xf]
      %v1765 = vld [vmem:[%s1752 + $0x30] sm:$0xf]
      %v1766 = vld [vmem:[%s1752 + $0x34] sm:$0xf]
      %v1767 = vld [vmem:[%s1752 + $0x38] sm:$0xf]
      %v1768 = vld [vmem:[%s1752 + $0x3c] sm:$0xf]
      %v1777 = vunpack.c.l.b16 %v1744
      %v1778 = vunpack.c.l.b16 %v1745
      %v1779 = vunpack.c.l.b16 %v1746
      %v1780 = vunpack.c.l.b16 %v1747
      %v1781 = vunpack.c.l.b16 %v1748
      %v1782 = vunpack.c.l.b16 %v1749
      %v1783 = vunpack.c.l.b16 %v1750
      %v1784 = vunpack.c.l.b16 %v1751
      %v1785 = vpack.c.b16 %v1778, %v1777
      %v1786 = vpack.c.b16 %v1780, %v1779
      %v1787 = vpack.c.b16 %v1782, %v1781
      %v1788 = vpack.c.b16 %v1784, %v1783
      %v1809 = vunpack.c.l.b16 %v1753
      %v1810 = vunpack.c.l.b16 %v1754
      %v1811 = vunpack.c.l.b16 %v1755
      %v1812 = vunpack.c.l.b16 %v1756
      %v1813 = vunpack.c.l.b16 %v1757
      %v1814 = vunpack.c.l.b16 %v1758
      %v1815 = vunpack.c.l.b16 %v1759
      %v1816 = vunpack.c.l.b16 %v1760
      %v1817 = vunpack.c.l.b16 %v1761
      %v1818 = vunpack.c.l.b16 %v1762
      %v1819 = vunpack.c.l.b16 %v1763
      %v1820 = vunpack.c.l.b16 %v1764
      %v1821 = vunpack.c.l.b16 %v1765
      %v1822 = vunpack.c.l.b16 %v1766
      %v1823 = vunpack.c.l.b16 %v1767
      %v1824 = vunpack.c.l.b16 %v1768
      %v1825 = vpack.c.b16 %v1810, %v1809
      %v1826 = vpack.c.b16 %v1812, %v1811
      %v1827 = vpack.c.b16 %v1814, %v1813
      %v1828 = vpack.c.b16 %v1816, %v1815
      %v1829 = vpack.c.b16 %v1818, %v1817
      %v1830 = vpack.c.b16 %v1820, %v1819
      %v1831 = vpack.c.b16 %v1822, %v1821
      %v1832 = vpack.c.b16 %v1824, %v1823
      %1841 = vmatprep.subr.bf16.mxu0 0
      %1842 = vmatpush1.bf16.msra.mxu0 %v1832
      %1843 = vmatprep.subr.bf16.mxu0 0
      %1844 = vmatpush1.bf16.msra.mxu0 %v1831
      %1845 = vmatprep.subr.bf16.mxu0 0
      %1846 = vmatpush1.bf16.msra.mxu0 %v1830
      %1847 = vmatprep.subr.bf16.mxu0 0
      %1848 = vmatpush1.bf16.msra.mxu0 %v1829
      %1849 = vmatprep.subr.bf16.mxu0 0
      %1850 = vmatpush1.bf16.msra.mxu0 %v1828
      %1851 = vmatprep.subr.bf16.mxu0 0
      %1852 = vmatpush1.bf16.msra.mxu0 %v1827
      %1853 = vmatprep.subr.bf16.mxu0 0
      %1854 = vmatpush1.bf16.msra.mxu0 %v1826
      %1855 = vmatprep.subr.bf16.mxu0 0
      %1856 = vmatpush1.bf16.msra.mxu0 %v1825
      %1857 = vmatprep.subr.bf16.mxu0 0
      %1858 = vmatpush2.bf16.msra.mxu0 0
      %1859 = vmatprep.subr.bf16.mxu0 0
      %1860 = vmatpush2.bf16.msra.mxu0 0
      %1861 = vmatprep.subr.bf16.mxu0 0
      %1862 = vmatpush2.bf16.msra.mxu0 0
      %1863 = vmatprep.subr.bf16.mxu0 0
      %1864 = vmatpush2.bf16.msra.mxu0 0
      %1865 = vmatprep.subr.bf16.mxu0 0
      %1866 = vmatpush2.bf16.msra.mxu0 0
      %1867 = vmatprep.subr.bf16.mxu0 0
      %1868 = vmatpush2.bf16.msra.mxu0 0
      %1869 = vmatprep.subr.bf16.mxu0 0
      %1870 = vmatpush2.bf16.msra.mxu0 0
      %1871 = vmatprep.subr.bf16.mxu0 0
      %1872 = vmatpush2.bf16.msra.mxu0 0
      %1873 = vmatprep.mubr.bf16.mxu0 0
      %1874 = vmatmul.mubr.bf16.gmra.mxu0 %v1785
      %v1875 = vpop.f32.mrf.mxu0
      %v1876 = vadd.f32 0.0, %v1875
      %v1877 = vpop.f32.mrf.mxu0
      %v1878 = vpop.f32.mrf.mxu0
      %v1879 = vadd.f32 0.0, %v1878
      %v1880 = vpop.f32.mrf.mxu0
      %1881 = vmatprep.mubr.bf16.mxu0 0
      %1882 = vmatmul.mubr.bf16.gmra.mxu0 %v1786
      %v1883 = vpop.f32.mrf.mxu0
      %v1884 = vadd.f32 0.0, %v1883
      %v1885 = vpop.f32.mrf.mxu0
      %v1886 = vpop.f32.mrf.mxu0
      %v1887 = vadd.f32 0.0, %v1886
      %v1888 = vpop.f32.mrf.mxu0
      %1889 = vmatprep.mubr.bf16.mxu0 0
      %1890 = vmatmul.mubr.bf16.gmra.mxu0 %v1787
      %v1891 = vpop.f32.mrf.mxu0
      %v1892 = vadd.f32 0.0, %v1891
      %v1893 = vpop.f32.mrf.mxu0
      %v1894 = vpop.f32.mrf.mxu0
      %v1895 = vadd.f32 0.0, %v1894
      %v1896 = vpop.f32.mrf.mxu0
      %1897 = vmatprep.mubr.bf16.mxu0 0
      %1898 = vmatmul.mubr.bf16.gmra.mxu0 %v1788
      %v1899 = vpop.f32.mrf.mxu0
      %v1900 = vadd.f32 0.0, %v1899
      %v1901 = vpop.f32.mrf.mxu0
      %v1902 = vpop.f32.mrf.mxu0
      %v1903 = vadd.f32 0.0, %v1902
      %v1904 = vpop.f32.mrf.mxu0
      %1905 = vdwg.mxu0
      %v1906 = vld [vmem:[#allocation2] sm:$0xff]
      %v1907 = vld [vmem:[#allocation2 + $0x8] sm:$0xff]
      %v1908 = vld [vmem:[#allocation2 + $0x10] sm:$0xff]
      %v1909 = vld [vmem:[#allocation2 + $0x18] sm:$0xff]
      %v1910 = vld [vmem:[#allocation2 + $0x20] sm:$0xff]
      %v1911 = vld [vmem:[#allocation2 + $0x28] sm:$0xff]
      %v1912 = vld [vmem:[#allocation2 + $0x30] sm:$0xff]
      %v1913 = vld [vmem:[#allocation2 + $0x38] sm:$0xff]
      %v1914 = vadd.f32 %v1906, %v1876
      %v1915 = vadd.f32 %v1907, %v1879
      %v1916 = vadd.f32 %v1908, %v1884
      %v1917 = vadd.f32 %v1909, %v1887
      %v1918 = vadd.f32 %v1910, %v1892
      %v1919 = vadd.f32 %v1911, %v1895
      %v1920 = vadd.f32 %v1912, %v1900
      %v1921 = vadd.f32 %v1913, %v1903
      %1922 = vst [vmem:[#allocation2] sm:$0xff] %v1914
      %1923 = vst [vmem:[#allocation2 + $0x8] sm:$0xff] %v1915
      %1924 = vst [vmem:[#allocation2 + $0x10] sm:$0xff] %v1916
      %1925 = vst [vmem:[#allocation2 + $0x18] sm:$0xff] %v1917
      %1926 = vst [vmem:[#allocation2 + $0x20] sm:$0xff] %v1918
      %1927 = vst [vmem:[#allocation2 + $0x28] sm:$0xff] %v1919
      %1928 = vst [vmem:[#allocation2 + $0x30] sm:$0xff] %v1920
      %1929 = vst [vmem:[#allocation2 + $0x38] sm:$0xff] %v1921
      %v1930 = vld [vmem:[#allocation2] sm:$0xff]
      %v1931 = vld [vmem:[#allocation2 + $0x10] sm:$0xff]
      %v1932 = vld [vmem:[#allocation2 + $0x20] sm:$0xff]
      %v1933 = vld [vmem:[#allocation2 + $0x30] sm:$0xff]
      %v1934 = vld [vmem:[%s2] sm:$0x1]
      %v1936 = vlaneseq
      %v1937 = vshrl.u32 %v1936, 7
      %v1938 = vsub.s32 0, %v1937
      %v1939 = vrot.slane %v1934, %v1938
      %v1941 = vmul.f32 %v1930, %v1939
      %v1942 = vmul.f32 %v1931, %v1939
      %v1943 = vmul.f32 %v1932, %v1939
      %v1944 = vmul.f32 %v1933, %v1939
      %v1945 = vld [vmem:[%s3] sm:$0x1]
      %v1947 = vlaneseq
      %v1948 = vshrl.u32 %v1947, 7
      %v1949 = vsub.s32 0, %v1948
      %v1950 = vrot.slane %v1945, %v1949
      %v1952 = vadd.f32 %v1941, %v1950
      %v1953 = vadd.f32 %v1942, %v1950
      %v1954 = vadd.f32 %v1943, %v1950
      %v1955 = vadd.f32 %v1944, %v1950
      %v1956 = vmax.f32 %v1952, 0.0
      %v1957 = vmax.f32 %v1953, 0.0
      %v1958 = vmax.f32 %v1954, 0.0
      %v1959 = vmax.f32 %v1955, 0.0
      %v1960 = vpack.c.bf16 %v1956, %v1956
      %v1961 = vpack.c.bf16 %v1957, %v1957
      %v1962 = vpack.c.bf16 %v1958, %v1958
      %v1963 = vpack.c.bf16 %v1959, %v1959
      %1964 = vst [vmem:[%s215] sm:$0x3] %v1960
      %1965 = vst [vmem:[%s215 + $0x2] sm:$0x3] %v1961
      %1966 = vst [vmem:[%s215 + $0x4] sm:$0x3] %v1962
      %1967 = vst [vmem:[%s215 + $0x6] sm:$0x3] %v1963
      %s1968 = sadd.s32 %s19, %s20
      %s1969 = smul.u32 4, %s1968
      %p1970 = scmp.lt.s32.totalorder %s1969, 7
      %s1971 = scalar_select %p1970, %s1969, 7
      %s1972 = smul.addr %s1971, 2
      %s1973 = scalar_lea.vmem %s4, %s1972
      // Predicated region
      $region37: #{bottleneck_forward.4} parent=35 // pred_check
        %p1974 = pneg %p136
      $region38: #{bottleneck_forward.4} parent=35 // pred_check_branch
        %1976 = sbr.rel (%p1974) target = $region40
      $region39: #{bottleneck_forward.4} parent=35 // pred_region
        %s1977 = sadd.s32 %s19, %s20
        %s1978 = smul.u32 4, %s1977
      $region40: #{bottleneck_forward.4} parent=35 // pred_fallthru
        _
    $region36: #{bottleneck_forward.4} parent=5 // pred_fallthru
      _
    %p1979 = scmp.le.s32.totalorder 2, %s10
    // Predicated region
    $region41: #{bottleneck_forward.4} parent=5 // pred_check
      %p1980 = pneg %p1979
    $region42: #{bottleneck_forward.4} parent=5 // pred_check_branch
      %1982 = sbr.rel (%p1980) target = $region44
    $region43: #{bottleneck_forward.4} parent=5 // pred_region
      %s1983 = ssub.s32 %s10, 2
      // Predicated region
      $region45: #{bottleneck_forward.4} parent=43 // pred_check
        %p1984 = pneg %p142
      $region46: #{bottleneck_forward.4} parent=43 // pred_check_branch
        %1986 = sbr.rel (%p1984) target = $region48
      $region47: #{bottleneck_forward.4} parent=43 // pred_region
        %s1987 = sadd.s32 %s21, %s22
        %s1988 = smul.u32 4, %s1987
        %p1989 = scmp.lt.s32.totalorder %s1988, 7
        %s1990 = scalar_select %p1989, %s1988, 7
        %s1991 = smul.addr %s1990, 2
        %s1992 = scalar_lea.vmem %s4, %s1991
      $region48: #{bottleneck_forward.4} parent=43 // pred_fallthru
        _
    $region44: #{bottleneck_forward.4} parent=5 // pred_fallthru
      _
  $region6: #{bottleneck_forward.4} parent=0 // loop_footer
    %s14 = sadd.s32 1, %s10
  $region7: #{bottleneck_forward.4} parent=0 // loop_footer_branch
    %9 = sbr.rel target = $region3
  $region8: #{bottleneck_forward.4} parent=0 // loop_exit
    _

</llo_original>
